<compile_context>
chip_gen: v5e
topology: v5e:2x2
jax: 0.10.0
libtpu: 0.0.40
codegen_flags: <defaults>
</compile_context>

<pallas_src>
import functools

import jax
import jax.numpy as jnp
from jax.experimental import pallas as pl
from jax.experimental.pallas import tpu as pltpu


def _round_up(x, m):
    return ((x + m - 1) // m) * m


def _fused_conv_kernel(x_ref, w_ref, b_ref, o_ref, *, K, th, w_out_pad, relu):
    # x_ref: (1, H_in_pad, W_in_pad, C_in)  bf16  whole (padded) image, resident
    # w_ref: (K, K, C_in, tn)               bf16  weight tile for this C_out slab
    # b_ref: (1, tn)                        f32
    # o_ref: (1, th, W_out_pad, tn)         f32
    ht = pl.program_id(2)
    row0 = pl.multiple_of(ht * th, th)
    c_in = x_ref.shape[-1]
    tn = o_ref.shape[-1]
    m = th * w_out_pad

    acc = jnp.zeros((m, tn), dtype=jnp.float32)
    # Static unrolled taps: K*K bf16 MXU matmuls accumulated in f32.
    for kh in range(K):
        for kw in range(K):
            lhs = x_ref[0, pl.ds(row0 + kh, th), pl.ds(kw, w_out_pad), :]
            lhs = lhs.reshape(m, c_in)
            acc = acc + jnp.dot(lhs, w_ref[kh, kw],
                                preferred_element_type=jnp.float32)

    acc = acc + b_ref[...]          # bias once, in f32
    if relu:
        acc = jnp.maximum(acc, 0.0)
    o_ref[...] = acc.reshape(o_ref.shape).astype(o_ref.dtype)


def conv2d_forward(x, weight, bias, *, stride=1, same_padding=False, relu=True,
                   tn=128, target_rows=256):
    """Equivalent to Conv2d(in, out, k, stride, relu, same_padding, bn=False).forward.

    x: (N, C_in, H, W) f32 (NCHW).  Returns (N, C_out, H_out, W_out) f32.
    """
    N, C_in, H, W = x.shape
    C_out, _, K, _ = weight.shape
    pad = (K - 1) // 2 if same_padding else 0

    # stride-1 output extent; stride > 1 is handled by subsampling afterwards.
    H_out = H + 2 * pad - K + 1
    W_out = W + 2 * pad - K + 1

    # ---- layout prep: single HBM pass, no K^2 im2col blowup ----
    x_nhwc = jnp.transpose(x, (0, 2, 3, 1)).astype(jnp.bfloat16)

    C_out_pad = _round_up(C_out, tn)      # lane-dense output channels
    W_out_pad = _round_up(W_out, 16)      # keeps in-kernel (th,W)->(th*W) reshape layout-free
    th = max(1, min(H_out, target_rows // W_out_pad))
    H_out_pad = _round_up(H_out, th)
    HT = H_out_pad // th
    CT = C_out_pad // tn

    H_in_pad = H_out_pad + K - 1
    W_in_pad = W_out_pad + K - 1
    x_pad = jnp.pad(
        x_nhwc,
        ((0, 0),
         (pad, H_in_pad - H - pad),
         (pad, W_in_pad - W - pad),
         (0, 0)))

    # (C_out, C_in, K, K) -> (K, K, C_in, C_out_pad), bf16 MXU operands.
    w_t = jnp.transpose(weight, (2, 3, 1, 0)).astype(jnp.bfloat16)
    w_t = jnp.pad(w_t, ((0, 0), (0, 0), (0, 0), (0, C_out_pad - C_out)))
    b_t = jnp.pad(bias.astype(jnp.float32),
                  (0, C_out_pad - C_out)).reshape(1, C_out_pad)

    kernel = functools.partial(_fused_conv_kernel, K=K, th=th,
                               w_out_pad=W_out_pad, relu=relu)

    out = pl.pallas_call(
        kernel,
        out_shape=jax.ShapeDtypeStruct(
            (N, H_out_pad, W_out_pad, C_out_pad), jnp.float32),
        grid_spec=pltpu.PrefetchScalarGridSpec(
            num_scalar_prefetch=0,
            grid=(N, CT, HT),
            in_specs=[
                # Whole (padded) image per batch element; its block index is
                # constant along ct/ht so Pallas keeps it resident in VMEM.
                # TODO(synk): for very large feature maps, switch this to a
                # banded window (manual DMA) to bound per-step VMEM.
                pl.BlockSpec((1, H_in_pad, W_in_pad, C_in),
                             lambda n, ct, ht: (n, 0, 0, 0)),
                pl.BlockSpec((K, K, C_in, tn),
                             lambda n, ct, ht: (0, 0, 0, ct)),
                pl.BlockSpec((1, tn), lambda n, ct, ht: (0, ct)),
            ],
            out_specs=pl.BlockSpec((1, th, W_out_pad, tn),
                                   lambda n, ct, ht: (n, ht, 0, ct)),
        ),
        compiler_params=pltpu.CompilerParams(
            dimension_semantics=("parallel", "parallel", "arbitrary")),
    )(x_pad, w_t, b_t)

    # TODO(synk): bn=True path (training-mode BatchNorm2d with batch statistics)
    # is not implemented; the module's default constructor uses bn=False.

    out = out[:, :H_out, :W_out, :C_out]
    if stride > 1:
        # TODO(synk): stride > 1 reuses the stride-1 kernel and subsamples
        # (correct but does stride^2 redundant work); Faster-RCNN uses stride=1.
        out = out[:, ::stride, ::stride, :]
    # Back to NCHW at the module boundary to match the PyTorch interface;
    # consumers that accept NHWC can skip this transpose.
    return jnp.transpose(out, (0, 3, 1, 2))


def init_conv2d_params(key, in_channels, out_channels, kernel_size):
    """Deterministic params matching PyTorch Conv2d + xavier_normal_ init."""
    k_w, k_b = jax.random.split(key)
    fan_in = in_channels * kernel_size * kernel_size
    fan_out = out_channels * kernel_size * kernel_size
    std = (2.0 / (fan_in + fan_out)) ** 0.5  # xavier_normal_, gain=1
    weight = std * jax.random.normal(
        k_w, (out_channels, in_channels, kernel_size, kernel_size),
        dtype=jnp.float32)
    bound = 1.0 / (fan_in ** 0.5)            # PyTorch default conv bias init
    bias = jax.random.uniform(
        k_b, (out_channels,), minval=-bound, maxval=bound, dtype=jnp.float32)
    return weight, bias


if __name__ == "__main__":
    key = jax.random.PRNGKey(0)
    k_x, k_p = jax.random.split(key)

    N, C_in, H, W = 2, 4, 16, 16
    C_out, K = 8, 3

    x = jax.random.normal(k_x, (N, C_in, H, W), dtype=jnp.float32)
    weight, bias = init_conv2d_params(k_p, C_in, C_out, K)

    y = conv2d_forward(x, weight, bias, stride=1, same_padding=True, relu=True)
    y = jax.block_until_ready(y)

    # Reference: same bf16 operand quantization as the kernel, f32 accumulate.
    pad = (K - 1) // 2
    xq = x.astype(jnp.bfloat16).astype(jnp.float32)
    wq = weight.astype(jnp.bfloat16).astype(jnp.float32)
    ref = jax.lax.conv_general_dilated(
        xq, wq, window_strides=(1, 1), padding=[(pad, pad), (pad, pad)],
        dimension_numbers=("NCHW", "OIHW", "NCHW"),
        precision=jax.lax.Precision.HIGHEST)
    ref = jnp.maximum(ref + bias[None, :, None, None], 0.0)

    assert y.shape == (N, C_out, H, W)
    assert jnp.allclose(y, ref, atol=1e-3, rtol=1e-3)

    print("KERNEL_OK")
</pallas_src>

<mosaic_0001>
module attributes {stable_mosaic.version = 11 : i64} {
  func.func @_fused_conv_kernel(%arg0: i32, %arg1: i32, %arg2: i32, %arg3: memref<1x18x18x4xbf16, #tpu.memory_space<vmem>>, %arg4: memref<3x3x4x128xbf16, #tpu.memory_space<vmem>>, %arg5: memref<1x128xf32, #tpu.memory_space<vmem>>, %arg6: memref<1x16x16x128xf32, #tpu.memory_space<vmem>>) attributes {dimension_semantics = [#tpu.dimension_semantics<parallel>, #tpu.dimension_semantics<parallel>, #tpu.dimension_semantics<arbitrary>], iteration_bounds = array<i64: 2, 1, 1>, scalar_prefetch = 0 : i64, scratch_operands = 0 : i64, tpu.core_type = #tpu.core_type<tc>, window_params = [{transform_indices = @transform_0, window_bounds = array<i64: 1, 18, 18, 4>}, {transform_indices = @transform_1, window_bounds = array<i64: 3, 3, 4, 128>}, {transform_indices = @transform_2, window_bounds = array<i64: 1, 128>}, {transform_indices = @transform_3, window_bounds = array<i64: 1, 16, 16, 128>}]} {
    %c16_i32 = arith.constant 16 : i32
    %0 = arith.muli %arg2, %c16_i32 : i32
    %1 = tpu.assume_multiple %0, 16 : i32
    %cst = arith.constant 0.000000e+00 : f32
    %2 = vector.broadcast %cst : f32 to vector<256x128xf32>
    %c0_i32 = arith.constant 0 : i32
    %3 = arith.addi %1, %c0_i32 : i32
    %c0 = arith.constant 0 : index
    %4 = arith.index_cast %3 : i32 to index
    %c0_0 = arith.constant 0 : index
    %c0_1 = arith.constant 0 : index
    %5 = vector.load %arg3[%c0, %4, %c0_0, %c0_1] : memref<1x18x18x4xbf16, #tpu.memory_space<vmem>>, vector<1x16x16x4xbf16>
    %6 = vector.shape_cast %5 : vector<1x16x16x4xbf16> to vector<16x16x4xbf16>
    %7 = vector.shape_cast %6 : vector<16x16x4xbf16> to vector<256x4xbf16>
    %c0_2 = arith.constant 0 : index
    %c0_3 = arith.constant 0 : index
    %c0_4 = arith.constant 0 : index
    %c0_5 = arith.constant 0 : index
    %8 = vector.load %arg4[%c0_2, %c0_3, %c0_4, %c0_5] : memref<3x3x4x128xbf16, #tpu.memory_space<vmem>>, vector<1x1x4x128xbf16>
    %9 = vector.shape_cast %8 : vector<1x1x4x128xbf16> to vector<4x128xbf16>
    %cst_6 = arith.constant dense<0.000000e+00> : vector<256x128xf32>
    %10 = tpu.matmul %7, %9, %cst_6 {dimension_numbers = #tpu.dot_dimension_numbers<[1], [0], [0], [1], [0, 0, 1, 1], [], []>} : vector<256x4xbf16>, vector<4x128xbf16>, vector<256x128xf32> -> vector<256x128xf32>
    %11 = arith.addf %2, %10 : vector<256x128xf32>
    %c0_i32_7 = arith.constant 0 : i32
    %12 = arith.addi %1, %c0_i32_7 : i32
    %c0_8 = arith.constant 0 : index
    %13 = arith.index_cast %12 : i32 to index
    %c1 = arith.constant 1 : index
    %c0_9 = arith.constant 0 : index
    %14 = vector.load %arg3[%c0_8, %13, %c1, %c0_9] : memref<1x18x18x4xbf16, #tpu.memory_space<vmem>>, vector<1x16x16x4xbf16>
    %15 = vector.shape_cast %14 : vector<1x16x16x4xbf16> to vector<16x16x4xbf16>
    %16 = vector.shape_cast %15 : vector<16x16x4xbf16> to vector<256x4xbf16>
    %c0_10 = arith.constant 0 : index
    %c1_11 = arith.constant 1 : index
    %c0_12 = arith.constant 0 : index
    %c0_13 = arith.constant 0 : index
    %17 = vector.load %arg4[%c0_10, %c1_11, %c0_12, %c0_13] : memref<3x3x4x128xbf16, #tpu.memory_space<vmem>>, vector<1x1x4x128xbf16>
    %18 = vector.shape_cast %17 : vector<1x1x4x128xbf16> to vector<4x128xbf16>
    %cst_14 = arith.constant dense<0.000000e+00> : vector<256x128xf32>
    %19 = tpu.matmul %16, %18, %cst_14 {dimension_numbers = #tpu.dot_dimension_numbers<[1], [0], [0], [1], [0, 0, 1, 1], [], []>} : vector<256x4xbf16>, vector<4x128xbf16>, vector<256x128xf32> -> vector<256x128xf32>
    %20 = arith.addf %11, %19 : vector<256x128xf32>
    %c0_i32_15 = arith.constant 0 : i32
    %21 = arith.addi %1, %c0_i32_15 : i32
    %c0_16 = arith.constant 0 : index
    %22 = arith.index_cast %21 : i32 to index
    %c2 = arith.constant 2 : index
    %c0_17 = arith.constant 0 : index
    %23 = vector.load %arg3[%c0_16, %22, %c2, %c0_17] : memref<1x18x18x4xbf16, #tpu.memory_space<vmem>>, vector<1x16x16x4xbf16>
    %24 = vector.shape_cast %23 : vector<1x16x16x4xbf16> to vector<16x16x4xbf16>
    %25 = vector.shape_cast %24 : vector<16x16x4xbf16> to vector<256x4xbf16>
    %c0_18 = arith.constant 0 : index
    %c2_19 = arith.constant 2 : index
    %c0_20 = arith.constant 0 : index
    %c0_21 = arith.constant 0 : index
    %26 = vector.load %arg4[%c0_18, %c2_19, %c0_20, %c0_21] : memref<3x3x4x128xbf16, #tpu.memory_space<vmem>>, vector<1x1x4x128xbf16>
    %27 = vector.shape_cast %26 : vector<1x1x4x128xbf16> to vector<4x128xbf16>
    %cst_22 = arith.constant dense<0.000000e+00> : vector<256x128xf32>
    %28 = tpu.matmul %25, %27, %cst_22 {dimension_numbers = #tpu.dot_dimension_numbers<[1], [0], [0], [1], [0, 0, 1, 1], [], []>} : vector<256x4xbf16>, vector<4x128xbf16>, vector<256x128xf32> -> vector<256x128xf32>
    %29 = arith.addf %20, %28 : vector<256x128xf32>
    %c1_i32 = arith.constant 1 : i32
    %30 = arith.addi %1, %c1_i32 : i32
    %c0_23 = arith.constant 0 : index
    %31 = arith.index_cast %30 : i32 to index
    %c0_24 = arith.constant 0 : index
    %c0_25 = arith.constant 0 : index
    %32 = vector.load %arg3[%c0_23, %31, %c0_24, %c0_25] : memref<1x18x18x4xbf16, #tpu.memory_space<vmem>>, vector<1x16x16x4xbf16>
    %33 = vector.shape_cast %32 : vector<1x16x16x4xbf16> to vector<16x16x4xbf16>
    %34 = vector.shape_cast %33 : vector<16x16x4xbf16> to vector<256x4xbf16>
    %c1_26 = arith.constant 1 : index
    %c0_27 = arith.constant 0 : index
    %c0_28 = arith.constant 0 : index
    %c0_29 = arith.constant 0 : index
    %35 = vector.load %arg4[%c1_26, %c0_27, %c0_28, %c0_29] : memref<3x3x4x128xbf16, #tpu.memory_space<vmem>>, vector<1x1x4x128xbf16>
    %36 = vector.shape_cast %35 : vector<1x1x4x128xbf16> to vector<4x128xbf16>
    %cst_30 = arith.constant dense<0.000000e+00> : vector<256x128xf32>
    %37 = tpu.matmul %34, %36, %cst_30 {dimension_numbers = #tpu.dot_dimension_numbers<[1], [0], [0], [1], [0, 0, 1, 1], [], []>} : vector<256x4xbf16>, vector<4x128xbf16>, vector<256x128xf32> -> vector<256x128xf32>
    %38 = arith.addf %29, %37 : vector<256x128xf32>
    %c1_i32_31 = arith.constant 1 : i32
    %39 = arith.addi %1, %c1_i32_31 : i32
    %c0_32 = arith.constant 0 : index
    %40 = arith.index_cast %39 : i32 to index
    %c1_33 = arith.constant 1 : index
    %c0_34 = arith.constant 0 : index
    %41 = vector.load %arg3[%c0_32, %40, %c1_33, %c0_34] : memref<1x18x18x4xbf16, #tpu.memory_space<vmem>>, vector<1x16x16x4xbf16>
    %42 = vector.shape_cast %41 : vector<1x16x16x4xbf16> to vector<16x16x4xbf16>
    %43 = vector.shape_cast %42 : vector<16x16x4xbf16> to vector<256x4xbf16>
    %c1_35 = arith.constant 1 : index
    %c1_36 = arith.constant 1 : index
    %c0_37 = arith.constant 0 : index
    %c0_38 = arith.constant 0 : index
    %44 = vector.load %arg4[%c1_35, %c1_36, %c0_37, %c0_38] : memref<3x3x4x128xbf16, #tpu.memory_space<vmem>>, vector<1x1x4x128xbf16>
    %45 = vector.shape_cast %44 : vector<1x1x4x128xbf16> to vector<4x128xbf16>
    %cst_39 = arith.constant dense<0.000000e+00> : vector<256x128xf32>
    %46 = tpu.matmul %43, %45, %cst_39 {dimension_numbers = #tpu.dot_dimension_numbers<[1], [0], [0], [1], [0, 0, 1, 1], [], []>} : vector<256x4xbf16>, vector<4x128xbf16>, vector<256x128xf32> -> vector<256x128xf32>
    %47 = arith.addf %38, %46 : vector<256x128xf32>
    %c1_i32_40 = arith.constant 1 : i32
    %48 = arith.addi %1, %c1_i32_40 : i32
    %c0_41 = arith.constant 0 : index
    %49 = arith.index_cast %48 : i32 to index
    %c2_42 = arith.constant 2 : index
    %c0_43 = arith.constant 0 : index
    %50 = vector.load %arg3[%c0_41, %49, %c2_42, %c0_43] : memref<1x18x18x4xbf16, #tpu.memory_space<vmem>>, vector<1x16x16x4xbf16>
    %51 = vector.shape_cast %50 : vector<1x16x16x4xbf16> to vector<16x16x4xbf16>
    %52 = vector.shape_cast %51 : vector<16x16x4xbf16> to vector<256x4xbf16>
    %c1_44 = arith.constant 1 : index
    %c2_45 = arith.constant 2 : index
    %c0_46 = arith.constant 0 : index
    %c0_47 = arith.constant 0 : index
    %53 = vector.load %arg4[%c1_44, %c2_45, %c0_46, %c0_47] : memref<3x3x4x128xbf16, #tpu.memory_space<vmem>>, vector<1x1x4x128xbf16>
    %54 = vector.shape_cast %53 : vector<1x1x4x128xbf16> to vector<4x128xbf16>
    %cst_48 = arith.constant dense<0.000000e+00> : vector<256x128xf32>
    %55 = tpu.matmul %52, %54, %cst_48 {dimension_numbers = #tpu.dot_dimension_numbers<[1], [0], [0], [1], [0, 0, 1, 1], [], []>} : vector<256x4xbf16>, vector<4x128xbf16>, vector<256x128xf32> -> vector<256x128xf32>
    %56 = arith.addf %47, %55 : vector<256x128xf32>
    %c2_i32 = arith.constant 2 : i32
    %57 = arith.addi %1, %c2_i32 : i32
    %c0_49 = arith.constant 0 : index
    %58 = arith.index_cast %57 : i32 to index
    %c0_50 = arith.constant 0 : index
    %c0_51 = arith.constant 0 : index
    %59 = vector.load %arg3[%c0_49, %58, %c0_50, %c0_51] : memref<1x18x18x4xbf16, #tpu.memory_space<vmem>>, vector<1x16x16x4xbf16>
    %60 = vector.shape_cast %59 : vector<1x16x16x4xbf16> to vector<16x16x4xbf16>
    %61 = vector.shape_cast %60 : vector<16x16x4xbf16> to vector<256x4xbf16>
    %c2_52 = arith.constant 2 : index
    %c0_53 = arith.constant 0 : index
    %c0_54 = arith.constant 0 : index
    %c0_55 = arith.constant 0 : index
    %62 = vector.load %arg4[%c2_52, %c0_53, %c0_54, %c0_55] : memref<3x3x4x128xbf16, #tpu.memory_space<vmem>>, vector<1x1x4x128xbf16>
    %63 = vector.shape_cast %62 : vector<1x1x4x128xbf16> to vector<4x128xbf16>
    %cst_56 = arith.constant dense<0.000000e+00> : vector<256x128xf32>
    %64 = tpu.matmul %61, %63, %cst_56 {dimension_numbers = #tpu.dot_dimension_numbers<[1], [0], [0], [1], [0, 0, 1, 1], [], []>} : vector<256x4xbf16>, vector<4x128xbf16>, vector<256x128xf32> -> vector<256x128xf32>
    %65 = arith.addf %56, %64 : vector<256x128xf32>
    %c2_i32_57 = arith.constant 2 : i32
    %66 = arith.addi %1, %c2_i32_57 : i32
    %c0_58 = arith.constant 0 : index
    %67 = arith.index_cast %66 : i32 to index
    %c1_59 = arith.constant 1 : index
    %c0_60 = arith.constant 0 : index
    %68 = vector.load %arg3[%c0_58, %67, %c1_59, %c0_60] : memref<1x18x18x4xbf16, #tpu.memory_space<vmem>>, vector<1x16x16x4xbf16>
    %69 = vector.shape_cast %68 : vector<1x16x16x4xbf16> to vector<16x16x4xbf16>
    %70 = vector.shape_cast %69 : vector<16x16x4xbf16> to vector<256x4xbf16>
    %c2_61 = arith.constant 2 : index
    %c1_62 = arith.constant 1 : index
    %c0_63 = arith.constant 0 : index
    %c0_64 = arith.constant 0 : index
    %71 = vector.load %arg4[%c2_61, %c1_62, %c0_63, %c0_64] : memref<3x3x4x128xbf16, #tpu.memory_space<vmem>>, vector<1x1x4x128xbf16>
    %72 = vector.shape_cast %71 : vector<1x1x4x128xbf16> to vector<4x128xbf16>
    %cst_65 = arith.constant dense<0.000000e+00> : vector<256x128xf32>
    %73 = tpu.matmul %70, %72, %cst_65 {dimension_numbers = #tpu.dot_dimension_numbers<[1], [0], [0], [1], [0, 0, 1, 1], [], []>} : vector<256x4xbf16>, vector<4x128xbf16>, vector<256x128xf32> -> vector<256x128xf32>
    %74 = arith.addf %65, %73 : vector<256x128xf32>
    %c2_i32_66 = arith.constant 2 : i32
    %75 = arith.addi %1, %c2_i32_66 : i32
    %c0_67 = arith.constant 0 : index
    %76 = arith.index_cast %75 : i32 to index
    %c2_68 = arith.constant 2 : index
    %c0_69 = arith.constant 0 : index
    %77 = vector.load %arg3[%c0_67, %76, %c2_68, %c0_69] : memref<1x18x18x4xbf16, #tpu.memory_space<vmem>>, vector<1x16x16x4xbf16>
    %78 = vector.shape_cast %77 : vector<1x16x16x4xbf16> to vector<16x16x4xbf16>
    %79 = vector.shape_cast %78 : vector<16x16x4xbf16> to vector<256x4xbf16>
    %c2_70 = arith.constant 2 : index
    %c2_71 = arith.constant 2 : index
    %c0_72 = arith.constant 0 : index
    %c0_73 = arith.constant 0 : index
    %80 = vector.load %arg4[%c2_70, %c2_71, %c0_72, %c0_73] : memref<3x3x4x128xbf16, #tpu.memory_space<vmem>>, vector<1x1x4x128xbf16>
    %81 = vector.shape_cast %80 : vector<1x1x4x128xbf16> to vector<4x128xbf16>
    %cst_74 = arith.constant dense<0.000000e+00> : vector<256x128xf32>
    %82 = tpu.matmul %79, %81, %cst_74 {dimension_numbers = #tpu.dot_dimension_numbers<[1], [0], [0], [1], [0, 0, 1, 1], [], []>} : vector<256x4xbf16>, vector<4x128xbf16>, vector<256x128xf32> -> vector<256x128xf32>
    %83 = arith.addf %74, %82 : vector<256x128xf32>
    %c0_75 = arith.constant 0 : index
    %c0_76 = arith.constant 0 : index
    %84 = vector.load %arg5[%c0_75, %c0_76] : memref<1x128xf32, #tpu.memory_space<vmem>>, vector<1x128xf32>
    %85 = vector.broadcast %84 : vector<1x128xf32> to vector<256x128xf32>
    %86 = arith.addf %83, %85 : vector<256x128xf32>
    %cst_77 = arith.constant 0.000000e+00 : f32
    %87 = vector.broadcast %cst_77 : f32 to vector<256x128xf32>
    %88 = arith.maximumf %86, %87 : vector<256x128xf32>
    %89 = vector.shape_cast %88 : vector<256x128xf32> to vector<1x16x16x128xf32>
    %c0_78 = arith.constant 0 : index
    %c0_79 = arith.constant 0 : index
    %c0_80 = arith.constant 0 : index
    %c0_81 = arith.constant 0 : index
    %90 = vector.load %arg6[%c0_78, %c0_79, %c0_80, %c0_81] : memref<1x16x16x128xf32, #tpu.memory_space<vmem>>, vector<1x16x16x128xf32>
    tpu.vector_store %arg6[%c0_78, %c0_79, %c0_80, %c0_81], %89 {strides = array<i32>} : memref<1x16x16x128xf32, #tpu.memory_space<vmem>>, vector<1x16x16x128xf32>,
    return
  }
  func.func @transform_0(%arg0: i32, %arg1: i32, %arg2: i32) -> (i32, i32, i32, i32) {
    %c0_i32 = arith.constant 0 : i32
    %c0_i32_0 = arith.constant 0 : i32
    %c0_i32_1 = arith.constant 0 : i32
    %c0_i32_2 = arith.constant 0 : i32
    return %arg0, %c0_i32, %c0_i32_0, %c0_i32_1 : i32, i32, i32, i32
  }
  func.func @transform_1(%arg0: i32, %arg1: i32, %arg2: i32) -> (i32, i32, i32, i32) {
    %c0_i32 = arith.constant 0 : i32
    %c0_i32_0 = arith.constant 0 : i32
    %c0_i32_1 = arith.constant 0 : i32
    %c0_i32_2 = arith.constant 0 : i32
    return %c0_i32, %c0_i32_0, %c0_i32_1, %arg1 : i32, i32, i32, i32
  }
  func.func @transform_2(%arg0: i32, %arg1: i32, %arg2: i32) -> (i32, i32) {
    %c0_i32 = arith.constant 0 : i32
    %c0_i32_0 = arith.constant 0 : i32
    return %c0_i32, %arg1 : i32, i32
  }
  func.func @transform_3(%arg0: i32, %arg1: i32, %arg2: i32) -> (i32, i32, i32, i32) {
    %c0_i32 = arith.constant 0 : i32
    %c0_i32_0 = arith.constant 0 : i32
    return %arg0, %arg2, %c0_i32, %arg1 : i32, i32, i32, i32
  }
}

</mosaic_0001>

<llo_original>
// kernel: tpu_custom_call.1
$region0: #{tpu_custom_call.1}
  #allocation0 [shape = 'u32[]', space=smem, size = 0x4, offset = 0x4, fixed_abs, tag = 'smem constant byte address 0x4 - core index']
  #allocation1 [shape = 'u32[72,128]{1,0:T(1,128)}', space=vmem, size = 0x9000, scoped, tag = 'internal scratch']
  %s0 = inlined_call_operand.vmem [shape: bf16[2,18,18,4], index: 0, kind: input, shape index: {}]
  %s1 = inlined_call_operand.vmem [shape: bf16[3,3,4,128], index: 1, kind: input, shape index: {}]
  %s2 = inlined_call_operand.vmem [shape: f32[1,128], index: 2, kind: input, shape index: {}]
  %s3 = inlined_call_operand.hbm [shape: f32[2,16,16,128], index: 3, kind: output, shape index: {}]
  %s4 = sld [smem:[#allocation0]]
  $region45: #{tpu_custom_call.1} parent=0
    _
  %s6 = ssub.s32 1, %s4
  %s7 = scalar_select 0, %s6, %s4
  $region1: #{tpu_custom_call.1} parent=0
    #allocation2 [shape = 'u8[262144]{0}', space=vmem, size = 0x40000, scoped, tag = 'output window, operand 0']
    #allocation3 [shape = 's32[2]{0}', space=sflag, size = 0x8, scoped, tag = 'scoped memory for tpu_custom_call.1']
    %8 = vsyncpa [#allocation3], 0
    %s9 = scalar_lea.sflag [#allocation3], 1
    %10 = vsyncpa %s9, 0
    loop: start=0, step=1, limit=4
    $region2: #{tpu_custom_call.1} parent=1 // loop_pre_header
      _
    $region3: #{tpu_custom_call.1} parent=1 // loop_header
      %s12 = sphi 0, %s16
      %p13 = scmp.ge.s32.totalorder %s12, 4
      %s19 = sphi 0, %s38
      %s20 = sphi 0, %s34
      %s21 = sphi 0, %s30
      %s22 = sphi 0, %s19
      %s23 = sphi 0, %s20
      %s24 = sphi 0, %s21
      %s25 = sphi 0, %s22
      %s26 = sphi 0, %s23
      %s27 = sphi 0, %s24
      %s41 = sphi 0, %s43
      %s44 = sphi 0, %s41
      %s45 = sphi 0, %s44
      %s61 = sphi 0, %s45
      %s67 = sphi 0, %s69
      %s70 = sphi 0, %s67
      %s71 = sphi 0, %s70
      %s87 = sphi 0, %s71
      %s93 = sphi 0, %s95
      %s96 = sphi 0, %s93
      %s97 = sphi 0, %s96
      %s113 = sphi 0, %s97
      %s123 = sphi 0, %s125
      %s126 = sphi 0, %s123
      %s127 = sphi 0, %s126
      %s143 = sphi 0, %s127
    $region4: #{tpu_custom_call.1} parent=1 // loop_header_branch
      %15 = sbr.rel (%p13) target = $region8
    $region5: #{tpu_custom_call.1} parent=1 // loop_body
      %s17 = ssub.s32 %s12, 1
      %s18 = ssub.s32 %s12, 2
      %s28 = sadd.s32 1, %s21
      %p29 = scmp.ge.s32.totalorder %s28, 1
      %s30 = scalar_select %p29, 0, %s28
      %s31 = sadd.s32 1, %s20
      %s32 = scalar_select %p29, %s31, %s20
      %p33 = scmp.ge.s32.totalorder %s32, 1
      %s34 = scalar_select %p33, 0, %s32
      %s35 = sadd.s32 1, %s19
      %s36 = scalar_select %p33, %s35, %s19
      %p37 = scmp.ge.s32.totalorder %s36, 2
      %s38 = scalar_select %p37, 0, %s36
      %s39 = ssub.s32 %s19, %s38
      %p40 = scmp.eq.s32.totalorder %s39, 0
      %s42 = sadd.s32 %s41, 1
      %s43 = scalar_select %p40, %s41, %s42
      %p46 = pneg %p40
      %p47 = scmp.eq.s32.totalorder %s12, 1
      %p48 = por %p46, %p47
      %p49 = scmp.ne.s32.totalorder %s41, %s44
      %p50 = scmp.eq.s32.totalorder %s12, 0
      %p51 = por %p49, %p50
      %p52 = scmp.ne.s32.totalorder %s41, %s44
      %p53 = scmp.eq.s32.totalorder %s17, 1
      %p54 = por %p52, %p53
      %p55 = scmp.ne.s32.totalorder %s44, %s45
      %p56 = scmp.eq.s32.totalorder %s17, 0
      %p57 = por %p55, %p56
      %p58 = scmp.ne.s32.totalorder %s44, %s45
      %p59 = scmp.eq.s32.totalorder %s18, 1
      %p60 = por %p58, %p59
      %p62 = scmp.ne.s32.totalorder %s45, %s61
      %p63 = scmp.eq.s32.totalorder %s18, 0
      %p64 = por %p62, %p63
      %s65 = ssub.s32 %s20, %s34
      %p66 = scmp.eq.s32.totalorder %s65, 0
      %s68 = sadd.s32 %s67, 1
      %s69 = scalar_select %p66, %s67, %s68
      %p72 = pneg %p66
      %p73 = scmp.eq.s32.totalorder %s12, 1
      %p74 = por %p72, %p73
      %p75 = scmp.ne.s32.totalorder %s67, %s70
      %p76 = scmp.eq.s32.totalorder %s12, 0
      %p77 = por %p75, %p76
      %p78 = scmp.ne.s32.totalorder %s67, %s70
      %p79 = scmp.eq.s32.totalorder %s17, 1
      %p80 = por %p78, %p79
      %p81 = scmp.ne.s32.totalorder %s70, %s71
      %p82 = scmp.eq.s32.totalorder %s17, 0
      %p83 = por %p81, %p82
      %p84 = scmp.ne.s32.totalorder %s70, %s71
      %p85 = scmp.eq.s32.totalorder %s18, 1
      %p86 = por %p84, %p85
      %p88 = scmp.ne.s32.totalorder %s71, %s87
      %p89 = scmp.eq.s32.totalorder %s18, 0
      %p90 = por %p88, %p89
      %s91 = ssub.s32 %s20, %s34
      %p92 = scmp.eq.s32.totalorder %s91, 0
      %s94 = sadd.s32 %s93, 1
      %s95 = scalar_select %p92, %s93, %s94
      %p98 = pneg %p92
      %p99 = scmp.eq.s32.totalorder %s12, 1
      %p100 = por %p98, %p99
      %p101 = scmp.ne.s32.totalorder %s93, %s96
      %p102 = scmp.eq.s32.totalorder %s12, 0
      %p103 = por %p101, %p102
      %p104 = scmp.ne.s32.totalorder %s93, %s96
      %p105 = scmp.eq.s32.totalorder %s17, 1
      %p106 = por %p104, %p105
      %p107 = scmp.ne.s32.totalorder %s96, %s97
      %p108 = scmp.eq.s32.totalorder %s17, 0
      %p109 = por %p107, %p108
      %p110 = scmp.ne.s32.totalorder %s96, %s97
      %p111 = scmp.eq.s32.totalorder %s18, 1
      %p112 = por %p110, %p111
      %p114 = scmp.ne.s32.totalorder %s97, %s113
      %p115 = scmp.eq.s32.totalorder %s18, 0
      %p116 = por %p114, %p115
      %s117 = ssub.s32 %s19, %s38
      %s118 = ssub.s32 %s21, %s30
      %s119 = sor.u32 %s117, %s118
      %s120 = ssub.s32 %s20, %s34
      %s121 = sor.u32 %s119, %s120
      %p122 = scmp.eq.s32.totalorder %s121, 0
      %s124 = sadd.s32 %s123, 1
      %s125 = scalar_select %p122, %s123, %s124
      %p128 = pneg %p122
      %p129 = scmp.eq.s32.totalorder %s12, 1
      %p130 = por %p128, %p129
      %p131 = scmp.ne.s32.totalorder %s123, %s126
      %p132 = scmp.eq.s32.totalorder %s12, 0
      %p133 = por %p131, %p132
      %p134 = scmp.ne.s32.totalorder %s123, %s126
      %p135 = scmp.eq.s32.totalorder %s17, 1
      %p136 = por %p134, %p135
      %p137 = scmp.ne.s32.totalorder %s126, %s127
      %p138 = scmp.eq.s32.totalorder %s17, 0
      %p139 = por %p137, %p138
      %p140 = scmp.ne.s32.totalorder %s126, %s127
      %p141 = scmp.eq.s32.totalorder %s18, 1
      %p142 = por %p140, %p141
      %p144 = scmp.ne.s32.totalorder %s127, %s143
      %p145 = scmp.eq.s32.totalorder %s18, 0
      %p146 = por %p144, %p145
      %p147 = scmp.le.s32.totalorder 1, %s12
      %p148 = scmp.lt.s32.totalorder %s12, 3
      %p149 = pnand %p147, %p148
      %p150 = pneg %p149
      // Predicated region
      $region9: #{tpu_custom_call.1} parent=5 // pred_check
        _
      $region10: #{tpu_custom_call.1} parent=5 // pred_check_branch
        %152 = sbr.rel (%p149) target = $region12
      $region11: #{tpu_custom_call.1} parent=5 // pred_region
        %s153 = ssub.s32 %s12, 1
        // Predicated region
        $region13: #{tpu_custom_call.1} parent=11 // pred_check
          %p154 = pneg %p83
        $region14: #{tpu_custom_call.1} parent=11 // pred_check_branch
          %156 = sbr.rel (%p154) target = $region16
        $region15: #{tpu_custom_call.1} parent=11 // pred_region
          %p157 = scmp.lt.s32.totalorder %s23, 0
          %s158 = scalar_select %p157, %s23, 0
          %s159 = smul.addr %s158, 2
          %s160 = scalar_lea.vmem %s1, %s159
        $region16: #{tpu_custom_call.1} parent=11 // pred_fallthru
          _
        // Predicated region
        $region17: #{tpu_custom_call.1} parent=11 // pred_check
          %p161 = pneg %p109
        $region18: #{tpu_custom_call.1} parent=11 // pred_check_branch
          %163 = sbr.rel (%p161) target = $region20
        $region19: #{tpu_custom_call.1} parent=11 // pred_region
          %p164 = scmp.lt.s32.totalorder %s23, 0
          %s165 = scalar_select %p164, %s23, 0
          %s166 = scalar_lea.vmem %s2, %s165
        $region20: #{tpu_custom_call.1} parent=11 // pred_fallthru
          _
      $region12: #{tpu_custom_call.1} parent=5 // pred_fallthru
        _
      %p167 = scmp.lt.s32.totalorder %s12, 2
      // Predicated region
      $region21: #{tpu_custom_call.1} parent=5 // pred_check
        %p168 = pneg %p167
      $region22: #{tpu_custom_call.1} parent=5 // pred_check_branch
        %170 = sbr.rel (%p168) target = $region24
      $region23: #{tpu_custom_call.1} parent=5 // pred_region
        // Predicated region
        $region25: #{tpu_custom_call.1} parent=23 // pred_check
          %p171 = pneg %p51
        $region26: #{tpu_custom_call.1} parent=23 // pred_check_branch
          %173 = sbr.rel (%p171) target = $region28
        $region27: #{tpu_custom_call.1} parent=23 // pred_region
          %p174 = scmp.lt.s32.totalorder %s19, 1
          %s175 = scalar_select %p174, %s19, 1
          %s176 = smul.addr %s175, 54
          %s177 = smul.addr %s176, 4
          %s178 = scalar_lea.vmem %s0, %s177
        $region28: #{tpu_custom_call.1} parent=23 // pred_fallthru
          _
      $region24: #{tpu_custom_call.1} parent=5 // pred_fallthru
        _
      %p179 = scmp.le.s32.totalorder 1, %s12
      %p180 = scmp.lt.s32.totalorder %s12, 3
      %p181 = pnand %p179, %p180
      %p182 = pneg %p181
      // Predicated region
      $region29: #{tpu_custom_call.1} parent=5 // pred_check
        _
      $region30: #{tpu_custom_call.1} parent=5 // pred_check_branch
        %184 = sbr.rel (%p181) target = $region32
      $region31: #{tpu_custom_call.1} parent=5 // pred_region
        %s185 = ssub.s32 %s12, 1
        %p186 = scmp.lt.s32.totalorder %s22, 1
        %s187 = scalar_select %p186, %s22, 1
        %s188 = smul.addr %s187, 54
        %s189 = smul.addr %s188, 4
        %s190 = scalar_lea.vmem %s0, %s189
        %p191 = pneg %p57
        %p192 = pneg %p54
        %p193 = scmp.lt.s32.totalorder %s23, 0
        %s194 = scalar_select %p193, %s23, 0
        %s195 = smul.addr %s194, 2
        %s196 = scalar_lea.vmem %s1, %s195
        %p197 = pneg %p83
        %p198 = pneg %p80
        %p199 = scmp.lt.s32.totalorder %s23, 0
        %s200 = scalar_select %p199, %s23, 0
        %s201 = scalar_lea.vmem %s2, %s200
        %p202 = pneg %p109
        %p203 = pneg %p106
        %p204 = pneg %p139
        %p205 = pneg %p136
        %s206 = sand.u32 %s126, 1
        %s207 = scalar_lea.sflag [#allocation3], %s206
        %s208 = sand.u32 %s126, 1
        %s209 = smul.addr %s208, 256
        %s210 = scalar_lea.vmem [#allocation2], %s209
        %p211 = scmp.lt.s32.totalorder %s22, 1
        %s212 = scalar_select %p211, %s22, 1
        %s213 = smul.addr %s212, 54
        %s214 = smul.addr %s213, 4
        %s215 = scalar_lea.vmem %s0, %s214
        %p216 = scmp.lt.s32.totalorder %s23, 0
        %s217 = scalar_select %p216, %s23, 0
        %s218 = smul.addr %s217, 2
        %s219 = scalar_lea.vmem %s1, %s218
        %p220 = scmp.lt.s32.totalorder %s23, 0
        %s221 = scalar_select %p220, %s23, 0
        %s222 = scalar_lea.vmem %s2, %s221
        %s223 = smul.u32 16, %s24
        %s225 = smul.u32 %s24, 16
        %s226 = smul.u32 %s225, 3
        %s227 = smul.addr %s226, 4
        %s228 = scalar_lea.vmem %s215, %s227
        %v229 = vld [vmem:[%s228] sm:$0xf]
        %v230 = vld [vmem:[%s228 + $0x4] sm:$0xf]
        %v231 = vld [vmem:[%s228 + $0xc] sm:$0xf]
        %v232 = vld [vmem:[%s228 + $0x10] sm:$0xf]
        %v233 = vld [vmem:[%s228 + $0x18] sm:$0xf]
        %v234 = vld [vmem:[%s228 + $0x1c] sm:$0xf]
        %v235 = vld [vmem:[%s228 + $0x24] sm:$0xf]
        %v236 = vld [vmem:[%s228 + $0x28] sm:$0xf]
        %v237 = vld [vmem:[%s228 + $0x30] sm:$0xf]
        %v238 = vld [vmem:[%s228 + $0x34] sm:$0xf]
        %v239 = vld [vmem:[%s228 + $0x3c] sm:$0xf]
        %v240 = vld [vmem:[%s228 + $0x40] sm:$0xf]
        %v241 = vld [vmem:[%s228 + $0x48] sm:$0xf]
        %v242 = vld [vmem:[%s228 + $0x4c] sm:$0xf]
        %v243 = vld [vmem:[%s228 + $0x54] sm:$0xf]
        %v244 = vld [vmem:[%s228 + $0x58] sm:$0xf]
        %v245 = vld [vmem:[%s228 + $0x60] sm:$0xf]
        %v246 = vld [vmem:[%s228 + $0x64] sm:$0xf]
        %v247 = vld [vmem:[%s228 + $0x6c] sm:$0xf]
        %v248 = vld [vmem:[%s228 + $0x70] sm:$0xf]
        %v249 = vld [vmem:[%s228 + $0x78] sm:$0xf]
        %v250 = vld [vmem:[%s228 + $0x7c] sm:$0xf]
        %v251 = vld [vmem:[%s228 + $0x84] sm:$0xf]
        %v252 = vld [vmem:[%s228 + $0x88] sm:$0xf]
        %v253 = vld [vmem:[%s228 + $0x90] sm:$0xf]
        %v254 = vld [vmem:[%s228 + $0x94] sm:$0xf]
        %v255 = vld [vmem:[%s228 + $0x9c] sm:$0xf]
        %v256 = vld [vmem:[%s228 + $0xa0] sm:$0xf]
        %v257 = vld [vmem:[%s228 + $0xa8] sm:$0xf]
        %v258 = vld [vmem:[%s228 + $0xac] sm:$0xf]
        %v259 = vld [vmem:[%s228 + $0xb4] sm:$0xf]
        %v260 = vld [vmem:[%s228 + $0xb8] sm:$0xf]
        %v261 = vld [vmem:[%s219] sm:$0x3]
        %v262 = vld [vmem:[%s228 + $0x8] sm:$0x1]
        %v263 = vld [vmem:[%s228 + $0x14] sm:$0x1]
        %v264 = vld [vmem:[%s228 + $0x20] sm:$0x1]
        %v265 = vld [vmem:[%s228 + $0x2c] sm:$0x1]
        %v266 = vld [vmem:[%s228 + $0x38] sm:$0x1]
        %v267 = vld [vmem:[%s228 + $0x44] sm:$0x1]
        %v268 = vld [vmem:[%s228 + $0x50] sm:$0x1]
        %v269 = vld [vmem:[%s228 + $0x5c] sm:$0x1]
        %v270 = vld [vmem:[%s228 + $0x68] sm:$0x1]
        %v271 = vld [vmem:[%s228 + $0x74] sm:$0x1]
        %v272 = vld [vmem:[%s228 + $0x80] sm:$0x1]
        %v273 = vld [vmem:[%s228 + $0x8c] sm:$0x1]
        %v274 = vld [vmem:[%s228 + $0x98] sm:$0x1]
        %v275 = vld [vmem:[%s228 + $0xa4] sm:$0x1]
        %v276 = vld [vmem:[%s228 + $0xb0] sm:$0x1]
        %v277 = vld [vmem:[%s228 + $0xbc] sm:$0x1]
        %vm278 = vsmask.f32 3328
        %vm279 = vsmask.f32 7440
        %vm280 = vmor %vm278, %vm279
        %v282 = vshrl.u32 %v229, 16
        %v284 = vrot.slane %v282, 4
        %v285 = vshll.u32 %v229, 16
        %v287 = vrot.slane %v285, 5
        %v288 = vor.u32 %v284, %v287
        %v289 = vrot.slane %v288, 4
        %v291 = vshll.u32 %v230, 16
        %v293 = vrot.slane %v291, 5
        %v294 = vsel %vm280, %v289, %v293
        %v295 = vshrl.u32 %v230, 16
        %v297 = vrot.slane %v295, 4
        %v298 = vor.u32 %v297, %v293
        %v299 = vrot.slane %v298, 4
        %v301 = vshll.u32 %v262, 16
        %v303 = vrot.slane %v301, 5
        %v304 = vsel %vm280, %v299, %v303
        %v306 = vshrl.u32 %v231, 16
        %v308 = vrot.slane %v306, 4
        %v309 = vshll.u32 %v231, 16
        %v311 = vrot.slane %v309, 5
        %v312 = vor.u32 %v308, %v311
        %v313 = vrot.slane %v312, 4
        %v315 = vshll.u32 %v232, 16
        %v317 = vrot.slane %v315, 5
        %v318 = vsel %vm280, %v313, %v317
        %v319 = vshrl.u32 %v232, 16
        %v321 = vrot.slane %v319, 4
        %v322 = vor.u32 %v321, %v317
        %v323 = vrot.slane %v322, 4
        %v325 = vshll.u32 %v263, 16
        %v327 = vrot.slane %v325, 5
        %v328 = vsel %vm280, %v323, %v327
        %v330 = vshrl.u32 %v233, 16
        %v332 = vrot.slane %v330, 4
        %v333 = vshll.u32 %v233, 16
        %v335 = vrot.slane %v333, 5
        %v336 = vor.u32 %v332, %v335
        %v337 = vrot.slane %v336, 4
        %v339 = vshll.u32 %v234, 16
        %v341 = vrot.slane %v339, 5
        %v342 = vsel %vm280, %v337, %v341
        %v343 = vshrl.u32 %v234, 16
        %v345 = vrot.slane %v343, 4
        %v346 = vor.u32 %v345, %v341
        %v347 = vrot.slane %v346, 4
        %v349 = vshll.u32 %v264, 16
        %v351 = vrot.slane %v349, 5
        %v352 = vsel %vm280, %v347, %v351
        %v354 = vshrl.u32 %v235, 16
        %v356 = vrot.slane %v354, 4
        %v357 = vshll.u32 %v235, 16
        %v359 = vrot.slane %v357, 5
        %v360 = vor.u32 %v356, %v359
        %v361 = vrot.slane %v360, 4
        %v363 = vshll.u32 %v236, 16
        %v365 = vrot.slane %v363, 5
        %v366 = vsel %vm280, %v361, %v365
        %v367 = vshrl.u32 %v236, 16
        %v369 = vrot.slane %v367, 4
        %v370 = vor.u32 %v369, %v365
        %v371 = vrot.slane %v370, 4
        %v373 = vshll.u32 %v265, 16
        %v375 = vrot.slane %v373, 5
        %v376 = vsel %vm280, %v371, %v375
        %v378 = vshrl.u32 %v237, 16
        %v380 = vrot.slane %v378, 4
        %v381 = vshll.u32 %v237, 16
        %v383 = vrot.slane %v381, 5
        %v384 = vor.u32 %v380, %v383
        %v385 = vrot.slane %v384, 4
        %v387 = vshll.u32 %v238, 16
        %v389 = vrot.slane %v387, 5
        %v390 = vsel %vm280, %v385, %v389
        %v391 = vshrl.u32 %v238, 16
        %v393 = vrot.slane %v391, 4
        %v394 = vor.u32 %v393, %v389
        %v395 = vrot.slane %v394, 4
        %v397 = vshll.u32 %v266, 16
        %v399 = vrot.slane %v397, 5
        %v400 = vsel %vm280, %v395, %v399
        %v402 = vshrl.u32 %v239, 16
        %v404 = vrot.slane %v402, 4
        %v405 = vshll.u32 %v239, 16
        %v407 = vrot.slane %v405, 5
        %v408 = vor.u32 %v404, %v407
        %v409 = vrot.slane %v408, 4
        %v411 = vshll.u32 %v240, 16
        %v413 = vrot.slane %v411, 5
        %v414 = vsel %vm280, %v409, %v413
        %v415 = vshrl.u32 %v240, 16
        %v417 = vrot.slane %v415, 4
        %v418 = vor.u32 %v417, %v413
        %v419 = vrot.slane %v418, 4
        %v421 = vshll.u32 %v267, 16
        %v423 = vrot.slane %v421, 5
        %v424 = vsel %vm280, %v419, %v423
        %v426 = vshrl.u32 %v241, 16
        %v428 = vrot.slane %v426, 4
        %v429 = vshll.u32 %v241, 16
        %v431 = vrot.slane %v429, 5
        %v432 = vor.u32 %v428, %v431
        %v433 = vrot.slane %v432, 4
        %v435 = vshll.u32 %v242, 16
        %v437 = vrot.slane %v435, 5
        %v438 = vsel %vm280, %v433, %v437
        %v439 = vshrl.u32 %v242, 16
        %v441 = vrot.slane %v439, 4
        %v442 = vor.u32 %v441, %v437
        %v443 = vrot.slane %v442, 4
        %v445 = vshll.u32 %v268, 16
        %v447 = vrot.slane %v445, 5
        %v448 = vsel %vm280, %v443, %v447
        %v450 = vshrl.u32 %v243, 16
        %v452 = vrot.slane %v450, 4
        %v453 = vshll.u32 %v243, 16
        %v455 = vrot.slane %v453, 5
        %v456 = vor.u32 %v452, %v455
        %v457 = vrot.slane %v456, 4
        %v459 = vshll.u32 %v244, 16
        %v461 = vrot.slane %v459, 5
        %v462 = vsel %vm280, %v457, %v461
        %v463 = vshrl.u32 %v244, 16
        %v465 = vrot.slane %v463, 4
        %v466 = vor.u32 %v465, %v461
        %v467 = vrot.slane %v466, 4
        %v469 = vshll.u32 %v269, 16
        %v471 = vrot.slane %v469, 5
        %v472 = vsel %vm280, %v467, %v471
        %v474 = vshrl.u32 %v245, 16
        %v476 = vrot.slane %v474, 4
        %v477 = vshll.u32 %v245, 16
        %v479 = vrot.slane %v477, 5
        %v480 = vor.u32 %v476, %v479
        %v481 = vrot.slane %v480, 4
        %v483 = vshll.u32 %v246, 16
        %v485 = vrot.slane %v483, 5
        %v486 = vsel %vm280, %v481, %v485
        %v487 = vshrl.u32 %v246, 16
        %v489 = vrot.slane %v487, 4
        %v490 = vor.u32 %v489, %v485
        %v491 = vrot.slane %v490, 4
        %v493 = vshll.u32 %v270, 16
        %v495 = vrot.slane %v493, 5
        %v496 = vsel %vm280, %v491, %v495
        %v498 = vshrl.u32 %v247, 16
        %v500 = vrot.slane %v498, 4
        %v501 = vshll.u32 %v247, 16
        %v503 = vrot.slane %v501, 5
        %v504 = vor.u32 %v500, %v503
        %v505 = vrot.slane %v504, 4
        %v507 = vshll.u32 %v248, 16
        %v509 = vrot.slane %v507, 5
        %v510 = vsel %vm280, %v505, %v509
        %v511 = vshrl.u32 %v248, 16
        %v513 = vrot.slane %v511, 4
        %v514 = vor.u32 %v513, %v509
        %v515 = vrot.slane %v514, 4
        %v517 = vshll.u32 %v271, 16
        %v519 = vrot.slane %v517, 5
        %v520 = vsel %vm280, %v515, %v519
        %v522 = vshrl.u32 %v249, 16
        %v524 = vrot.slane %v522, 4
        %v525 = vshll.u32 %v249, 16
        %v527 = vrot.slane %v525, 5
        %v528 = vor.u32 %v524, %v527
        %v529 = vrot.slane %v528, 4
        %v531 = vshll.u32 %v250, 16
        %v533 = vrot.slane %v531, 5
        %v534 = vsel %vm280, %v529, %v533
        %v535 = vshrl.u32 %v250, 16
        %v537 = vrot.slane %v535, 4
        %v538 = vor.u32 %v537, %v533
        %v539 = vrot.slane %v538, 4
        %v541 = vshll.u32 %v272, 16
        %v543 = vrot.slane %v541, 5
        %v544 = vsel %vm280, %v539, %v543
        %v546 = vshrl.u32 %v251, 16
        %v548 = vrot.slane %v546, 4
        %v549 = vshll.u32 %v251, 16
        %v551 = vrot.slane %v549, 5
        %v552 = vor.u32 %v548, %v551
        %v553 = vrot.slane %v552, 4
        %v555 = vshll.u32 %v252, 16
        %v557 = vrot.slane %v555, 5
        %v558 = vsel %vm280, %v553, %v557
        %v559 = vshrl.u32 %v252, 16
        %v561 = vrot.slane %v559, 4
        %v562 = vor.u32 %v561, %v557
        %v563 = vrot.slane %v562, 4
        %v565 = vshll.u32 %v273, 16
        %v567 = vrot.slane %v565, 5
        %v568 = vsel %vm280, %v563, %v567
        %v570 = vshrl.u32 %v253, 16
        %v572 = vrot.slane %v570, 4
        %v573 = vshll.u32 %v253, 16
        %v575 = vrot.slane %v573, 5
        %v576 = vor.u32 %v572, %v575
        %v577 = vrot.slane %v576, 4
        %v579 = vshll.u32 %v254, 16
        %v581 = vrot.slane %v579, 5
        %v582 = vsel %vm280, %v577, %v581
        %v583 = vshrl.u32 %v254, 16
        %v585 = vrot.slane %v583, 4
        %v586 = vor.u32 %v585, %v581
        %v587 = vrot.slane %v586, 4
        %v589 = vshll.u32 %v274, 16
        %v591 = vrot.slane %v589, 5
        %v592 = vsel %vm280, %v587, %v591
        %v594 = vshrl.u32 %v255, 16
        %v596 = vrot.slane %v594, 4
        %v597 = vshll.u32 %v255, 16
        %v599 = vrot.slane %v597, 5
        %v600 = vor.u32 %v596, %v599
        %v601 = vrot.slane %v600, 4
        %v603 = vshll.u32 %v256, 16
        %v605 = vrot.slane %v603, 5
        %v606 = vsel %vm280, %v601, %v605
        %v607 = vshrl.u32 %v256, 16
        %v609 = vrot.slane %v607, 4
        %v610 = vor.u32 %v609, %v605
        %v611 = vrot.slane %v610, 4
        %v613 = vshll.u32 %v275, 16
        %v615 = vrot.slane %v613, 5
        %v616 = vsel %vm280, %v611, %v615
        %v618 = vshrl.u32 %v257, 16
        %v620 = vrot.slane %v618, 4
        %v621 = vshll.u32 %v257, 16
        %v623 = vrot.slane %v621, 5
        %v624 = vor.u32 %v620, %v623
        %v625 = vrot.slane %v624, 4
        %v627 = vshll.u32 %v258, 16
        %v629 = vrot.slane %v627, 5
        %v630 = vsel %vm280, %v625, %v629
        %v631 = vshrl.u32 %v258, 16
        %v633 = vrot.slane %v631, 4
        %v634 = vor.u32 %v633, %v629
        %v635 = vrot.slane %v634, 4
        %v637 = vshll.u32 %v276, 16
        %v639 = vrot.slane %v637, 5
        %v640 = vsel %vm280, %v635, %v639
        %v642 = vshrl.u32 %v259, 16
        %v644 = vrot.slane %v642, 4
        %v645 = vshll.u32 %v259, 16
        %v647 = vrot.slane %v645, 5
        %v648 = vor.u32 %v644, %v647
        %v649 = vrot.slane %v648, 4
        %v651 = vshll.u32 %v260, 16
        %v653 = vrot.slane %v651, 5
        %v654 = vsel %vm280, %v649, %v653
        %v655 = vshrl.u32 %v260, 16
        %v657 = vrot.slane %v655, 4
        %v658 = vor.u32 %v657, %v653
        %v659 = vrot.slane %v658, 4
        %v661 = vshll.u32 %v277, 16
        %v663 = vrot.slane %v661, 5
        %v664 = vsel %vm280, %v659, %v663
        %s665 = scalar_lea.vmem %s219, 2
        %v666 = vld [vmem:[%s665] sm:$0x3]
        %v667 = vunpack.c.l.b16 %v294
        %v668 = vunpack.c.l.b16 %v304
        %v669 = vunpack.c.l.b16 %v318
        %v670 = vunpack.c.l.b16 %v328
        %v671 = vunpack.c.l.b16 %v342
        %v672 = vunpack.c.l.b16 %v352
        %v673 = vunpack.c.l.b16 %v366
        %v674 = vunpack.c.l.b16 %v376
        %v675 = vunpack.c.l.b16 %v390
        %v676 = vunpack.c.l.b16 %v400
        %v677 = vunpack.c.l.b16 %v414
        %v678 = vunpack.c.l.b16 %v424
        %v679 = vunpack.c.l.b16 %v438
        %v680 = vunpack.c.l.b16 %v448
        %v681 = vunpack.c.l.b16 %v462
        %v682 = vunpack.c.l.b16 %v472
        %v683 = vunpack.c.l.b16 %v486
        %v684 = vunpack.c.l.b16 %v496
        %v685 = vunpack.c.l.b16 %v510
        %v686 = vunpack.c.l.b16 %v520
        %v687 = vunpack.c.l.b16 %v534
        %v688 = vunpack.c.l.b16 %v544
        %v689 = vunpack.c.l.b16 %v558
        %v690 = vunpack.c.l.b16 %v568
        %v691 = vunpack.c.l.b16 %v582
        %v692 = vunpack.c.l.b16 %v592
        %v693 = vunpack.c.l.b16 %v606
        %v694 = vunpack.c.l.b16 %v616
        %v695 = vunpack.c.l.b16 %v630
        %v696 = vunpack.c.l.b16 %v640
        %v697 = vunpack.c.l.b16 %v654
        %v698 = vunpack.c.l.b16 %v664
        %v699 = vpack.c.b16 %v668, %v667
        %v700 = vpack.c.b16 %v670, %v669
        %v701 = vpack.c.b16 %v672, %v671
        %v702 = vpack.c.b16 %v674, %v673
        %v703 = vpack.c.b16 %v676, %v675
        %v704 = vpack.c.b16 %v678, %v677
        %v705 = vpack.c.b16 %v680, %v679
        %v706 = vpack.c.b16 %v682, %v681
        %v707 = vpack.c.b16 %v684, %v683
        %v708 = vpack.c.b16 %v686, %v685
        %v709 = vpack.c.b16 %v688, %v687
        %v710 = vpack.c.b16 %v690, %v689
        %v711 = vpack.c.b16 %v692, %v691
        %v712 = vpack.c.b16 %v694, %v693
        %v713 = vpack.c.b16 %v696, %v695
        %v714 = vpack.c.b16 %v698, %v697
        %vm715 = vcmask 31744
        %v717 = vsel %vm715, %v699, 0
        %v720 = vsel %vm715, %v700, 0
        %v723 = vsel %vm715, %v701, 0
        %v726 = vsel %vm715, %v702, 0
        %v729 = vsel %vm715, %v703, 0
        %v732 = vsel %vm715, %v704, 0
        %v735 = vsel %vm715, %v705, 0
        %v738 = vsel %vm715, %v706, 0
        %v741 = vsel %vm715, %v707, 0
        %v744 = vsel %vm715, %v708, 0
        %v747 = vsel %vm715, %v709, 0
        %v750 = vsel %vm715, %v710, 0
        %v753 = vsel %vm715, %v711, 0
        %v756 = vsel %vm715, %v712, 0
        %v759 = vsel %vm715, %v713, 0
        %v762 = vsel %vm715, %v714, 0
        %vm764 = vcmask 1041408
        %v766 = vsel %vm764, %v666, 0
        %768 = vmatpush.bf16.msra.mxu0 0
        %769 = vmatpush.bf16.msra.mxu0 0
        %770 = vmatpush.bf16.msra.mxu0 0
        %771 = vmatpush.bf16.msra.mxu0 0
        %772 = vmatpush.bf16.msra.mxu0 0
        %773 = vmatpush.bf16.msra.mxu0 0
        %774 = vmatpush.bf16.msra.mxu0 0
        %775 = vmatpush.bf16.msra.mxu0 %v766
        %776 = vmatmul.bf16.gmra.mxu0 %v717
        %v777 = vpop.f32.mrf.mxu0
        %v778 = vadd.f32 0.0, %v777
        %v779 = vpop.f32.mrf.mxu0
        %v780 = vadd.f32 0.0, %v779
        %781 = vmatmul.bf16.gmra.mxu0 %v720
        %v782 = vpop.f32.mrf.mxu0
        %v783 = vadd.f32 0.0, %v782
        %v784 = vpop.f32.mrf.mxu0
        %v785 = vadd.f32 0.0, %v784
        %786 = vmatmul.bf16.gmra.mxu0 %v723
        %v787 = vpop.f32.mrf.mxu0
        %v788 = vadd.f32 0.0, %v787
        %v789 = vpop.f32.mrf.mxu0
        %v790 = vadd.f32 0.0, %v789
        %791 = vmatmul.bf16.gmra.mxu0 %v726
        %v792 = vpop.f32.mrf.mxu0
        %v793 = vadd.f32 0.0, %v792
        %v794 = vpop.f32.mrf.mxu0
        %v795 = vadd.f32 0.0, %v794
        %796 = vmatmul.bf16.gmra.mxu0 %v729
        %v797 = vpop.f32.mrf.mxu0
        %v798 = vadd.f32 0.0, %v797
        %v799 = vpop.f32.mrf.mxu0
        %v800 = vadd.f32 0.0, %v799
        %801 = vmatmul.bf16.gmra.mxu0 %v732
        %v802 = vpop.f32.mrf.mxu0
        %v803 = vadd.f32 0.0, %v802
        %v804 = vpop.f32.mrf.mxu0
        %v805 = vadd.f32 0.0, %v804
        %806 = vmatmul.bf16.gmra.mxu0 %v735
        %v807 = vpop.f32.mrf.mxu0
        %v808 = vadd.f32 0.0, %v807
        %v809 = vpop.f32.mrf.mxu0
        %v810 = vadd.f32 0.0, %v809
        %811 = vmatmul.bf16.gmra.mxu0 %v738
        %v812 = vpop.f32.mrf.mxu0
        %v813 = vadd.f32 0.0, %v812
        %v814 = vpop.f32.mrf.mxu0
        %v815 = vadd.f32 0.0, %v814
        %816 = vmatmul.bf16.gmra.mxu0 %v741
        %v817 = vpop.f32.mrf.mxu0
        %v818 = vadd.f32 0.0, %v817
        %v819 = vpop.f32.mrf.mxu0
        %v820 = vadd.f32 0.0, %v819
        %821 = vmatmul.bf16.gmra.mxu0 %v744
        %v822 = vpop.f32.mrf.mxu0
        %v823 = vadd.f32 0.0, %v822
        %v824 = vpop.f32.mrf.mxu0
        %v825 = vadd.f32 0.0, %v824
        %826 = vmatmul.bf16.gmra.mxu0 %v747
        %v827 = vpop.f32.mrf.mxu0
        %v828 = vadd.f32 0.0, %v827
        %v829 = vpop.f32.mrf.mxu0
        %v830 = vadd.f32 0.0, %v829
        %831 = vmatmul.bf16.gmra.mxu0 %v750
        %v832 = vpop.f32.mrf.mxu0
        %v833 = vadd.f32 0.0, %v832
        %v834 = vpop.f32.mrf.mxu0
        %v835 = vadd.f32 0.0, %v834
        %836 = vmatmul.bf16.gmra.mxu0 %v753
        %v837 = vpop.f32.mrf.mxu0
        %v838 = vadd.f32 0.0, %v837
        %v839 = vpop.f32.mrf.mxu0
        %v840 = vadd.f32 0.0, %v839
        %841 = vmatmul.bf16.gmra.mxu0 %v756
        %v842 = vpop.f32.mrf.mxu0
        %v843 = vadd.f32 0.0, %v842
        %v844 = vpop.f32.mrf.mxu0
        %v845 = vadd.f32 0.0, %v844
        %846 = vmatmul.bf16.gmra.mxu0 %v759
        %v847 = vpop.f32.mrf.mxu0
        %v848 = vadd.f32 0.0, %v847
        %v849 = vpop.f32.mrf.mxu0
        %v850 = vadd.f32 0.0, %v849
        %851 = vmatmul.bf16.gmra.mxu0 %v762
        %v852 = vpop.f32.mrf.mxu0
        %v853 = vadd.f32 0.0, %v852
        %v854 = vpop.f32.mrf.mxu0
        %v855 = vadd.f32 0.0, %v854
        %856 = vdwg.mxu0
        %v889 = vunpack.c.l.b16 %v229
        %v890 = vunpack.c.l.b16 %v230
        %v891 = vunpack.c.l.b16 %v231
        %v892 = vunpack.c.l.b16 %v232
        %v893 = vunpack.c.l.b16 %v233
        %v894 = vunpack.c.l.b16 %v234
        %v895 = vunpack.c.l.b16 %v235
        %v896 = vunpack.c.l.b16 %v236
        %v897 = vunpack.c.l.b16 %v237
        %v898 = vunpack.c.l.b16 %v238
        %v899 = vunpack.c.l.b16 %v239
        %v900 = vunpack.c.l.b16 %v240
        %v901 = vunpack.c.l.b16 %v241
        %v902 = vunpack.c.l.b16 %v242
        %v903 = vunpack.c.l.b16 %v243
        %v904 = vunpack.c.l.b16 %v244
        %v905 = vunpack.c.l.b16 %v245
        %v906 = vunpack.c.l.b16 %v246
        %v907 = vunpack.c.l.b16 %v247
        %v908 = vunpack.c.l.b16 %v248
        %v909 = vunpack.c.l.b16 %v249
        %v910 = vunpack.c.l.b16 %v250
        %v911 = vunpack.c.l.b16 %v251
        %v912 = vunpack.c.l.b16 %v252
        %v913 = vunpack.c.l.b16 %v253
        %v914 = vunpack.c.l.b16 %v254
        %v915 = vunpack.c.l.b16 %v255
        %v916 = vunpack.c.l.b16 %v256
        %v917 = vunpack.c.l.b16 %v257
        %v918 = vunpack.c.l.b16 %v258
        %v919 = vunpack.c.l.b16 %v259
        %v920 = vunpack.c.l.b16 %v260
        %v921 = vpack.c.b16 %v890, %v889
        %v922 = vpack.c.b16 %v892, %v891
        %v923 = vpack.c.b16 %v894, %v893
        %v924 = vpack.c.b16 %v896, %v895
        %v925 = vpack.c.b16 %v898, %v897
        %v926 = vpack.c.b16 %v900, %v899
        %v927 = vpack.c.b16 %v902, %v901
        %v928 = vpack.c.b16 %v904, %v903
        %v929 = vpack.c.b16 %v906, %v905
        %v930 = vpack.c.b16 %v908, %v907
        %v931 = vpack.c.b16 %v910, %v909
        %v932 = vpack.c.b16 %v912, %v911
        %v933 = vpack.c.b16 %v914, %v913
        %v934 = vpack.c.b16 %v916, %v915
        %v935 = vpack.c.b16 %v918, %v917
        %v936 = vpack.c.b16 %v920, %v919
        %v938 = vsel %vm715, %v921, 0
        %v941 = vsel %vm715, %v922, 0
        %v944 = vsel %vm715, %v923, 0
        %v947 = vsel %vm715, %v924, 0
        %v950 = vsel %vm715, %v925, 0
        %v953 = vsel %vm715, %v926, 0
        %v956 = vsel %vm715, %v927, 0
        %v959 = vsel %vm715, %v928, 0
        %v962 = vsel %vm715, %v929, 0
        %v965 = vsel %vm715, %v930, 0
        %v968 = vsel %vm715, %v931, 0
        %v971 = vsel %vm715, %v932, 0
        %v974 = vsel %vm715, %v933, 0
        %v977 = vsel %vm715, %v934, 0
        %v980 = vsel %vm715, %v935, 0
        %v983 = vsel %vm715, %v936, 0
        %v986 = vsel %vm764, %v261, 0
        %988 = vmatpush.bf16.msra.mxu0 0
        %989 = vmatpush.bf16.msra.mxu0 0
        %990 = vmatpush.bf16.msra.mxu0 0
        %991 = vmatpush.bf16.msra.mxu0 0
        %992 = vmatpush.bf16.msra.mxu0 0
        %993 = vmatpush.bf16.msra.mxu0 0
        %994 = vmatpush.bf16.msra.mxu0 0
        %995 = vmatpush.bf16.msra.mxu0 %v986
        %996 = vmatmul.bf16.gmra.mxu0 %v938
        %v997 = vpop.f32.mrf.mxu0
        %v998 = vadd.f32 %v778, %v997
        %v999 = vpop.f32.mrf.mxu0
        %v1000 = vadd.f32 %v780, %v999
        %1001 = vmatmul.bf16.gmra.mxu0 %v941
        %v1002 = vpop.f32.mrf.mxu0
        %v1003 = vadd.f32 %v783, %v1002
        %v1004 = vpop.f32.mrf.mxu0
        %v1005 = vadd.f32 %v785, %v1004
        %1006 = vmatmul.bf16.gmra.mxu0 %v944
        %v1007 = vpop.f32.mrf.mxu0
        %v1008 = vadd.f32 %v788, %v1007
        %v1009 = vpop.f32.mrf.mxu0
        %v1010 = vadd.f32 %v790, %v1009
        %1011 = vmatmul.bf16.gmra.mxu0 %v947
        %v1012 = vpop.f32.mrf.mxu0
        %v1013 = vadd.f32 %v793, %v1012
        %v1014 = vpop.f32.mrf.mxu0
        %v1015 = vadd.f32 %v795, %v1014
        %1016 = vmatmul.bf16.gmra.mxu0 %v950
        %v1017 = vpop.f32.mrf.mxu0
        %v1018 = vadd.f32 %v798, %v1017
        %v1019 = vpop.f32.mrf.mxu0
        %v1020 = vadd.f32 %v800, %v1019
        %1021 = vmatmul.bf16.gmra.mxu0 %v953
        %v1022 = vpop.f32.mrf.mxu0
        %v1023 = vadd.f32 %v803, %v1022
        %v1024 = vpop.f32.mrf.mxu0
        %v1025 = vadd.f32 %v805, %v1024
        %1026 = vmatmul.bf16.gmra.mxu0 %v956
        %v1027 = vpop.f32.mrf.mxu0
        %v1028 = vadd.f32 %v808, %v1027
        %v1029 = vpop.f32.mrf.mxu0
        %v1030 = vadd.f32 %v810, %v1029
        %1031 = vmatmul.bf16.gmra.mxu0 %v959
        %v1032 = vpop.f32.mrf.mxu0
        %v1033 = vadd.f32 %v813, %v1032
        %v1034 = vpop.f32.mrf.mxu0
        %v1035 = vadd.f32 %v815, %v1034
        %1036 = vmatmul.bf16.gmra.mxu0 %v962
        %v1037 = vpop.f32.mrf.mxu0
        %v1038 = vadd.f32 %v818, %v1037
        %v1039 = vpop.f32.mrf.mxu0
        %v1040 = vadd.f32 %v820, %v1039
        %1041 = vmatmul.bf16.gmra.mxu0 %v965
        %v1042 = vpop.f32.mrf.mxu0
        %v1043 = vadd.f32 %v823, %v1042
        %v1044 = vpop.f32.mrf.mxu0
        %v1045 = vadd.f32 %v825, %v1044
        %1046 = vmatmul.bf16.gmra.mxu0 %v968
        %v1047 = vpop.f32.mrf.mxu0
        %v1048 = vadd.f32 %v828, %v1047
        %v1049 = vpop.f32.mrf.mxu0
        %v1050 = vadd.f32 %v830, %v1049
        %1051 = vmatmul.bf16.gmra.mxu0 %v971
        %v1052 = vpop.f32.mrf.mxu0
        %v1053 = vadd.f32 %v833, %v1052
        %v1054 = vpop.f32.mrf.mxu0
        %v1055 = vadd.f32 %v835, %v1054
        %1056 = vmatmul.bf16.gmra.mxu0 %v974
        %v1057 = vpop.f32.mrf.mxu0
        %v1058 = vadd.f32 %v838, %v1057
        %v1059 = vpop.f32.mrf.mxu0
        %v1060 = vadd.f32 %v840, %v1059
        %1061 = vmatmul.bf16.gmra.mxu0 %v977
        %v1062 = vpop.f32.mrf.mxu0
        %v1063 = vadd.f32 %v843, %v1062
        %v1064 = vpop.f32.mrf.mxu0
        %v1065 = vadd.f32 %v845, %v1064
        %1066 = vmatmul.bf16.gmra.mxu0 %v980
        %v1067 = vpop.f32.mrf.mxu0
        %v1068 = vadd.f32 %v848, %v1067
        %v1069 = vpop.f32.mrf.mxu0
        %v1070 = vadd.f32 %v850, %v1069
        %1071 = vmatmul.bf16.gmra.mxu0 %v983
        %v1072 = vpop.f32.mrf.mxu0
        %v1073 = vadd.f32 %v853, %v1072
        %v1074 = vpop.f32.mrf.mxu0
        %v1075 = vadd.f32 %v855, %v1074
        %1076 = vdwg.mxu0
        %v1077 = vld [vmem:[%s228] sm:$0xe]
        %v1078 = vld [vmem:[%s228 + $0xc] sm:$0xe]
        %v1079 = vld [vmem:[%s228 + $0x18] sm:$0xe]
        %v1080 = vld [vmem:[%s228 + $0x24] sm:$0xe]
        %v1081 = vld [vmem:[%s228 + $0x30] sm:$0xe]
        %v1082 = vld [vmem:[%s228 + $0x3c] sm:$0xe]
        %v1083 = vld [vmem:[%s228 + $0x48] sm:$0xe]
        %v1084 = vld [vmem:[%s228 + $0x54] sm:$0xe]
        %v1085 = vld [vmem:[%s228 + $0x60] sm:$0xe]
        %v1086 = vld [vmem:[%s228 + $0x6c] sm:$0xe]
        %v1087 = vld [vmem:[%s228 + $0x78] sm:$0xe]
        %v1088 = vld [vmem:[%s228 + $0x84] sm:$0xe]
        %v1089 = vld [vmem:[%s228 + $0x90] sm:$0xe]
        %v1090 = vld [vmem:[%s228 + $0x9c] sm:$0xe]
        %v1091 = vld [vmem:[%s228 + $0xa8] sm:$0xe]
        %v1092 = vld [vmem:[%s228 + $0xb4] sm:$0xe]
        %vm1125 = vcmask 1042432
        %vm1126 = vcmask 1046532
        %vm1127 = vmor %vm1125, %vm1126
        %v1128 = vrot.slane %v1077, 5
        %v1129 = vrot.slane %v1128, 4
        %v1130 = vrot.slane %v230, 5
        %v1131 = vsel %vm1127, %v1129, %v1130
        %v1132 = vrot.slane %v1130, 4
        %v1133 = vrot.slane %v262, 5
        %v1134 = vsel %vm1127, %v1132, %v1133
        %v1135 = vrot.slane %v1078, 5
        %v1136 = vrot.slane %v1135, 4
        %v1137 = vrot.slane %v232, 5
        %v1138 = vsel %vm1127, %v1136, %v1137
        %v1139 = vrot.slane %v1137, 4
        %v1140 = vrot.slane %v263, 5
        %v1141 = vsel %vm1127, %v1139, %v1140
        %v1142 = vrot.slane %v1079, 5
        %v1143 = vrot.slane %v1142, 4
        %v1144 = vrot.slane %v234, 5
        %v1145 = vsel %vm1127, %v1143, %v1144
        %v1146 = vrot.slane %v1144, 4
        %v1147 = vrot.slane %v264, 5
        %v1148 = vsel %vm1127, %v1146, %v1147
        %v1149 = vrot.slane %v1080, 5
        %v1150 = vrot.slane %v1149, 4
        %v1151 = vrot.slane %v236, 5
        %v1152 = vsel %vm1127, %v1150, %v1151
        %v1153 = vrot.slane %v1151, 4
        %v1154 = vrot.slane %v265, 5
        %v1155 = vsel %vm1127, %v1153, %v1154
        %v1156 = vrot.slane %v1081, 5
        %v1157 = vrot.slane %v1156, 4
        %v1158 = vrot.slane %v238, 5
        %v1159 = vsel %vm1127, %v1157, %v1158
        %v1160 = vrot.slane %v1158, 4
        %v1161 = vrot.slane %v266, 5
        %v1162 = vsel %vm1127, %v1160, %v1161
        %v1163 = vrot.slane %v1082, 5
        %v1164 = vrot.slane %v1163, 4
        %v1165 = vrot.slane %v240, 5
        %v1166 = vsel %vm1127, %v1164, %v1165
        %v1167 = vrot.slane %v1165, 4
        %v1168 = vrot.slane %v267, 5
        %v1169 = vsel %vm1127, %v1167, %v1168
        %v1170 = vrot.slane %v1083, 5
        %v1171 = vrot.slane %v1170, 4
        %v1172 = vrot.slane %v242, 5
        %v1173 = vsel %vm1127, %v1171, %v1172
        %v1174 = vrot.slane %v1172, 4
        %v1175 = vrot.slane %v268, 5
        %v1176 = vsel %vm1127, %v1174, %v1175
        %v1177 = vrot.slane %v1084, 5
        %v1178 = vrot.slane %v1177, 4
        %v1179 = vrot.slane %v244, 5
        %v1180 = vsel %vm1127, %v1178, %v1179
        %v1181 = vrot.slane %v1179, 4
        %v1182 = vrot.slane %v269, 5
        %v1183 = vsel %vm1127, %v1181, %v1182
        %v1184 = vrot.slane %v1085, 5
        %v1185 = vrot.slane %v1184, 4
        %v1186 = vrot.slane %v246, 5
        %v1187 = vsel %vm1127, %v1185, %v1186
        %v1188 = vrot.slane %v1186, 4
        %v1189 = vrot.slane %v270, 5
        %v1190 = vsel %vm1127, %v1188, %v1189
        %v1191 = vrot.slane %v1086, 5
        %v1192 = vrot.slane %v1191, 4
        %v1193 = vrot.slane %v248, 5
        %v1194 = vsel %vm1127, %v1192, %v1193
        %v1195 = vrot.slane %v1193, 4
        %v1196 = vrot.slane %v271, 5
        %v1197 = vsel %vm1127, %v1195, %v1196
        %v1198 = vrot.slane %v1087, 5
        %v1199 = vrot.slane %v1198, 4
        %v1200 = vrot.slane %v250, 5
        %v1201 = vsel %vm1127, %v1199, %v1200
        %v1202 = vrot.slane %v1200, 4
        %v1203 = vrot.slane %v272, 5
        %v1204 = vsel %vm1127, %v1202, %v1203
        %v1205 = vrot.slane %v1088, 5
        %v1206 = vrot.slane %v1205, 4
        %v1207 = vrot.slane %v252, 5
        %v1208 = vsel %vm1127, %v1206, %v1207
        %v1209 = vrot.slane %v1207, 4
        %v1210 = vrot.slane %v273, 5
        %v1211 = vsel %vm1127, %v1209, %v1210
        %v1212 = vrot.slane %v1089, 5
        %v1213 = vrot.slane %v1212, 4
        %v1214 = vrot.slane %v254, 5
        %v1215 = vsel %vm1127, %v1213, %v1214
        %v1216 = vrot.slane %v1214, 4
        %v1217 = vrot.slane %v274, 5
        %v1218 = vsel %vm1127, %v1216, %v1217
        %v1219 = vrot.slane %v1090, 5
        %v1220 = vrot.slane %v1219, 4
        %v1221 = vrot.slane %v256, 5
        %v1222 = vsel %vm1127, %v1220, %v1221
        %v1223 = vrot.slane %v1221, 4
        %v1224 = vrot.slane %v275, 5
        %v1225 = vsel %vm1127, %v1223, %v1224
        %v1226 = vrot.slane %v1091, 5
        %v1227 = vrot.slane %v1226, 4
        %v1228 = vrot.slane %v258, 5
        %v1229 = vsel %vm1127, %v1227, %v1228
        %v1230 = vrot.slane %v1228, 4
        %v1231 = vrot.slane %v276, 5
        %v1232 = vsel %vm1127, %v1230, %v1231
        %v1233 = vrot.slane %v1092, 5
        %v1234 = vrot.slane %v1233, 4
        %v1235 = vrot.slane %v260, 5
        %v1236 = vsel %vm1127, %v1234, %v1235
        %v1237 = vrot.slane %v1235, 4
        %v1238 = vrot.slane %v277, 5
        %v1239 = vsel %vm1127, %v1237, %v1238
        %s1240 = scalar_lea.vmem %s219, 4
        %v1241 = vld [vmem:[%s1240] sm:$0x3]
        %v1242 = vunpack.c.l.b16 %v1131
        %v1243 = vunpack.c.l.b16 %v1134
        %v1244 = vunpack.c.l.b16 %v1138
        %v1245 = vunpack.c.l.b16 %v1141
        %v1246 = vunpack.c.l.b16 %v1145
        %v1247 = vunpack.c.l.b16 %v1148
        %v1248 = vunpack.c.l.b16 %v1152
        %v1249 = vunpack.c.l.b16 %v1155
        %v1250 = vunpack.c.l.b16 %v1159
        %v1251 = vunpack.c.l.b16 %v1162
        %v1252 = vunpack.c.l.b16 %v1166
        %v1253 = vunpack.c.l.b16 %v1169
        %v1254 = vunpack.c.l.b16 %v1173
        %v1255 = vunpack.c.l.b16 %v1176
        %v1256 = vunpack.c.l.b16 %v1180
        %v1257 = vunpack.c.l.b16 %v1183
        %v1258 = vunpack.c.l.b16 %v1187
        %v1259 = vunpack.c.l.b16 %v1190
        %v1260 = vunpack.c.l.b16 %v1194
        %v1261 = vunpack.c.l.b16 %v1197
        %v1262 = vunpack.c.l.b16 %v1201
        %v1263 = vunpack.c.l.b16 %v1204
        %v1264 = vunpack.c.l.b16 %v1208
        %v1265 = vunpack.c.l.b16 %v1211
        %v1266 = vunpack.c.l.b16 %v1215
        %v1267 = vunpack.c.l.b16 %v1218
        %v1268 = vunpack.c.l.b16 %v1222
        %v1269 = vunpack.c.l.b16 %v1225
        %v1270 = vunpack.c.l.b16 %v1229
        %v1271 = vunpack.c.l.b16 %v1232
        %v1272 = vunpack.c.l.b16 %v1236
        %v1273 = vunpack.c.l.b16 %v1239
        %v1274 = vpack.c.b16 %v1243, %v1242
        %v1275 = vpack.c.b16 %v1245, %v1244
        %v1276 = vpack.c.b16 %v1247, %v1246
        %v1277 = vpack.c.b16 %v1249, %v1248
        %v1278 = vpack.c.b16 %v1251, %v1250
        %v1279 = vpack.c.b16 %v1253, %v1252
        %v1280 = vpack.c.b16 %v1255, %v1254
        %v1281 = vpack.c.b16 %v1257, %v1256
        %v1282 = vpack.c.b16 %v1259, %v1258
        %v1283 = vpack.c.b16 %v1261, %v1260
        %v1284 = vpack.c.b16 %v1263, %v1262
        %v1285 = vpack.c.b16 %v1265, %v1264
        %v1286 = vpack.c.b16 %v1267, %v1266
        %v1287 = vpack.c.b16 %v1269, %v1268
        %v1288 = vpack.c.b16 %v1271, %v1270
        %v1289 = vpack.c.b16 %v1273, %v1272
        %v1291 = vsel %vm715, %v1274, 0
        %v1294 = vsel %vm715, %v1275, 0
        %v1297 = vsel %vm715, %v1276, 0
        %v1300 = vsel %vm715, %v1277, 0
        %v1303 = vsel %vm715, %v1278, 0
        %v1306 = vsel %vm715, %v1279, 0
        %v1309 = vsel %vm715, %v1280, 0
        %v1312 = vsel %vm715, %v1281, 0
        %v1315 = vsel %vm715, %v1282, 0
        %v1318 = vsel %vm715, %v1283, 0
        %v1321 = vsel %vm715, %v1284, 0
        %v1324 = vsel %vm715, %v1285, 0
        %v1327 = vsel %vm715, %v1286, 0
        %v1330 = vsel %vm715, %v1287, 0
        %v1333 = vsel %vm715, %v1288, 0
        %v1336 = vsel %vm715, %v1289, 0
        %v1339 = vsel %vm764, %v1241, 0
        %1341 = vmatpush.bf16.msra.mxu0 0
        %1342 = vmatpush.bf16.msra.mxu0 0
        %1343 = vmatpush.bf16.msra.mxu0 0
        %1344 = vmatpush.bf16.msra.mxu0 0
        %1345 = vmatpush.bf16.msra.mxu0 0
        %1346 = vmatpush.bf16.msra.mxu0 0
        %1347 = vmatpush.bf16.msra.mxu0 0
        %1348 = vmatpush.bf16.msra.mxu0 %v1339
        %1349 = vmatmul.bf16.gmra.mxu0 %v1291
        %v1350 = vpop.f32.mrf.mxu0
        %v1351 = vadd.f32 0.0, %v1350
        %v1352 = vpop.f32.mrf.mxu0
        %v1353 = vadd.f32 0.0, %v1352
        %1354 = vmatmul.bf16.gmra.mxu0 %v1294
        %v1355 = vpop.f32.mrf.mxu0
        %v1356 = vadd.f32 0.0, %v1355
        %v1357 = vpop.f32.mrf.mxu0
        %v1358 = vadd.f32 0.0, %v1357
        %1359 = vmatmul.bf16.gmra.mxu0 %v1297
        %v1360 = vpop.f32.mrf.mxu0
        %v1361 = vadd.f32 0.0, %v1360
        %v1362 = vpop.f32.mrf.mxu0
        %v1363 = vadd.f32 0.0, %v1362
        %1364 = vmatmul.bf16.gmra.mxu0 %v1300
        %v1365 = vpop.f32.mrf.mxu0
        %v1366 = vadd.f32 0.0, %v1365
        %v1367 = vpop.f32.mrf.mxu0
        %v1368 = vadd.f32 0.0, %v1367
        %1369 = vmatmul.bf16.gmra.mxu0 %v1303
        %v1370 = vpop.f32.mrf.mxu0
        %v1371 = vadd.f32 0.0, %v1370
        %v1372 = vpop.f32.mrf.mxu0
        %v1373 = vadd.f32 0.0, %v1372
        %1374 = vmatmul.bf16.gmra.mxu0 %v1306
        %v1375 = vpop.f32.mrf.mxu0
        %v1376 = vadd.f32 0.0, %v1375
        %v1377 = vpop.f32.mrf.mxu0
        %v1378 = vadd.f32 0.0, %v1377
        %1379 = vmatmul.bf16.gmra.mxu0 %v1309
        %v1380 = vpop.f32.mrf.mxu0
        %v1381 = vadd.f32 0.0, %v1380
        %v1382 = vpop.f32.mrf.mxu0
        %v1383 = vadd.f32 0.0, %v1382
        %1384 = vmatmul.bf16.gmra.mxu0 %v1312
        %v1385 = vpop.f32.mrf.mxu0
        %v1386 = vadd.f32 0.0, %v1385
        %v1387 = vpop.f32.mrf.mxu0
        %v1388 = vadd.f32 0.0, %v1387
        %1389 = vmatmul.bf16.gmra.mxu0 %v1315
        %v1390 = vpop.f32.mrf.mxu0
        %v1391 = vadd.f32 0.0, %v1390
        %v1392 = vpop.f32.mrf.mxu0
        %v1393 = vadd.f32 0.0, %v1392
        %1394 = vmatmul.bf16.gmra.mxu0 %v1318
        %v1395 = vpop.f32.mrf.mxu0
        %v1396 = vadd.f32 0.0, %v1395
        %v1397 = vpop.f32.mrf.mxu0
        %v1398 = vadd.f32 0.0, %v1397
        %1399 = vmatmul.bf16.gmra.mxu0 %v1321
        %v1400 = vpop.f32.mrf.mxu0
        %v1401 = vadd.f32 0.0, %v1400
        %v1402 = vpop.f32.mrf.mxu0
        %v1403 = vadd.f32 0.0, %v1402
        %1404 = vmatmul.bf16.gmra.mxu0 %v1324
        %v1405 = vpop.f32.mrf.mxu0
        %v1406 = vadd.f32 0.0, %v1405
        %v1407 = vpop.f32.mrf.mxu0
        %v1408 = vadd.f32 0.0, %v1407
        %1409 = vmatmul.bf16.gmra.mxu0 %v1327
        %v1410 = vpop.f32.mrf.mxu0
        %v1411 = vadd.f32 0.0, %v1410
        %v1412 = vpop.f32.mrf.mxu0
        %v1413 = vadd.f32 0.0, %v1412
        %1414 = vmatmul.bf16.gmra.mxu0 %v1330
        %v1415 = vpop.f32.mrf.mxu0
        %v1416 = vadd.f32 0.0, %v1415
        %v1417 = vpop.f32.mrf.mxu0
        %v1418 = vadd.f32 0.0, %v1417
        %1419 = vmatmul.bf16.gmra.mxu0 %v1333
        %v1420 = vpop.f32.mrf.mxu0
        %v1421 = vadd.f32 0.0, %v1420
        %v1422 = vpop.f32.mrf.mxu0
        %v1423 = vadd.f32 0.0, %v1422
        %1424 = vmatmul.bf16.gmra.mxu0 %v1336
        %v1425 = vpop.f32.mrf.mxu0
        %v1426 = vadd.f32 0.0, %v1425
        %v1427 = vpop.f32.mrf.mxu0
        %v1428 = vadd.f32 0.0, %v1427
        %1429 = vdwg.mxu0
        %v1430 = vadd.f32 %v998, %v1351
        %v1431 = vadd.f32 %v1000, %v1353
        %v1432 = vadd.f32 %v1003, %v1356
        %v1433 = vadd.f32 %v1005, %v1358
        %v1434 = vadd.f32 %v1008, %v1361
        %v1435 = vadd.f32 %v1010, %v1363
        %v1436 = vadd.f32 %v1013, %v1366
        %v1437 = vadd.f32 %v1015, %v1368
        %v1438 = vadd.f32 %v1018, %v1371
        %v1439 = vadd.f32 %v1020, %v1373
        %v1440 = vadd.f32 %v1023, %v1376
        %v1441 = vadd.f32 %v1025, %v1378
        %v1442 = vadd.f32 %v1028, %v1381
        %v1443 = vadd.f32 %v1030, %v1383
        %v1444 = vadd.f32 %v1033, %v1386
        %v1445 = vadd.f32 %v1035, %v1388
        %v1446 = vadd.f32 %v1038, %v1391
        %v1447 = vadd.f32 %v1040, %v1393
        %v1448 = vadd.f32 %v1043, %v1396
        %v1449 = vadd.f32 %v1045, %v1398
        %v1450 = vadd.f32 %v1048, %v1401
        %v1451 = vadd.f32 %v1050, %v1403
        %v1452 = vadd.f32 %v1053, %v1406
        %v1453 = vadd.f32 %v1055, %v1408
        %v1454 = vadd.f32 %v1058, %v1411
        %v1455 = vadd.f32 %v1060, %v1413
        %v1456 = vadd.f32 %v1063, %v1416
        %v1457 = vadd.f32 %v1065, %v1418
        %v1458 = vadd.f32 %v1068, %v1421
        %v1459 = vadd.f32 %v1070, %v1423
        %v1460 = vadd.f32 %v1073, %v1426
        %v1461 = vadd.f32 %v1075, %v1428
        %s1462 = sadd.s32 %s225, 1
        %s1463 = smul.u32 %s1462, 3
        %s1464 = smul.addr %s1463, 4
        %s1465 = scalar_lea.vmem %s215, %s1464
        %v1466 = vld [vmem:[%s1465] sm:$0xf]
        %v1467 = vld [vmem:[%s1465 + $0x4] sm:$0xf]
        %v1468 = vld [vmem:[%s1465 + $0xc] sm:$0xf]
        %v1469 = vld [vmem:[%s1465 + $0x10] sm:$0xf]
        %v1470 = vld [vmem:[%s1465 + $0x18] sm:$0xf]
        %v1471 = vld [vmem:[%s1465 + $0x1c] sm:$0xf]
        %v1472 = vld [vmem:[%s1465 + $0x24] sm:$0xf]
        %v1473 = vld [vmem:[%s1465 + $0x28] sm:$0xf]
        %v1474 = vld [vmem:[%s1465 + $0x30] sm:$0xf]
        %v1475 = vld [vmem:[%s1465 + $0x34] sm:$0xf]
        %v1476 = vld [vmem:[%s1465 + $0x3c] sm:$0xf]
        %v1477 = vld [vmem:[%s1465 + $0x40] sm:$0xf]
        %v1478 = vld [vmem:[%s1465 + $0x48] sm:$0xf]
        %v1479 = vld [vmem:[%s1465 + $0x4c] sm:$0xf]
        %v1480 = vld [vmem:[%s1465 + $0x54] sm:$0xf]
        %v1481 = vld [vmem:[%s1465 + $0x58] sm:$0xf]
        %v1482 = vld [vmem:[%s1465 + $0x60] sm:$0xf]
        %v1483 = vld [vmem:[%s1465 + $0x64] sm:$0xf]
        %v1484 = vld [vmem:[%s1465 + $0x6c] sm:$0xf]
        %v1485 = vld [vmem:[%s1465 + $0x70] sm:$0xf]
        %v1486 = vld [vmem:[%s1465 + $0x78] sm:$0xf]
        %v1487 = vld [vmem:[%s1465 + $0x7c] sm:$0xf]
        %v1488 = vld [vmem:[%s1465 + $0x84] sm:$0xf]
        %v1489 = vld [vmem:[%s1465 + $0x88] sm:$0xf]
        %v1490 = vld [vmem:[%s1465 + $0x90] sm:$0xf]
        %v1491 = vld [vmem:[%s1465 + $0x94] sm:$0xf]
        %v1492 = vld [vmem:[%s1465 + $0x9c] sm:$0xf]
        %v1493 = vld [vmem:[%s1465 + $0xa0] sm:$0xf]
        %v1494 = vld [vmem:[%s1465 + $0xa8] sm:$0xf]
        %v1495 = vld [vmem:[%s1465 + $0xac] sm:$0xf]
        %v1496 = vld [vmem:[%s1465 + $0xb4] sm:$0xf]
        %v1497 = vld [vmem:[%s1465 + $0xb8] sm:$0xf]
        %s1498 = scalar_lea.vmem %s219, 6
        %v1499 = vld [vmem:[%s1498] sm:$0x3]
        %v1532 = vunpack.c.l.b16 %v1466
        %v1533 = vunpack.c.l.b16 %v1467
        %v1534 = vunpack.c.l.b16 %v1468
        %v1535 = vunpack.c.l.b16 %v1469
        %v1536 = vunpack.c.l.b16 %v1470
        %v1537 = vunpack.c.l.b16 %v1471
        %v1538 = vunpack.c.l.b16 %v1472
        %v1539 = vunpack.c.l.b16 %v1473
        %v1540 = vunpack.c.l.b16 %v1474
        %v1541 = vunpack.c.l.b16 %v1475
        %v1542 = vunpack.c.l.b16 %v1476
        %v1543 = vunpack.c.l.b16 %v1477
        %v1544 = vunpack.c.l.b16 %v1478
        %v1545 = vunpack.c.l.b16 %v1479
        %v1546 = vunpack.c.l.b16 %v1480
        %v1547 = vunpack.c.l.b16 %v1481
        %v1548 = vunpack.c.l.b16 %v1482
        %v1549 = vunpack.c.l.b16 %v1483
        %v1550 = vunpack.c.l.b16 %v1484
        %v1551 = vunpack.c.l.b16 %v1485
        %v1552 = vunpack.c.l.b16 %v1486
        %v1553 = vunpack.c.l.b16 %v1487
        %v1554 = vunpack.c.l.b16 %v1488
        %v1555 = vunpack.c.l.b16 %v1489
        %v1556 = vunpack.c.l.b16 %v1490
        %v1557 = vunpack.c.l.b16 %v1491
        %v1558 = vunpack.c.l.b16 %v1492
        %v1559 = vunpack.c.l.b16 %v1493
        %v1560 = vunpack.c.l.b16 %v1494
        %v1561 = vunpack.c.l.b16 %v1495
        %v1562 = vunpack.c.l.b16 %v1496
        %v1563 = vunpack.c.l.b16 %v1497
        %v1564 = vpack.c.b16 %v1533, %v1532
        %v1565 = vpack.c.b16 %v1535, %v1534
        %v1566 = vpack.c.b16 %v1537, %v1536
        %v1567 = vpack.c.b16 %v1539, %v1538
        %v1568 = vpack.c.b16 %v1541, %v1540
        %v1569 = vpack.c.b16 %v1543, %v1542
        %v1570 = vpack.c.b16 %v1545, %v1544
        %v1571 = vpack.c.b16 %v1547, %v1546
        %v1572 = vpack.c.b16 %v1549, %v1548
        %v1573 = vpack.c.b16 %v1551, %v1550
        %v1574 = vpack.c.b16 %v1553, %v1552
        %v1575 = vpack.c.b16 %v1555, %v1554
        %v1576 = vpack.c.b16 %v1557, %v1556
        %v1577 = vpack.c.b16 %v1559, %v1558
        %v1578 = vpack.c.b16 %v1561, %v1560
        %v1579 = vpack.c.b16 %v1563, %v1562
        %v1581 = vsel %vm715, %v1564, 0
        %v1584 = vsel %vm715, %v1565, 0
        %v1587 = vsel %vm715, %v1566, 0
        %v1590 = vsel %vm715, %v1567, 0
        %v1593 = vsel %vm715, %v1568, 0
        %v1596 = vsel %vm715, %v1569, 0
        %v1599 = vsel %vm715, %v1570, 0
        %v1602 = vsel %vm715, %v1571, 0
        %v1605 = vsel %vm715, %v1572, 0
        %v1608 = vsel %vm715, %v1573, 0
        %v1611 = vsel %vm715, %v1574, 0
        %v1614 = vsel %vm715, %v1575, 0
        %v1617 = vsel %vm715, %v1576, 0
        %v1620 = vsel %vm715, %v1577, 0
        %v1623 = vsel %vm715, %v1578, 0
        %v1626 = vsel %vm715, %v1579, 0
        %v1629 = vsel %vm764, %v1499, 0
        %1631 = vmatpush.bf16.msra.mxu0 0
        %1632 = vmatpush.bf16.msra.mxu0 0
        %1633 = vmatpush.bf16.msra.mxu0 0
        %1634 = vmatpush.bf16.msra.mxu0 0
        %1635 = vmatpush.bf16.msra.mxu0 0
        %1636 = vmatpush.bf16.msra.mxu0 0
        %1637 = vmatpush.bf16.msra.mxu0 0
        %1638 = vmatpush.bf16.msra.mxu0 %v1629
        %1639 = vmatmul.bf16.gmra.mxu0 %v1581
        %v1640 = vpop.f32.mrf.mxu0
        %v1641 = vadd.f32 0.0, %v1640
        %v1642 = vpop.f32.mrf.mxu0
        %v1643 = vadd.f32 0.0, %v1642
        %1644 = vmatmul.bf16.gmra.mxu0 %v1584
        %v1645 = vpop.f32.mrf.mxu0
        %v1646 = vadd.f32 0.0, %v1645
        %v1647 = vpop.f32.mrf.mxu0
        %v1648 = vadd.f32 0.0, %v1647
        %1649 = vmatmul.bf16.gmra.mxu0 %v1587
        %v1650 = vpop.f32.mrf.mxu0
        %v1651 = vadd.f32 0.0, %v1650
        %v1652 = vpop.f32.mrf.mxu0
        %v1653 = vadd.f32 0.0, %v1652
        %1654 = vmatmul.bf16.gmra.mxu0 %v1590
        %v1655 = vpop.f32.mrf.mxu0
        %v1656 = vadd.f32 0.0, %v1655
        %v1657 = vpop.f32.mrf.mxu0
        %v1658 = vadd.f32 0.0, %v1657
        %1659 = vmatmul.bf16.gmra.mxu0 %v1593
        %v1660 = vpop.f32.mrf.mxu0
        %v1661 = vadd.f32 0.0, %v1660
        %v1662 = vpop.f32.mrf.mxu0
        %v1663 = vadd.f32 0.0, %v1662
        %1664 = vmatmul.bf16.gmra.mxu0 %v1596
        %v1665 = vpop.f32.mrf.mxu0
        %v1666 = vadd.f32 0.0, %v1665
        %v1667 = vpop.f32.mrf.mxu0
        %v1668 = vadd.f32 0.0, %v1667
        %1669 = vmatmul.bf16.gmra.mxu0 %v1599
        %v1670 = vpop.f32.mrf.mxu0
        %v1671 = vadd.f32 0.0, %v1670
        %v1672 = vpop.f32.mrf.mxu0
        %v1673 = vadd.f32 0.0, %v1672
        %1674 = vmatmul.bf16.gmra.mxu0 %v1602
        %v1675 = vpop.f32.mrf.mxu0
        %v1676 = vadd.f32 0.0, %v1675
        %v1677 = vpop.f32.mrf.mxu0
        %v1678 = vadd.f32 0.0, %v1677
        %1679 = vmatmul.bf16.gmra.mxu0 %v1605
        %v1680 = vpop.f32.mrf.mxu0
        %v1681 = vadd.f32 0.0, %v1680
        %v1682 = vpop.f32.mrf.mxu0
        %v1683 = vadd.f32 0.0, %v1682
        %1684 = vmatmul.bf16.gmra.mxu0 %v1608
        %v1685 = vpop.f32.mrf.mxu0
        %v1686 = vadd.f32 0.0, %v1685
        %v1687 = vpop.f32.mrf.mxu0
        %v1688 = vadd.f32 0.0, %v1687
        %1689 = vmatmul.bf16.gmra.mxu0 %v1611
        %v1690 = vpop.f32.mrf.mxu0
        %v1691 = vadd.f32 0.0, %v1690
        %v1692 = vpop.f32.mrf.mxu0
        %v1693 = vadd.f32 0.0, %v1692
        %1694 = vmatmul.bf16.gmra.mxu0 %v1614
        %v1695 = vpop.f32.mrf.mxu0
        %v1696 = vadd.f32 0.0, %v1695
        %v1697 = vpop.f32.mrf.mxu0
        %v1698 = vadd.f32 0.0, %v1697
        %1699 = vmatmul.bf16.gmra.mxu0 %v1617
        %v1700 = vpop.f32.mrf.mxu0
        %v1701 = vadd.f32 0.0, %v1700
        %v1702 = vpop.f32.mrf.mxu0
        %v1703 = vadd.f32 0.0, %v1702
        %1704 = vmatmul.bf16.gmra.mxu0 %v1620
        %v1705 = vpop.f32.mrf.mxu0
        %v1706 = vadd.f32 0.0, %v1705
        %v1707 = vpop.f32.mrf.mxu0
        %v1708 = vadd.f32 0.0, %v1707
        %1709 = vmatmul.bf16.gmra.mxu0 %v1623
        %v1710 = vpop.f32.mrf.mxu0
        %v1711 = vadd.f32 0.0, %v1710
        %v1712 = vpop.f32.mrf.mxu0
        %v1713 = vadd.f32 0.0, %v1712
        %1714 = vmatmul.bf16.gmra.mxu0 %v1626
        %v1715 = vpop.f32.mrf.mxu0
        %v1716 = vadd.f32 0.0, %v1715
        %v1717 = vpop.f32.mrf.mxu0
        %v1718 = vadd.f32 0.0, %v1717
        %1719 = vdwg.mxu0
        %v1720 = vadd.f32 %v1430, %v1641
        %v1721 = vadd.f32 %v1431, %v1643
        %v1722 = vadd.f32 %v1432, %v1646
        %v1723 = vadd.f32 %v1433, %v1648
        %v1724 = vadd.f32 %v1434, %v1651
        %v1725 = vadd.f32 %v1435, %v1653
        %v1726 = vadd.f32 %v1436, %v1656
        %v1727 = vadd.f32 %v1437, %v1658
        %v1728 = vadd.f32 %v1438, %v1661
        %v1729 = vadd.f32 %v1439, %v1663
        %v1730 = vadd.f32 %v1440, %v1666
        %v1731 = vadd.f32 %v1441, %v1668
        %v1732 = vadd.f32 %v1442, %v1671
        %v1733 = vadd.f32 %v1443, %v1673
        %v1734 = vadd.f32 %v1444, %v1676
        %v1735 = vadd.f32 %v1445, %v1678
        %v1736 = vadd.f32 %v1446, %v1681
        %v1737 = vadd.f32 %v1447, %v1683
        %v1738 = vadd.f32 %v1448, %v1686
        %v1739 = vadd.f32 %v1449, %v1688
        %v1740 = vadd.f32 %v1450, %v1691
        %v1741 = vadd.f32 %v1451, %v1693
        %v1742 = vadd.f32 %v1452, %v1696
        %v1743 = vadd.f32 %v1453, %v1698
        %v1744 = vadd.f32 %v1454, %v1701
        %v1745 = vadd.f32 %v1455, %v1703
        %v1746 = vadd.f32 %v1456, %v1706
        %v1747 = vadd.f32 %v1457, %v1708
        %v1748 = vadd.f32 %v1458, %v1711
        %v1749 = vadd.f32 %v1459, %v1713
        %v1750 = vadd.f32 %v1460, %v1716
        %v1751 = vadd.f32 %v1461, %v1718
        %v1752 = vld [vmem:[%s1465] sm:$0xf]
        %v1753 = vld [vmem:[%s1465 + $0x4] sm:$0xf]
        %v1754 = vld [vmem:[%s1465 + $0x8] sm:$0x1]
        %v1755 = vld [vmem:[%s1465 + $0xc] sm:$0xf]
        %v1756 = vld [vmem:[%s1465 + $0x10] sm:$0xf]
        %v1757 = vld [vmem:[%s1465 + $0x14] sm:$0x1]
        %v1758 = vld [vmem:[%s1465 + $0x18] sm:$0xf]
        %v1759 = vld [vmem:[%s1465 + $0x1c] sm:$0xf]
        %v1760 = vld [vmem:[%s1465 + $0x20] sm:$0x1]
        %v1761 = vld [vmem:[%s1465 + $0x24] sm:$0xf]
        %v1762 = vld [vmem:[%s1465 + $0x28] sm:$0xf]
        %v1763 = vld [vmem:[%s1465 + $0x2c] sm:$0x1]
        %v1764 = vld [vmem:[%s1465 + $0x30] sm:$0xf]
        %v1765 = vld [vmem:[%s1465 + $0x34] sm:$0xf]
        %v1766 = vld [vmem:[%s1465 + $0x38] sm:$0x1]
        %v1767 = vld [vmem:[%s1465 + $0x3c] sm:$0xf]
        %v1768 = vld [vmem:[%s1465 + $0x40] sm:$0xf]
        %v1769 = vld [vmem:[%s1465 + $0x44] sm:$0x1]
        %v1770 = vld [vmem:[%s1465 + $0x48] sm:$0xf]
        %v1771 = vld [vmem:[%s1465 + $0x4c] sm:$0xf]
        %v1772 = vld [vmem:[%s1465 + $0x50] sm:$0x1]
        %v1773 = vld [vmem:[%s1465 + $0x54] sm:$0xf]
        %v1774 = vld [vmem:[%s1465 + $0x58] sm:$0xf]
        %v1775 = vld [vmem:[%s1465 + $0x5c] sm:$0x1]
        %v1776 = vld [vmem:[%s1465 + $0x60] sm:$0xf]
        %v1777 = vld [vmem:[%s1465 + $0x64] sm:$0xf]
        %v1778 = vld [vmem:[%s1465 + $0x68] sm:$0x1]
        %v1779 = vld [vmem:[%s1465 + $0x6c] sm:$0xf]
        %v1780 = vld [vmem:[%s1465 + $0x70] sm:$0xf]
        %v1781 = vld [vmem:[%s1465 + $0x74] sm:$0x1]
        %v1782 = vld [vmem:[%s1465 + $0x78] sm:$0xf]
        %v1783 = vld [vmem:[%s1465 + $0x7c] sm:$0xf]
        %v1784 = vld [vmem:[%s1465 + $0x80] sm:$0x1]
        %v1785 = vld [vmem:[%s1465 + $0x84] sm:$0xf]
        %v1786 = vld [vmem:[%s1465 + $0x88] sm:$0xf]
        %v1787 = vld [vmem:[%s1465 + $0x8c] sm:$0x1]
        %v1788 = vld [vmem:[%s1465 + $0x90] sm:$0xf]
        %v1789 = vld [vmem:[%s1465 + $0x94] sm:$0xf]
        %v1790 = vld [vmem:[%s1465 + $0x98] sm:$0x1]
        %v1791 = vld [vmem:[%s1465 + $0x9c] sm:$0xf]
        %v1792 = vld [vmem:[%s1465 + $0xa0] sm:$0xf]
        %v1793 = vld [vmem:[%s1465 + $0xa4] sm:$0x1]
        %v1794 = vld [vmem:[%s1465 + $0xa8] sm:$0xf]
        %v1795 = vld [vmem:[%s1465 + $0xac] sm:$0xf]
        %v1796 = vld [vmem:[%s1465 + $0xb0] sm:$0x1]
        %v1797 = vld [vmem:[%s1465 + $0xb4] sm:$0xf]
        %v1798 = vld [vmem:[%s1465 + $0xb8] sm:$0xf]
        %v1799 = vld [vmem:[%s1465 + $0xbc] sm:$0x1]
        %v1801 = vshrl.u32 %v1752, 16
        %v1803 = vrot.slane %v1801, 4
        %v1804 = vshll.u32 %v1752, 16
        %v1806 = vrot.slane %v1804, 5
        %v1807 = vor.u32 %v1803, %v1806
        %v1808 = vrot.slane %v1807, 4
        %v1810 = vshll.u32 %v1753, 16
        %v1812 = vrot.slane %v1810, 5
        %v1813 = vsel %vm280, %v1808, %v1812
        %v1814 = vshrl.u32 %v1753, 16
        %v1816 = vrot.slane %v1814, 4
        %v1817 = vor.u32 %v1816, %v1812
        %v1818 = vrot.slane %v1817, 4
        %v1820 = vshll.u32 %v1754, 16
        %v1822 = vrot.slane %v1820, 5
        %v1823 = vsel %vm280, %v1818, %v1822
        %v1825 = vshrl.u32 %v1755, 16
        %v1827 = vrot.slane %v1825, 4
        %v1828 = vshll.u32 %v1755, 16
        %v1830 = vrot.slane %v1828, 5
        %v1831 = vor.u32 %v1827, %v1830
        %v1832 = vrot.slane %v1831, 4
        %v1834 = vshll.u32 %v1756, 16
        %v1836 = vrot.slane %v1834, 5
        %v1837 = vsel %vm280, %v1832, %v1836
        %v1838 = vshrl.u32 %v1756, 16
        %v1840 = vrot.slane %v1838, 4
        %v1841 = vor.u32 %v1840, %v1836
        %v1842 = vrot.slane %v1841, 4
        %v1844 = vshll.u32 %v1757, 16
        %v1846 = vrot.slane %v1844, 5
        %v1847 = vsel %vm280, %v1842, %v1846
        %v1849 = vshrl.u32 %v1758, 16
        %v1851 = vrot.slane %v1849, 4
        %v1852 = vshll.u32 %v1758, 16
        %v1854 = vrot.slane %v1852, 5
        %v1855 = vor.u32 %v1851, %v1854
        %v1856 = vrot.slane %v1855, 4
        %v1858 = vshll.u32 %v1759, 16
        %v1860 = vrot.slane %v1858, 5
        %v1861 = vsel %vm280, %v1856, %v1860
        %v1862 = vshrl.u32 %v1759, 16
        %v1864 = vrot.slane %v1862, 4
        %v1865 = vor.u32 %v1864, %v1860
        %v1866 = vrot.slane %v1865, 4
        %v1868 = vshll.u32 %v1760, 16
        %v1870 = vrot.slane %v1868, 5
        %v1871 = vsel %vm280, %v1866, %v1870
        %v1873 = vshrl.u32 %v1761, 16
        %v1875 = vrot.slane %v1873, 4
        %v1876 = vshll.u32 %v1761, 16
        %v1878 = vrot.slane %v1876, 5
        %v1879 = vor.u32 %v1875, %v1878
        %v1880 = vrot.slane %v1879, 4
        %v1882 = vshll.u32 %v1762, 16
        %v1884 = vrot.slane %v1882, 5
        %v1885 = vsel %vm280, %v1880, %v1884
        %v1886 = vshrl.u32 %v1762, 16
        %v1888 = vrot.slane %v1886, 4
        %v1889 = vor.u32 %v1888, %v1884
        %v1890 = vrot.slane %v1889, 4
        %v1892 = vshll.u32 %v1763, 16
        %v1894 = vrot.slane %v1892, 5
        %v1895 = vsel %vm280, %v1890, %v1894
        %v1897 = vshrl.u32 %v1764, 16
        %v1899 = vrot.slane %v1897, 4
        %v1900 = vshll.u32 %v1764, 16
        %v1902 = vrot.slane %v1900, 5
        %v1903 = vor.u32 %v1899, %v1902
        %v1904 = vrot.slane %v1903, 4
        %v1906 = vshll.u32 %v1765, 16
        %v1908 = vrot.slane %v1906, 5
        %v1909 = vsel %vm280, %v1904, %v1908
        %v1910 = vshrl.u32 %v1765, 16
        %v1912 = vrot.slane %v1910, 4
        %v1913 = vor.u32 %v1912, %v1908
        %v1914 = vrot.slane %v1913, 4
        %v1916 = vshll.u32 %v1766, 16
        %v1918 = vrot.slane %v1916, 5
        %v1919 = vsel %vm280, %v1914, %v1918
        %v1921 = vshrl.u32 %v1767, 16
        %v1923 = vrot.slane %v1921, 4
        %v1924 = vshll.u32 %v1767, 16
        %v1926 = vrot.slane %v1924, 5
        %v1927 = vor.u32 %v1923, %v1926
        %v1928 = vrot.slane %v1927, 4
        %v1930 = vshll.u32 %v1768, 16
        %v1932 = vrot.slane %v1930, 5
        %v1933 = vsel %vm280, %v1928, %v1932
        %v1934 = vshrl.u32 %v1768, 16
        %v1936 = vrot.slane %v1934, 4
        %v1937 = vor.u32 %v1936, %v1932
        %v1938 = vrot.slane %v1937, 4
        %v1940 = vshll.u32 %v1769, 16
        %v1942 = vrot.slane %v1940, 5
        %v1943 = vsel %vm280, %v1938, %v1942
        %v1945 = vshrl.u32 %v1770, 16
        %v1947 = vrot.slane %v1945, 4
        %v1948 = vshll.u32 %v1770, 16
        %v1950 = vrot.slane %v1948, 5
        %v1951 = vor.u32 %v1947, %v1950
        %v1952 = vrot.slane %v1951, 4
        %v1954 = vshll.u32 %v1771, 16
        %v1956 = vrot.slane %v1954, 5
        %v1957 = vsel %vm280, %v1952, %v1956
        %v1958 = vshrl.u32 %v1771, 16
        %v1960 = vrot.slane %v1958, 4
        %v1961 = vor.u32 %v1960, %v1956
        %v1962 = vrot.slane %v1961, 4
        %v1964 = vshll.u32 %v1772, 16
        %v1966 = vrot.slane %v1964, 5
        %v1967 = vsel %vm280, %v1962, %v1966
        %v1969 = vshrl.u32 %v1773, 16
        %v1971 = vrot.slane %v1969, 4
        %v1972 = vshll.u32 %v1773, 16
        %v1974 = vrot.slane %v1972, 5
        %v1975 = vor.u32 %v1971, %v1974
        %v1976 = vrot.slane %v1975, 4
        %v1978 = vshll.u32 %v1774, 16
        %v1980 = vrot.slane %v1978, 5
        %v1981 = vsel %vm280, %v1976, %v1980
        %v1982 = vshrl.u32 %v1774, 16
        %v1984 = vrot.slane %v1982, 4
        %v1985 = vor.u32 %v1984, %v1980
        %v1986 = vrot.slane %v1985, 4
        %v1988 = vshll.u32 %v1775, 16
        %v1990 = vrot.slane %v1988, 5
        %v1991 = vsel %vm280, %v1986, %v1990
        %v1993 = vshrl.u32 %v1776, 16
        %v1995 = vrot.slane %v1993, 4
        %v1996 = vshll.u32 %v1776, 16
        %v1998 = vrot.slane %v1996, 5
        %v1999 = vor.u32 %v1995, %v1998
        %v2000 = vrot.slane %v1999, 4
        %v2002 = vshll.u32 %v1777, 16
        %v2004 = vrot.slane %v2002, 5
        %v2005 = vsel %vm280, %v2000, %v2004
        %v2006 = vshrl.u32 %v1777, 16
        %v2008 = vrot.slane %v2006, 4
        %v2009 = vor.u32 %v2008, %v2004
        %v2010 = vrot.slane %v2009, 4
        %v2012 = vshll.u32 %v1778, 16
        %v2014 = vrot.slane %v2012, 5
        %v2015 = vsel %vm280, %v2010, %v2014
        %v2017 = vshrl.u32 %v1779, 16
        %v2019 = vrot.slane %v2017, 4
        %v2020 = vshll.u32 %v1779, 16
        %v2022 = vrot.slane %v2020, 5
        %v2023 = vor.u32 %v2019, %v2022
        %v2024 = vrot.slane %v2023, 4
        %v2026 = vshll.u32 %v1780, 16
        %v2028 = vrot.slane %v2026, 5
        %v2029 = vsel %vm280, %v2024, %v2028
        %v2030 = vshrl.u32 %v1780, 16
        %v2032 = vrot.slane %v2030, 4
        %v2033 = vor.u32 %v2032, %v2028
        %v2034 = vrot.slane %v2033, 4
        %v2036 = vshll.u32 %v1781, 16
        %v2038 = vrot.slane %v2036, 5
        %v2039 = vsel %vm280, %v2034, %v2038
        %v2041 = vshrl.u32 %v1782, 16
        %v2043 = vrot.slane %v2041, 4
        %v2044 = vshll.u32 %v1782, 16
        %v2046 = vrot.slane %v2044, 5
        %v2047 = vor.u32 %v2043, %v2046
        %v2048 = vrot.slane %v2047, 4
        %v2050 = vshll.u32 %v1783, 16
        %v2052 = vrot.slane %v2050, 5
        %v2053 = vsel %vm280, %v2048, %v2052
        %v2054 = vshrl.u32 %v1783, 16
        %v2056 = vrot.slane %v2054, 4
        %v2057 = vor.u32 %v2056, %v2052
        %v2058 = vrot.slane %v2057, 4
        %v2060 = vshll.u32 %v1784, 16
        %v2062 = vrot.slane %v2060, 5
        %v2063 = vsel %vm280, %v2058, %v2062
        %v2065 = vshrl.u32 %v1785, 16
        %v2067 = vrot.slane %v2065, 4
        %v2068 = vshll.u32 %v1785, 16
        %v2070 = vrot.slane %v2068, 5
        %v2071 = vor.u32 %v2067, %v2070
        %v2072 = vrot.slane %v2071, 4
        %v2074 = vshll.u32 %v1786, 16
        %v2076 = vrot.slane %v2074, 5
        %v2077 = vsel %vm280, %v2072, %v2076
        %v2078 = vshrl.u32 %v1786, 16
        %v2080 = vrot.slane %v2078, 4
        %v2081 = vor.u32 %v2080, %v2076
        %v2082 = vrot.slane %v2081, 4
        %v2084 = vshll.u32 %v1787, 16
        %v2086 = vrot.slane %v2084, 5
        %v2087 = vsel %vm280, %v2082, %v2086
        %v2089 = vshrl.u32 %v1788, 16
        %v2091 = vrot.slane %v2089, 4
        %v2092 = vshll.u32 %v1788, 16
        %v2094 = vrot.slane %v2092, 5
        %v2095 = vor.u32 %v2091, %v2094
        %v2096 = vrot.slane %v2095, 4
        %v2098 = vshll.u32 %v1789, 16
        %v2100 = vrot.slane %v2098, 5
        %v2101 = vsel %vm280, %v2096, %v2100
        %v2102 = vshrl.u32 %v1789, 16
        %v2104 = vrot.slane %v2102, 4
        %v2105 = vor.u32 %v2104, %v2100
        %v2106 = vrot.slane %v2105, 4
        %v2108 = vshll.u32 %v1790, 16
        %v2110 = vrot.slane %v2108, 5
        %v2111 = vsel %vm280, %v2106, %v2110
        %v2113 = vshrl.u32 %v1791, 16
        %v2115 = vrot.slane %v2113, 4
        %v2116 = vshll.u32 %v1791, 16
        %v2118 = vrot.slane %v2116, 5
        %v2119 = vor.u32 %v2115, %v2118
        %v2120 = vrot.slane %v2119, 4
        %v2122 = vshll.u32 %v1792, 16
        %v2124 = vrot.slane %v2122, 5
        %v2125 = vsel %vm280, %v2120, %v2124
        %v2126 = vshrl.u32 %v1792, 16
        %v2128 = vrot.slane %v2126, 4
        %v2129 = vor.u32 %v2128, %v2124
        %v2130 = vrot.slane %v2129, 4
        %v2132 = vshll.u32 %v1793, 16
        %v2134 = vrot.slane %v2132, 5
        %v2135 = vsel %vm280, %v2130, %v2134
        %v2137 = vshrl.u32 %v1794, 16
        %v2139 = vrot.slane %v2137, 4
        %v2140 = vshll.u32 %v1794, 16
        %v2142 = vrot.slane %v2140, 5
        %v2143 = vor.u32 %v2139, %v2142
        %v2144 = vrot.slane %v2143, 4
        %v2146 = vshll.u32 %v1795, 16
        %v2148 = vrot.slane %v2146, 5
        %v2149 = vsel %vm280, %v2144, %v2148
        %v2150 = vshrl.u32 %v1795, 16
        %v2152 = vrot.slane %v2150, 4
        %v2153 = vor.u32 %v2152, %v2148
        %v2154 = vrot.slane %v2153, 4
        %v2156 = vshll.u32 %v1796, 16
        %v2158 = vrot.slane %v2156, 5
        %v2159 = vsel %vm280, %v2154, %v2158
        %v2161 = vshrl.u32 %v1797, 16
        %v2163 = vrot.slane %v2161, 4
        %v2164 = vshll.u32 %v1797, 16
        %v2166 = vrot.slane %v2164, 5
        %v2167 = vor.u32 %v2163, %v2166
        %v2168 = vrot.slane %v2167, 4
        %v2170 = vshll.u32 %v1798, 16
        %v2172 = vrot.slane %v2170, 5
        %v2173 = vsel %vm280, %v2168, %v2172
        %v2174 = vshrl.u32 %v1798, 16
        %v2176 = vrot.slane %v2174, 4
        %v2177 = vor.u32 %v2176, %v2172
        %v2178 = vrot.slane %v2177, 4
        %v2180 = vshll.u32 %v1799, 16
        %v2182 = vrot.slane %v2180, 5
        %v2183 = vsel %vm280, %v2178, %v2182
        %s2184 = scalar_lea.vmem %s219, 8
        %v2185 = vld [vmem:[%s2184] sm:$0x3]
        %v2186 = vunpack.c.l.b16 %v1813
        %v2187 = vunpack.c.l.b16 %v1823
        %v2188 = vunpack.c.l.b16 %v1837
        %v2189 = vunpack.c.l.b16 %v1847
        %v2190 = vunpack.c.l.b16 %v1861
        %v2191 = vunpack.c.l.b16 %v1871
        %v2192 = vunpack.c.l.b16 %v1885
        %v2193 = vunpack.c.l.b16 %v1895
        %v2194 = vunpack.c.l.b16 %v1909
        %v2195 = vunpack.c.l.b16 %v1919
        %v2196 = vunpack.c.l.b16 %v1933
        %v2197 = vunpack.c.l.b16 %v1943
        %v2198 = vunpack.c.l.b16 %v1957
        %v2199 = vunpack.c.l.b16 %v1967
        %v2200 = vunpack.c.l.b16 %v1981
        %v2201 = vunpack.c.l.b16 %v1991
        %v2202 = vunpack.c.l.b16 %v2005
        %v2203 = vunpack.c.l.b16 %v2015
        %v2204 = vunpack.c.l.b16 %v2029
        %v2205 = vunpack.c.l.b16 %v2039
        %v2206 = vunpack.c.l.b16 %v2053
        %v2207 = vunpack.c.l.b16 %v2063
        %v2208 = vunpack.c.l.b16 %v2077
        %v2209 = vunpack.c.l.b16 %v2087
        %v2210 = vunpack.c.l.b16 %v2101
        %v2211 = vunpack.c.l.b16 %v2111
        %v2212 = vunpack.c.l.b16 %v2125
        %v2213 = vunpack.c.l.b16 %v2135
        %v2214 = vunpack.c.l.b16 %v2149
        %v2215 = vunpack.c.l.b16 %v2159
        %v2216 = vunpack.c.l.b16 %v2173
        %v2217 = vunpack.c.l.b16 %v2183
        %v2218 = vpack.c.b16 %v2187, %v2186
        %v2219 = vpack.c.b16 %v2189, %v2188
        %v2220 = vpack.c.b16 %v2191, %v2190
        %v2221 = vpack.c.b16 %v2193, %v2192
        %v2222 = vpack.c.b16 %v2195, %v2194
        %v2223 = vpack.c.b16 %v2197, %v2196
        %v2224 = vpack.c.b16 %v2199, %v2198
        %v2225 = vpack.c.b16 %v2201, %v2200
        %v2226 = vpack.c.b16 %v2203, %v2202
        %v2227 = vpack.c.b16 %v2205, %v2204
        %v2228 = vpack.c.b16 %v2207, %v2206
        %v2229 = vpack.c.b16 %v2209, %v2208
        %v2230 = vpack.c.b16 %v2211, %v2210
        %v2231 = vpack.c.b16 %v2213, %v2212
        %v2232 = vpack.c.b16 %v2215, %v2214
        %v2233 = vpack.c.b16 %v2217, %v2216
        %v2235 = vsel %vm715, %v2218, 0
        %v2238 = vsel %vm715, %v2219, 0
        %v2241 = vsel %vm715, %v2220, 0
        %v2244 = vsel %vm715, %v2221, 0
        %v2247 = vsel %vm715, %v2222, 0
        %v2250 = vsel %vm715, %v2223, 0
        %v2253 = vsel %vm715, %v2224, 0
        %v2256 = vsel %vm715, %v2225, 0
        %v2259 = vsel %vm715, %v2226, 0
        %v2262 = vsel %vm715, %v2227, 0
        %v2265 = vsel %vm715, %v2228, 0
        %v2268 = vsel %vm715, %v2229, 0
        %v2271 = vsel %vm715, %v2230, 0
        %v2274 = vsel %vm715, %v2231, 0
        %v2277 = vsel %vm715, %v2232, 0
        %v2280 = vsel %vm715, %v2233, 0
        %v2283 = vsel %vm764, %v2185, 0
        %2285 = vmatpush.bf16.msra.mxu0 0
        %2286 = vmatpush.bf16.msra.mxu0 0
        %2287 = vmatpush.bf16.msra.mxu0 0
        %2288 = vmatpush.bf16.msra.mxu0 0
        %2289 = vmatpush.bf16.msra.mxu0 0
        %2290 = vmatpush.bf16.msra.mxu0 0
        %2291 = vmatpush.bf16.msra.mxu0 0
        %2292 = vmatpush.bf16.msra.mxu0 %v2283
        %2293 = vmatmul.bf16.gmra.mxu0 %v2235
        %v2294 = vpop.f32.mrf.mxu0
        %v2295 = vadd.f32 0.0, %v2294
        %v2296 = vpop.f32.mrf.mxu0
        %v2297 = vadd.f32 0.0, %v2296
        %2298 = vmatmul.bf16.gmra.mxu0 %v2238
        %v2299 = vpop.f32.mrf.mxu0
        %v2300 = vadd.f32 0.0, %v2299
        %v2301 = vpop.f32.mrf.mxu0
        %v2302 = vadd.f32 0.0, %v2301
        %2303 = vmatmul.bf16.gmra.mxu0 %v2241
        %v2304 = vpop.f32.mrf.mxu0
        %v2305 = vadd.f32 0.0, %v2304
        %v2306 = vpop.f32.mrf.mxu0
        %v2307 = vadd.f32 0.0, %v2306
        %2308 = vmatmul.bf16.gmra.mxu0 %v2244
        %v2309 = vpop.f32.mrf.mxu0
        %v2310 = vadd.f32 0.0, %v2309
        %v2311 = vpop.f32.mrf.mxu0
        %v2312 = vadd.f32 0.0, %v2311
        %2313 = vmatmul.bf16.gmra.mxu0 %v2247
        %v2314 = vpop.f32.mrf.mxu0
        %v2315 = vadd.f32 0.0, %v2314
        %v2316 = vpop.f32.mrf.mxu0
        %v2317 = vadd.f32 0.0, %v2316
        %2318 = vmatmul.bf16.gmra.mxu0 %v2250
        %v2319 = vpop.f32.mrf.mxu0
        %v2320 = vadd.f32 0.0, %v2319
        %v2321 = vpop.f32.mrf.mxu0
        %v2322 = vadd.f32 0.0, %v2321
        %2323 = vmatmul.bf16.gmra.mxu0 %v2253
        %v2324 = vpop.f32.mrf.mxu0
        %v2325 = vadd.f32 0.0, %v2324
        %v2326 = vpop.f32.mrf.mxu0
        %v2327 = vadd.f32 0.0, %v2326
        %2328 = vmatmul.bf16.gmra.mxu0 %v2256
        %v2329 = vpop.f32.mrf.mxu0
        %v2330 = vadd.f32 0.0, %v2329
        %v2331 = vpop.f32.mrf.mxu0
        %v2332 = vadd.f32 0.0, %v2331
        %2333 = vmatmul.bf16.gmra.mxu0 %v2259
        %v2334 = vpop.f32.mrf.mxu0
        %v2335 = vadd.f32 0.0, %v2334
        %v2336 = vpop.f32.mrf.mxu0
        %v2337 = vadd.f32 0.0, %v2336
        %2338 = vmatmul.bf16.gmra.mxu0 %v2262
        %v2339 = vpop.f32.mrf.mxu0
        %v2340 = vadd.f32 0.0, %v2339
        %v2341 = vpop.f32.mrf.mxu0
        %v2342 = vadd.f32 0.0, %v2341
        %2343 = vmatmul.bf16.gmra.mxu0 %v2265
        %v2344 = vpop.f32.mrf.mxu0
        %v2345 = vadd.f32 0.0, %v2344
        %v2346 = vpop.f32.mrf.mxu0
        %v2347 = vadd.f32 0.0, %v2346
        %2348 = vmatmul.bf16.gmra.mxu0 %v2268
        %v2349 = vpop.f32.mrf.mxu0
        %v2350 = vadd.f32 0.0, %v2349
        %v2351 = vpop.f32.mrf.mxu0
        %v2352 = vadd.f32 0.0, %v2351
        %2353 = vmatmul.bf16.gmra.mxu0 %v2271
        %v2354 = vpop.f32.mrf.mxu0
        %v2355 = vadd.f32 0.0, %v2354
        %v2356 = vpop.f32.mrf.mxu0
        %v2357 = vadd.f32 0.0, %v2356
        %2358 = vmatmul.bf16.gmra.mxu0 %v2274
        %v2359 = vpop.f32.mrf.mxu0
        %v2360 = vadd.f32 0.0, %v2359
        %v2361 = vpop.f32.mrf.mxu0
        %v2362 = vadd.f32 0.0, %v2361
        %2363 = vmatmul.bf16.gmra.mxu0 %v2277
        %v2364 = vpop.f32.mrf.mxu0
        %v2365 = vadd.f32 0.0, %v2364
        %v2366 = vpop.f32.mrf.mxu0
        %v2367 = vadd.f32 0.0, %v2366
        %2368 = vmatmul.bf16.gmra.mxu0 %v2280
        %v2369 = vpop.f32.mrf.mxu0
        %v2370 = vadd.f32 0.0, %v2369
        %v2371 = vpop.f32.mrf.mxu0
        %v2372 = vadd.f32 0.0, %v2371
        %2373 = vdwg.mxu0
        %v2374 = vadd.f32 %v1720, %v2295
        %v2375 = vadd.f32 %v1721, %v2297
        %v2376 = vadd.f32 %v1722, %v2300
        %v2377 = vadd.f32 %v1723, %v2302
        %v2378 = vadd.f32 %v1724, %v2305
        %v2379 = vadd.f32 %v1725, %v2307
        %v2380 = vadd.f32 %v1726, %v2310
        %v2381 = vadd.f32 %v1727, %v2312
        %v2382 = vadd.f32 %v1728, %v2315
        %v2383 = vadd.f32 %v1729, %v2317
        %v2384 = vadd.f32 %v1730, %v2320
        %v2385 = vadd.f32 %v1731, %v2322
        %v2386 = vadd.f32 %v1732, %v2325
        %v2387 = vadd.f32 %v1733, %v2327
        %v2388 = vadd.f32 %v1734, %v2330
        %v2389 = vadd.f32 %v1735, %v2332
        %v2390 = vadd.f32 %v1736, %v2335
        %v2391 = vadd.f32 %v1737, %v2337
        %v2392 = vadd.f32 %v1738, %v2340
        %v2393 = vadd.f32 %v1739, %v2342
        %v2394 = vadd.f32 %v1740, %v2345
        %v2395 = vadd.f32 %v1741, %v2347
        %v2396 = vadd.f32 %v1742, %v2350
        %v2397 = vadd.f32 %v1743, %v2352
        %v2398 = vadd.f32 %v1744, %v2355
        %v2399 = vadd.f32 %v1745, %v2357
        %v2400 = vadd.f32 %v1746, %v2360
        %v2401 = vadd.f32 %v1747, %v2362
        %v2402 = vadd.f32 %v1748, %v2365
        %v2403 = vadd.f32 %v1749, %v2367
        %v2404 = vadd.f32 %v1750, %v2370
        %v2405 = vadd.f32 %v1751, %v2372
        %v2406 = vld [vmem:[%s1465] sm:$0xe]
        %v2407 = vld [vmem:[%s1465 + $0xc] sm:$0xe]
        %v2408 = vld [vmem:[%s1465 + $0x18] sm:$0xe]
        %v2409 = vld [vmem:[%s1465 + $0x24] sm:$0xe]
        %v2410 = vld [vmem:[%s1465 + $0x30] sm:$0xe]
        %v2411 = vld [vmem:[%s1465 + $0x3c] sm:$0xe]
        %v2412 = vld [vmem:[%s1465 + $0x48] sm:$0xe]
        %v2413 = vld [vmem:[%s1465 + $0x54] sm:$0xe]
        %v2414 = vld [vmem:[%s1465 + $0x60] sm:$0xe]
        %v2415 = vld [vmem:[%s1465 + $0x6c] sm:$0xe]
        %v2416 = vld [vmem:[%s1465 + $0x78] sm:$0xe]
        %v2417 = vld [vmem:[%s1465 + $0x84] sm:$0xe]
        %v2418 = vld [vmem:[%s1465 + $0x90] sm:$0xe]
        %v2419 = vld [vmem:[%s1465 + $0x9c] sm:$0xe]
        %v2420 = vld [vmem:[%s1465 + $0xa8] sm:$0xe]
        %v2421 = vld [vmem:[%s1465 + $0xb4] sm:$0xe]
        %v2470 = vrot.slane %v2406, 5
        %v2471 = vrot.slane %v2470, 4
        %v2472 = vrot.slane %v1753, 5
        %v2473 = vsel %vm1127, %v2471, %v2472
        %v2474 = vrot.slane %v2472, 4
        %v2475 = vrot.slane %v1754, 5
        %v2476 = vsel %vm1127, %v2474, %v2475
        %v2477 = vrot.slane %v2407, 5
        %v2478 = vrot.slane %v2477, 4
        %v2479 = vrot.slane %v1756, 5
        %v2480 = vsel %vm1127, %v2478, %v2479
        %v2481 = vrot.slane %v2479, 4
        %v2482 = vrot.slane %v1757, 5
        %v2483 = vsel %vm1127, %v2481, %v2482
        %v2484 = vrot.slane %v2408, 5
        %v2485 = vrot.slane %v2484, 4
        %v2486 = vrot.slane %v1759, 5
        %v2487 = vsel %vm1127, %v2485, %v2486
        %v2488 = vrot.slane %v2486, 4
        %v2489 = vrot.slane %v1760, 5
        %v2490 = vsel %vm1127, %v2488, %v2489
        %v2491 = vrot.slane %v2409, 5
        %v2492 = vrot.slane %v2491, 4
        %v2493 = vrot.slane %v1762, 5
        %v2494 = vsel %vm1127, %v2492, %v2493
        %v2495 = vrot.slane %v2493, 4
        %v2496 = vrot.slane %v1763, 5
        %v2497 = vsel %vm1127, %v2495, %v2496
        %v2498 = vrot.slane %v2410, 5
        %v2499 = vrot.slane %v2498, 4
        %v2500 = vrot.slane %v1765, 5
        %v2501 = vsel %vm1127, %v2499, %v2500
        %v2502 = vrot.slane %v2500, 4
        %v2503 = vrot.slane %v1766, 5
        %v2504 = vsel %vm1127, %v2502, %v2503
        %v2505 = vrot.slane %v2411, 5
        %v2506 = vrot.slane %v2505, 4
        %v2507 = vrot.slane %v1768, 5
        %v2508 = vsel %vm1127, %v2506, %v2507
        %v2509 = vrot.slane %v2507, 4
        %v2510 = vrot.slane %v1769, 5
        %v2511 = vsel %vm1127, %v2509, %v2510
        %v2512 = vrot.slane %v2412, 5
        %v2513 = vrot.slane %v2512, 4
        %v2514 = vrot.slane %v1771, 5
        %v2515 = vsel %vm1127, %v2513, %v2514
        %v2516 = vrot.slane %v2514, 4
        %v2517 = vrot.slane %v1772, 5
        %v2518 = vsel %vm1127, %v2516, %v2517
        %v2519 = vrot.slane %v2413, 5
        %v2520 = vrot.slane %v2519, 4
        %v2521 = vrot.slane %v1774, 5
        %v2522 = vsel %vm1127, %v2520, %v2521
        %v2523 = vrot.slane %v2521, 4
        %v2524 = vrot.slane %v1775, 5
        %v2525 = vsel %vm1127, %v2523, %v2524
        %v2526 = vrot.slane %v2414, 5
        %v2527 = vrot.slane %v2526, 4
        %v2528 = vrot.slane %v1777, 5
        %v2529 = vsel %vm1127, %v2527, %v2528
        %v2530 = vrot.slane %v2528, 4
        %v2531 = vrot.slane %v1778, 5
        %v2532 = vsel %vm1127, %v2530, %v2531
        %v2533 = vrot.slane %v2415, 5
        %v2534 = vrot.slane %v2533, 4
        %v2535 = vrot.slane %v1780, 5
        %v2536 = vsel %vm1127, %v2534, %v2535
        %v2537 = vrot.slane %v2535, 4
        %v2538 = vrot.slane %v1781, 5
        %v2539 = vsel %vm1127, %v2537, %v2538
        %v2540 = vrot.slane %v2416, 5
        %v2541 = vrot.slane %v2540, 4
        %v2542 = vrot.slane %v1783, 5
        %v2543 = vsel %vm1127, %v2541, %v2542
        %v2544 = vrot.slane %v2542, 4
        %v2545 = vrot.slane %v1784, 5
        %v2546 = vsel %vm1127, %v2544, %v2545
        %v2547 = vrot.slane %v2417, 5
        %v2548 = vrot.slane %v2547, 4
        %v2549 = vrot.slane %v1786, 5
        %v2550 = vsel %vm1127, %v2548, %v2549
        %v2551 = vrot.slane %v2549, 4
        %v2552 = vrot.slane %v1787, 5
        %v2553 = vsel %vm1127, %v2551, %v2552
        %v2554 = vrot.slane %v2418, 5
        %v2555 = vrot.slane %v2554, 4
        %v2556 = vrot.slane %v1789, 5
        %v2557 = vsel %vm1127, %v2555, %v2556
        %v2558 = vrot.slane %v2556, 4
        %v2559 = vrot.slane %v1790, 5
        %v2560 = vsel %vm1127, %v2558, %v2559
        %v2561 = vrot.slane %v2419, 5
        %v2562 = vrot.slane %v2561, 4
        %v2563 = vrot.slane %v1792, 5
        %v2564 = vsel %vm1127, %v2562, %v2563
        %v2565 = vrot.slane %v2563, 4
        %v2566 = vrot.slane %v1793, 5
        %v2567 = vsel %vm1127, %v2565, %v2566
        %v2568 = vrot.slane %v2420, 5
        %v2569 = vrot.slane %v2568, 4
        %v2570 = vrot.slane %v1795, 5
        %v2571 = vsel %vm1127, %v2569, %v2570
        %v2572 = vrot.slane %v2570, 4
        %v2573 = vrot.slane %v1796, 5
        %v2574 = vsel %vm1127, %v2572, %v2573
        %v2575 = vrot.slane %v2421, 5
        %v2576 = vrot.slane %v2575, 4
        %v2577 = vrot.slane %v1798, 5
        %v2578 = vsel %vm1127, %v2576, %v2577
        %v2579 = vrot.slane %v2577, 4
        %v2580 = vrot.slane %v1799, 5
        %v2581 = vsel %vm1127, %v2579, %v2580
        %s2582 = scalar_lea.vmem %s219, 10
        %v2583 = vld [vmem:[%s2582] sm:$0x3]
        %v2584 = vunpack.c.l.b16 %v2473
        %v2585 = vunpack.c.l.b16 %v2476
        %v2586 = vunpack.c.l.b16 %v2480
        %v2587 = vunpack.c.l.b16 %v2483
        %v2588 = vunpack.c.l.b16 %v2487
        %v2589 = vunpack.c.l.b16 %v2490
        %v2590 = vunpack.c.l.b16 %v2494
        %v2591 = vunpack.c.l.b16 %v2497
        %v2592 = vunpack.c.l.b16 %v2501
        %v2593 = vunpack.c.l.b16 %v2504
        %v2594 = vunpack.c.l.b16 %v2508
        %v2595 = vunpack.c.l.b16 %v2511
        %v2596 = vunpack.c.l.b16 %v2515
        %v2597 = vunpack.c.l.b16 %v2518
        %v2598 = vunpack.c.l.b16 %v2522
        %v2599 = vunpack.c.l.b16 %v2525
        %v2600 = vunpack.c.l.b16 %v2529
        %v2601 = vunpack.c.l.b16 %v2532
        %v2602 = vunpack.c.l.b16 %v2536
        %v2603 = vunpack.c.l.b16 %v2539
        %v2604 = vunpack.c.l.b16 %v2543
        %v2605 = vunpack.c.l.b16 %v2546
        %v2606 = vunpack.c.l.b16 %v2550
        %v2607 = vunpack.c.l.b16 %v2553
        %v2608 = vunpack.c.l.b16 %v2557
        %v2609 = vunpack.c.l.b16 %v2560
        %v2610 = vunpack.c.l.b16 %v2564
        %v2611 = vunpack.c.l.b16 %v2567
        %v2612 = vunpack.c.l.b16 %v2571
        %v2613 = vunpack.c.l.b16 %v2574
        %v2614 = vunpack.c.l.b16 %v2578
        %v2615 = vunpack.c.l.b16 %v2581
        %v2616 = vpack.c.b16 %v2585, %v2584
        %v2617 = vpack.c.b16 %v2587, %v2586
        %v2618 = vpack.c.b16 %v2589, %v2588
        %v2619 = vpack.c.b16 %v2591, %v2590
        %v2620 = vpack.c.b16 %v2593, %v2592
        %v2621 = vpack.c.b16 %v2595, %v2594
        %v2622 = vpack.c.b16 %v2597, %v2596
        %v2623 = vpack.c.b16 %v2599, %v2598
        %v2624 = vpack.c.b16 %v2601, %v2600
        %v2625 = vpack.c.b16 %v2603, %v2602
        %v2626 = vpack.c.b16 %v2605, %v2604
        %v2627 = vpack.c.b16 %v2607, %v2606
        %v2628 = vpack.c.b16 %v2609, %v2608
        %v2629 = vpack.c.b16 %v2611, %v2610
        %v2630 = vpack.c.b16 %v2613, %v2612
        %v2631 = vpack.c.b16 %v2615, %v2614
        %v2633 = vsel %vm715, %v2616, 0
        %v2636 = vsel %vm715, %v2617, 0
        %v2639 = vsel %vm715, %v2618, 0
        %v2642 = vsel %vm715, %v2619, 0
        %v2645 = vsel %vm715, %v2620, 0
        %v2648 = vsel %vm715, %v2621, 0
        %v2651 = vsel %vm715, %v2622, 0
        %v2654 = vsel %vm715, %v2623, 0
        %v2657 = vsel %vm715, %v2624, 0
        %v2660 = vsel %vm715, %v2625, 0
        %v2663 = vsel %vm715, %v2626, 0
        %v2666 = vsel %vm715, %v2627, 0
        %v2669 = vsel %vm715, %v2628, 0
        %v2672 = vsel %vm715, %v2629, 0
        %v2675 = vsel %vm715, %v2630, 0
        %v2678 = vsel %vm715, %v2631, 0
        %v2681 = vsel %vm764, %v2583, 0
        %2683 = vmatpush.bf16.msra.mxu0 0
        %2684 = vmatpush.bf16.msra.mxu0 0
        %2685 = vmatpush.bf16.msra.mxu0 0
        %2686 = vmatpush.bf16.msra.mxu0 0
        %2687 = vmatpush.bf16.msra.mxu0 0
        %2688 = vmatpush.bf16.msra.mxu0 0
        %2689 = vmatpush.bf16.msra.mxu0 0
        %2690 = vmatpush.bf16.msra.mxu0 %v2681
        %2691 = vmatmul.bf16.gmra.mxu0 %v2633
        %v2692 = vpop.f32.mrf.mxu0
        %v2693 = vadd.f32 0.0, %v2692
        %v2694 = vpop.f32.mrf.mxu0
        %v2695 = vadd.f32 0.0, %v2694
        %2696 = vmatmul.bf16.gmra.mxu0 %v2636
        %v2697 = vpop.f32.mrf.mxu0
        %v2698 = vadd.f32 0.0, %v2697
        %v2699 = vpop.f32.mrf.mxu0
        %v2700 = vadd.f32 0.0, %v2699
        %2701 = vmatmul.bf16.gmra.mxu0 %v2639
        %v2702 = vpop.f32.mrf.mxu0
        %v2703 = vadd.f32 0.0, %v2702
        %v2704 = vpop.f32.mrf.mxu0
        %v2705 = vadd.f32 0.0, %v2704
        %2706 = vmatmul.bf16.gmra.mxu0 %v2642
        %v2707 = vpop.f32.mrf.mxu0
        %v2708 = vadd.f32 0.0, %v2707
        %v2709 = vpop.f32.mrf.mxu0
        %v2710 = vadd.f32 0.0, %v2709
        %2711 = vmatmul.bf16.gmra.mxu0 %v2645
        %v2712 = vpop.f32.mrf.mxu0
        %v2713 = vadd.f32 0.0, %v2712
        %v2714 = vpop.f32.mrf.mxu0
        %v2715 = vadd.f32 0.0, %v2714
        %2716 = vmatmul.bf16.gmra.mxu0 %v2648
        %v2717 = vpop.f32.mrf.mxu0
        %v2718 = vadd.f32 0.0, %v2717
        %v2719 = vpop.f32.mrf.mxu0
        %v2720 = vadd.f32 0.0, %v2719
        %2721 = vmatmul.bf16.gmra.mxu0 %v2651
        %v2722 = vpop.f32.mrf.mxu0
        %v2723 = vadd.f32 0.0, %v2722
        %v2724 = vpop.f32.mrf.mxu0
        %v2725 = vadd.f32 0.0, %v2724
        %2726 = vmatmul.bf16.gmra.mxu0 %v2654
        %v2727 = vpop.f32.mrf.mxu0
        %v2728 = vadd.f32 0.0, %v2727
        %v2729 = vpop.f32.mrf.mxu0
        %v2730 = vadd.f32 0.0, %v2729
        %2731 = vmatmul.bf16.gmra.mxu0 %v2657
        %v2732 = vpop.f32.mrf.mxu0
        %v2733 = vadd.f32 0.0, %v2732
        %v2734 = vpop.f32.mrf.mxu0
        %v2735 = vadd.f32 0.0, %v2734
        %2736 = vmatmul.bf16.gmra.mxu0 %v2660
        %v2737 = vpop.f32.mrf.mxu0
        %v2738 = vadd.f32 0.0, %v2737
        %v2739 = vpop.f32.mrf.mxu0
        %v2740 = vadd.f32 0.0, %v2739
        %2741 = vmatmul.bf16.gmra.mxu0 %v2663
        %v2742 = vpop.f32.mrf.mxu0
        %v2743 = vadd.f32 0.0, %v2742
        %v2744 = vpop.f32.mrf.mxu0
        %v2745 = vadd.f32 0.0, %v2744
        %2746 = vmatmul.bf16.gmra.mxu0 %v2666
        %v2747 = vpop.f32.mrf.mxu0
        %v2748 = vadd.f32 0.0, %v2747
        %v2749 = vpop.f32.mrf.mxu0
        %v2750 = vadd.f32 0.0, %v2749
        %2751 = vmatmul.bf16.gmra.mxu0 %v2669
        %v2752 = vpop.f32.mrf.mxu0
        %v2753 = vadd.f32 0.0, %v2752
        %v2754 = vpop.f32.mrf.mxu0
        %v2755 = vadd.f32 0.0, %v2754
        %2756 = vmatmul.bf16.gmra.mxu0 %v2672
        %v2757 = vpop.f32.mrf.mxu0
        %v2758 = vadd.f32 0.0, %v2757
        %v2759 = vpop.f32.mrf.mxu0
        %v2760 = vadd.f32 0.0, %v2759
        %2761 = vmatmul.bf16.gmra.mxu0 %v2675
        %v2762 = vpop.f32.mrf.mxu0
        %v2763 = vadd.f32 0.0, %v2762
        %v2764 = vpop.f32.mrf.mxu0
        %v2765 = vadd.f32 0.0, %v2764
        %2766 = vmatmul.bf16.gmra.mxu0 %v2678
        %v2767 = vpop.f32.mrf.mxu0
        %v2768 = vadd.f32 0.0, %v2767
        %v2769 = vpop.f32.mrf.mxu0
        %v2770 = vadd.f32 0.0, %v2769
        %2771 = vdwg.mxu0
        %v2772 = vadd.f32 %v2374, %v2693
        %v2773 = vadd.f32 %v2375, %v2695
        %v2774 = vadd.f32 %v2376, %v2698
        %v2775 = vadd.f32 %v2377, %v2700
        %v2776 = vadd.f32 %v2378, %v2703
        %v2777 = vadd.f32 %v2379, %v2705
        %v2778 = vadd.f32 %v2380, %v2708
        %v2779 = vadd.f32 %v2381, %v2710
        %v2780 = vadd.f32 %v2382, %v2713
        %v2781 = vadd.f32 %v2383, %v2715
        %v2782 = vadd.f32 %v2384, %v2718
        %v2783 = vadd.f32 %v2385, %v2720
        %v2784 = vadd.f32 %v2386, %v2723
        %v2785 = vadd.f32 %v2387, %v2725
        %v2786 = vadd.f32 %v2388, %v2728
        %v2787 = vadd.f32 %v2389, %v2730
        %v2788 = vadd.f32 %v2390, %v2733
        %v2789 = vadd.f32 %v2391, %v2735
        %v2790 = vadd.f32 %v2392, %v2738
        %v2791 = vadd.f32 %v2393, %v2740
        %v2792 = vadd.f32 %v2394, %v2743
        %v2793 = vadd.f32 %v2395, %v2745
        %v2794 = vadd.f32 %v2396, %v2748
        %v2795 = vadd.f32 %v2397, %v2750
        %v2796 = vadd.f32 %v2398, %v2753
        %v2797 = vadd.f32 %v2399, %v2755
        %v2798 = vadd.f32 %v2400, %v2758
        %v2799 = vadd.f32 %v2401, %v2760
        %v2800 = vadd.f32 %v2402, %v2763
        %v2801 = vadd.f32 %v2403, %v2765
        %v2802 = vadd.f32 %v2404, %v2768
        %v2803 = vadd.f32 %v2405, %v2770
        %s2804 = sadd.s32 %s225, 2
        %s2805 = smul.u32 %s2804, 3
        %s2806 = smul.addr %s2805, 4
        %s2807 = scalar_lea.vmem %s215, %s2806
        %v2808 = vld [vmem:[%s2807] sm:$0xf]
        %v2809 = vld [vmem:[%s2807 + $0x4] sm:$0xf]
        %v2810 = vld [vmem:[%s2807 + $0xc] sm:$0xf]
        %v2811 = vld [vmem:[%s2807 + $0x10] sm:$0xf]
        %v2812 = vld [vmem:[%s2807 + $0x18] sm:$0xf]
        %v2813 = vld [vmem:[%s2807 + $0x1c] sm:$0xf]
        %v2814 = vld [vmem:[%s2807 + $0x24] sm:$0xf]
        %v2815 = vld [vmem:[%s2807 + $0x28] sm:$0xf]
        %v2816 = vld [vmem:[%s2807 + $0x30] sm:$0xf]
        %v2817 = vld [vmem:[%s2807 + $0x34] sm:$0xf]
        %v2818 = vld [vmem:[%s2807 + $0x3c] sm:$0xf]
        %v2819 = vld [vmem:[%s2807 + $0x40] sm:$0xf]
        %v2820 = vld [vmem:[%s2807 + $0x48] sm:$0xf]
        %v2821 = vld [vmem:[%s2807 + $0x4c] sm:$0xf]
        %v2822 = vld [vmem:[%s2807 + $0x54] sm:$0xf]
        %v2823 = vld [vmem:[%s2807 + $0x58] sm:$0xf]
        %v2824 = vld [vmem:[%s2807 + $0x60] sm:$0xf]
        %v2825 = vld [vmem:[%s2807 + $0x64] sm:$0xf]
        %v2826 = vld [vmem:[%s2807 + $0x6c] sm:$0xf]
        %v2827 = vld [vmem:[%s2807 + $0x70] sm:$0xf]
        %v2828 = vld [vmem:[%s2807 + $0x78] sm:$0xf]
        %v2829 = vld [vmem:[%s2807 + $0x7c] sm:$0xf]
        %v2830 = vld [vmem:[%s2807 + $0x84] sm:$0xf]
        %v2831 = vld [vmem:[%s2807 + $0x88] sm:$0xf]
        %v2832 = vld [vmem:[%s2807 + $0x90] sm:$0xf]
        %v2833 = vld [vmem:[%s2807 + $0x94] sm:$0xf]
        %v2834 = vld [vmem:[%s2807 + $0x9c] sm:$0xf]
        %v2835 = vld [vmem:[%s2807 + $0xa0] sm:$0xf]
        %v2836 = vld [vmem:[%s2807 + $0xa8] sm:$0xf]
        %v2837 = vld [vmem:[%s2807 + $0xac] sm:$0xf]
        %v2838 = vld [vmem:[%s2807 + $0xb4] sm:$0xf]
        %v2839 = vld [vmem:[%s2807 + $0xb8] sm:$0xf]
        %s2840 = scalar_lea.vmem %s219, 12
        %v2841 = vld [vmem:[%s2840] sm:$0x3]
        %v2874 = vunpack.c.l.b16 %v2808
        %v2875 = vunpack.c.l.b16 %v2809
        %v2876 = vunpack.c.l.b16 %v2810
        %v2877 = vunpack.c.l.b16 %v2811
        %v2878 = vunpack.c.l.b16 %v2812
        %v2879 = vunpack.c.l.b16 %v2813
        %v2880 = vunpack.c.l.b16 %v2814
        %v2881 = vunpack.c.l.b16 %v2815
        %v2882 = vunpack.c.l.b16 %v2816
        %v2883 = vunpack.c.l.b16 %v2817
        %v2884 = vunpack.c.l.b16 %v2818
        %v2885 = vunpack.c.l.b16 %v2819
        %v2886 = vunpack.c.l.b16 %v2820
        %v2887 = vunpack.c.l.b16 %v2821
        %v2888 = vunpack.c.l.b16 %v2822
        %v2889 = vunpack.c.l.b16 %v2823
        %v2890 = vunpack.c.l.b16 %v2824
        %v2891 = vunpack.c.l.b16 %v2825
        %v2892 = vunpack.c.l.b16 %v2826
        %v2893 = vunpack.c.l.b16 %v2827
        %v2894 = vunpack.c.l.b16 %v2828
        %v2895 = vunpack.c.l.b16 %v2829
        %v2896 = vunpack.c.l.b16 %v2830
        %v2897 = vunpack.c.l.b16 %v2831
        %v2898 = vunpack.c.l.b16 %v2832
        %v2899 = vunpack.c.l.b16 %v2833
        %v2900 = vunpack.c.l.b16 %v2834
        %v2901 = vunpack.c.l.b16 %v2835
        %v2902 = vunpack.c.l.b16 %v2836
        %v2903 = vunpack.c.l.b16 %v2837
        %v2904 = vunpack.c.l.b16 %v2838
        %v2905 = vunpack.c.l.b16 %v2839
        %v2906 = vpack.c.b16 %v2875, %v2874
        %v2907 = vpack.c.b16 %v2877, %v2876
        %v2908 = vpack.c.b16 %v2879, %v2878
        %v2909 = vpack.c.b16 %v2881, %v2880
        %v2910 = vpack.c.b16 %v2883, %v2882
        %v2911 = vpack.c.b16 %v2885, %v2884
        %v2912 = vpack.c.b16 %v2887, %v2886
        %v2913 = vpack.c.b16 %v2889, %v2888
        %v2914 = vpack.c.b16 %v2891, %v2890
        %v2915 = vpack.c.b16 %v2893, %v2892
        %v2916 = vpack.c.b16 %v2895, %v2894
        %v2917 = vpack.c.b16 %v2897, %v2896
        %v2918 = vpack.c.b16 %v2899, %v2898
        %v2919 = vpack.c.b16 %v2901, %v2900
        %v2920 = vpack.c.b16 %v2903, %v2902
        %v2921 = vpack.c.b16 %v2905, %v2904
        %v2923 = vsel %vm715, %v2906, 0
        %v2926 = vsel %vm715, %v2907, 0
        %v2929 = vsel %vm715, %v2908, 0
        %v2932 = vsel %vm715, %v2909, 0
        %v2935 = vsel %vm715, %v2910, 0
        %v2938 = vsel %vm715, %v2911, 0
        %v2941 = vsel %vm715, %v2912, 0
        %v2944 = vsel %vm715, %v2913, 0
        %v2947 = vsel %vm715, %v2914, 0
        %v2950 = vsel %vm715, %v2915, 0
        %v2953 = vsel %vm715, %v2916, 0
        %v2956 = vsel %vm715, %v2917, 0
        %v2959 = vsel %vm715, %v2918, 0
        %v2962 = vsel %vm715, %v2919, 0
        %v2965 = vsel %vm715, %v2920, 0
        %v2968 = vsel %vm715, %v2921, 0
        %v2971 = vsel %vm764, %v2841, 0
        %2973 = vmatpush.bf16.msra.mxu0 0
        %2974 = vmatpush.bf16.msra.mxu0 0
        %2975 = vmatpush.bf16.msra.mxu0 0
        %2976 = vmatpush.bf16.msra.mxu0 0
        %2977 = vmatpush.bf16.msra.mxu0 0
        %2978 = vmatpush.bf16.msra.mxu0 0
        %2979 = vmatpush.bf16.msra.mxu0 0
        %2980 = vmatpush.bf16.msra.mxu0 %v2971
        %2981 = vmatmul.bf16.gmra.mxu0 %v2923
        %v2982 = vpop.f32.mrf.mxu0
        %v2983 = vadd.f32 0.0, %v2982
        %v2984 = vpop.f32.mrf.mxu0
        %v2985 = vadd.f32 0.0, %v2984
        %2986 = vmatmul.bf16.gmra.mxu0 %v2926
        %v2987 = vpop.f32.mrf.mxu0
        %v2988 = vadd.f32 0.0, %v2987
        %v2989 = vpop.f32.mrf.mxu0
        %v2990 = vadd.f32 0.0, %v2989
        %2991 = vmatmul.bf16.gmra.mxu0 %v2929
        %v2992 = vpop.f32.mrf.mxu0
        %v2993 = vadd.f32 0.0, %v2992
        %v2994 = vpop.f32.mrf.mxu0
        %v2995 = vadd.f32 0.0, %v2994
        %2996 = vmatmul.bf16.gmra.mxu0 %v2932
        %v2997 = vpop.f32.mrf.mxu0
        %v2998 = vadd.f32 0.0, %v2997
        %v2999 = vpop.f32.mrf.mxu0
        %v3000 = vadd.f32 0.0, %v2999
        %3001 = vmatmul.bf16.gmra.mxu0 %v2935
        %v3002 = vpop.f32.mrf.mxu0
        %v3003 = vadd.f32 0.0, %v3002
        %v3004 = vpop.f32.mrf.mxu0
        %v3005 = vadd.f32 0.0, %v3004
        %3006 = vmatmul.bf16.gmra.mxu0 %v2938
        %v3007 = vpop.f32.mrf.mxu0
        %v3008 = vadd.f32 0.0, %v3007
        %v3009 = vpop.f32.mrf.mxu0
        %v3010 = vadd.f32 0.0, %v3009
        %3011 = vmatmul.bf16.gmra.mxu0 %v2941
        %v3012 = vpop.f32.mrf.mxu0
        %v3013 = vadd.f32 0.0, %v3012
        %v3014 = vpop.f32.mrf.mxu0
        %v3015 = vadd.f32 0.0, %v3014
        %3016 = vmatmul.bf16.gmra.mxu0 %v2944
        %v3017 = vpop.f32.mrf.mxu0
        %v3018 = vadd.f32 0.0, %v3017
        %v3019 = vpop.f32.mrf.mxu0
        %v3020 = vadd.f32 0.0, %v3019
        %3021 = vmatmul.bf16.gmra.mxu0 %v2947
        %v3022 = vpop.f32.mrf.mxu0
        %v3023 = vadd.f32 0.0, %v3022
        %v3024 = vpop.f32.mrf.mxu0
        %v3025 = vadd.f32 0.0, %v3024
        %3026 = vmatmul.bf16.gmra.mxu0 %v2950
        %v3027 = vpop.f32.mrf.mxu0
        %v3028 = vadd.f32 0.0, %v3027
        %v3029 = vpop.f32.mrf.mxu0
        %v3030 = vadd.f32 0.0, %v3029
        %3031 = vmatmul.bf16.gmra.mxu0 %v2953
        %v3032 = vpop.f32.mrf.mxu0
        %v3033 = vadd.f32 0.0, %v3032
        %v3034 = vpop.f32.mrf.mxu0
        %v3035 = vadd.f32 0.0, %v3034
        %3036 = vmatmul.bf16.gmra.mxu0 %v2956
        %v3037 = vpop.f32.mrf.mxu0
        %v3038 = vadd.f32 0.0, %v3037
        %v3039 = vpop.f32.mrf.mxu0
        %v3040 = vadd.f32 0.0, %v3039
        %3041 = vmatmul.bf16.gmra.mxu0 %v2959
        %v3042 = vpop.f32.mrf.mxu0
        %v3043 = vadd.f32 0.0, %v3042
        %v3044 = vpop.f32.mrf.mxu0
        %v3045 = vadd.f32 0.0, %v3044
        %3046 = vmatmul.bf16.gmra.mxu0 %v2962
        %v3047 = vpop.f32.mrf.mxu0
        %v3048 = vadd.f32 0.0, %v3047
        %v3049 = vpop.f32.mrf.mxu0
        %v3050 = vadd.f32 0.0, %v3049
        %3051 = vmatmul.bf16.gmra.mxu0 %v2965
        %v3052 = vpop.f32.mrf.mxu0
        %v3053 = vadd.f32 0.0, %v3052
        %v3054 = vpop.f32.mrf.mxu0
        %v3055 = vadd.f32 0.0, %v3054
        %3056 = vmatmul.bf16.gmra.mxu0 %v2968
        %v3057 = vpop.f32.mrf.mxu0
        %v3058 = vadd.f32 0.0, %v3057
        %v3059 = vpop.f32.mrf.mxu0
        %v3060 = vadd.f32 0.0, %v3059
        %3061 = vdwg.mxu0
        %v3062 = vadd.f32 %v2772, %v2983
        %v3063 = vadd.f32 %v2773, %v2985
        %v3064 = vadd.f32 %v2774, %v2988
        %v3065 = vadd.f32 %v2775, %v2990
        %v3066 = vadd.f32 %v2776, %v2993
        %v3067 = vadd.f32 %v2777, %v2995
        %v3068 = vadd.f32 %v2778, %v2998
        %v3069 = vadd.f32 %v2779, %v3000
        %v3070 = vadd.f32 %v2780, %v3003
        %v3071 = vadd.f32 %v2781, %v3005
        %v3072 = vadd.f32 %v2782, %v3008
        %v3073 = vadd.f32 %v2783, %v3010
        %v3074 = vadd.f32 %v2784, %v3013
        %v3075 = vadd.f32 %v2785, %v3015
        %v3076 = vadd.f32 %v2786, %v3018
        %v3077 = vadd.f32 %v2787, %v3020
        %v3078 = vadd.f32 %v2788, %v3023
        %v3079 = vadd.f32 %v2789, %v3025
        %v3080 = vadd.f32 %v2790, %v3028
        %v3081 = vadd.f32 %v2791, %v3030
        %v3082 = vadd.f32 %v2792, %v3033
        %v3083 = vadd.f32 %v2793, %v3035
        %v3084 = vadd.f32 %v2794, %v3038
        %v3085 = vadd.f32 %v2795, %v3040
        %v3086 = vadd.f32 %v2796, %v3043
        %v3087 = vadd.f32 %v2797, %v3045
        %v3088 = vadd.f32 %v2798, %v3048
        %v3089 = vadd.f32 %v2799, %v3050
        %v3090 = vadd.f32 %v2800, %v3053
        %v3091 = vadd.f32 %v2801, %v3055
        %v3092 = vadd.f32 %v2802, %v3058
        %v3093 = vadd.f32 %v2803, %v3060
        %v3094 = vld [vmem:[%s2807] sm:$0xf]
        %v3095 = vld [vmem:[%s2807 + $0x4] sm:$0xf]
        %v3096 = vld [vmem:[%s2807 + $0x8] sm:$0x1]
        %v3097 = vld [vmem:[%s2807 + $0xc] sm:$0xf]
        %v3098 = vld [vmem:[%s2807 + $0x10] sm:$0xf]
        %v3099 = vld [vmem:[%s2807 + $0x14] sm:$0x1]
        %v3100 = vld [vmem:[%s2807 + $0x18] sm:$0xf]
        %v3101 = vld [vmem:[%s2807 + $0x1c] sm:$0xf]
        %v3102 = vld [vmem:[%s2807 + $0x20] sm:$0x1]
        %v3103 = vld [vmem:[%s2807 + $0x24] sm:$0xf]
        %v3104 = vld [vmem:[%s2807 + $0x28] sm:$0xf]
        %v3105 = vld [vmem:[%s2807 + $0x2c] sm:$0x1]
        %v3106 = vld [vmem:[%s2807 + $0x30] sm:$0xf]
        %v3107 = vld [vmem:[%s2807 + $0x34] sm:$0xf]
        %v3108 = vld [vmem:[%s2807 + $0x38] sm:$0x1]
        %v3109 = vld [vmem:[%s2807 + $0x3c] sm:$0xf]
        %v3110 = vld [vmem:[%s2807 + $0x40] sm:$0xf]
        %v3111 = vld [vmem:[%s2807 + $0x44] sm:$0x1]
        %v3112 = vld [vmem:[%s2807 + $0x48] sm:$0xf]
        %v3113 = vld [vmem:[%s2807 + $0x4c] sm:$0xf]
        %v3114 = vld [vmem:[%s2807 + $0x50] sm:$0x1]
        %v3115 = vld [vmem:[%s2807 + $0x54] sm:$0xf]
        %v3116 = vld [vmem:[%s2807 + $0x58] sm:$0xf]
        %v3117 = vld [vmem:[%s2807 + $0x5c] sm:$0x1]
        %v3118 = vld [vmem:[%s2807 + $0x60] sm:$0xf]
        %v3119 = vld [vmem:[%s2807 + $0x64] sm:$0xf]
        %v3120 = vld [vmem:[%s2807 + $0x68] sm:$0x1]
        %v3121 = vld [vmem:[%s2807 + $0x6c] sm:$0xf]
        %v3122 = vld [vmem:[%s2807 + $0x70] sm:$0xf]
        %v3123 = vld [vmem:[%s2807 + $0x74] sm:$0x1]
        %v3124 = vld [vmem:[%s2807 + $0x78] sm:$0xf]
        %v3125 = vld [vmem:[%s2807 + $0x7c] sm:$0xf]
        %v3126 = vld [vmem:[%s2807 + $0x80] sm:$0x1]
        %v3127 = vld [vmem:[%s2807 + $0x84] sm:$0xf]
        %v3128 = vld [vmem:[%s2807 + $0x88] sm:$0xf]
        %v3129 = vld [vmem:[%s2807 + $0x8c] sm:$0x1]
        %v3130 = vld [vmem:[%s2807 + $0x90] sm:$0xf]
        %v3131 = vld [vmem:[%s2807 + $0x94] sm:$0xf]
        %v3132 = vld [vmem:[%s2807 + $0x98] sm:$0x1]
        %v3133 = vld [vmem:[%s2807 + $0x9c] sm:$0xf]
        %v3134 = vld [vmem:[%s2807 + $0xa0] sm:$0xf]
        %v3135 = vld [vmem:[%s2807 + $0xa4] sm:$0x1]
        %v3136 = vld [vmem:[%s2807 + $0xa8] sm:$0xf]
        %v3137 = vld [vmem:[%s2807 + $0xac] sm:$0xf]
        %v3138 = vld [vmem:[%s2807 + $0xb0] sm:$0x1]
        %v3139 = vld [vmem:[%s2807 + $0xb4] sm:$0xf]
        %v3140 = vld [vmem:[%s2807 + $0xb8] sm:$0xf]
        %v3141 = vld [vmem:[%s2807 + $0xbc] sm:$0x1]
        %v3143 = vshrl.u32 %v3094, 16
        %v3145 = vrot.slane %v3143, 4
        %v3146 = vshll.u32 %v3094, 16
        %v3148 = vrot.slane %v3146, 5
        %v3149 = vor.u32 %v3145, %v3148
        %v3150 = vrot.slane %v3149, 4
        %v3152 = vshll.u32 %v3095, 16
        %v3154 = vrot.slane %v3152, 5
        %v3155 = vsel %vm280, %v3150, %v3154
        %v3156 = vshrl.u32 %v3095, 16
        %v3158 = vrot.slane %v3156, 4
        %v3159 = vor.u32 %v3158, %v3154
        %v3160 = vrot.slane %v3159, 4
        %v3162 = vshll.u32 %v3096, 16
        %v3164 = vrot.slane %v3162, 5
        %v3165 = vsel %vm280, %v3160, %v3164
        %v3167 = vshrl.u32 %v3097, 16
        %v3169 = vrot.slane %v3167, 4
        %v3170 = vshll.u32 %v3097, 16
        %v3172 = vrot.slane %v3170, 5
        %v3173 = vor.u32 %v3169, %v3172
        %v3174 = vrot.slane %v3173, 4
        %v3176 = vshll.u32 %v3098, 16
        %v3178 = vrot.slane %v3176, 5
        %v3179 = vsel %vm280, %v3174, %v3178
        %v3180 = vshrl.u32 %v3098, 16
        %v3182 = vrot.slane %v3180, 4
        %v3183 = vor.u32 %v3182, %v3178
        %v3184 = vrot.slane %v3183, 4
        %v3186 = vshll.u32 %v3099, 16
        %v3188 = vrot.slane %v3186, 5
        %v3189 = vsel %vm280, %v3184, %v3188
        %v3191 = vshrl.u32 %v3100, 16
        %v3193 = vrot.slane %v3191, 4
        %v3194 = vshll.u32 %v3100, 16
        %v3196 = vrot.slane %v3194, 5
        %v3197 = vor.u32 %v3193, %v3196
        %v3198 = vrot.slane %v3197, 4
        %v3200 = vshll.u32 %v3101, 16
        %v3202 = vrot.slane %v3200, 5
        %v3203 = vsel %vm280, %v3198, %v3202
        %v3204 = vshrl.u32 %v3101, 16
        %v3206 = vrot.slane %v3204, 4
        %v3207 = vor.u32 %v3206, %v3202
        %v3208 = vrot.slane %v3207, 4
        %v3210 = vshll.u32 %v3102, 16
        %v3212 = vrot.slane %v3210, 5
        %v3213 = vsel %vm280, %v3208, %v3212
        %v3215 = vshrl.u32 %v3103, 16
        %v3217 = vrot.slane %v3215, 4
        %v3218 = vshll.u32 %v3103, 16
        %v3220 = vrot.slane %v3218, 5
        %v3221 = vor.u32 %v3217, %v3220
        %v3222 = vrot.slane %v3221, 4
        %v3224 = vshll.u32 %v3104, 16
        %v3226 = vrot.slane %v3224, 5
        %v3227 = vsel %vm280, %v3222, %v3226
        %v3228 = vshrl.u32 %v3104, 16
        %v3230 = vrot.slane %v3228, 4
        %v3231 = vor.u32 %v3230, %v3226
        %v3232 = vrot.slane %v3231, 4
        %v3234 = vshll.u32 %v3105, 16
        %v3236 = vrot.slane %v3234, 5
        %v3237 = vsel %vm280, %v3232, %v3236
        %v3239 = vshrl.u32 %v3106, 16
        %v3241 = vrot.slane %v3239, 4
        %v3242 = vshll.u32 %v3106, 16
        %v3244 = vrot.slane %v3242, 5
        %v3245 = vor.u32 %v3241, %v3244
        %v3246 = vrot.slane %v3245, 4
        %v3248 = vshll.u32 %v3107, 16
        %v3250 = vrot.slane %v3248, 5
        %v3251 = vsel %vm280, %v3246, %v3250
        %v3252 = vshrl.u32 %v3107, 16
        %v3254 = vrot.slane %v3252, 4
        %v3255 = vor.u32 %v3254, %v3250
        %v3256 = vrot.slane %v3255, 4
        %v3258 = vshll.u32 %v3108, 16
        %v3260 = vrot.slane %v3258, 5
        %v3261 = vsel %vm280, %v3256, %v3260
        %v3263 = vshrl.u32 %v3109, 16
        %v3265 = vrot.slane %v3263, 4
        %v3266 = vshll.u32 %v3109, 16
        %v3268 = vrot.slane %v3266, 5
        %v3269 = vor.u32 %v3265, %v3268
        %v3270 = vrot.slane %v3269, 4
        %v3272 = vshll.u32 %v3110, 16
        %v3274 = vrot.slane %v3272, 5
        %v3275 = vsel %vm280, %v3270, %v3274
        %v3276 = vshrl.u32 %v3110, 16
        %v3278 = vrot.slane %v3276, 4
        %v3279 = vor.u32 %v3278, %v3274
        %v3280 = vrot.slane %v3279, 4
        %v3282 = vshll.u32 %v3111, 16
        %v3284 = vrot.slane %v3282, 5
        %v3285 = vsel %vm280, %v3280, %v3284
        %v3287 = vshrl.u32 %v3112, 16
        %v3289 = vrot.slane %v3287, 4
        %v3290 = vshll.u32 %v3112, 16
        %v3292 = vrot.slane %v3290, 5
        %v3293 = vor.u32 %v3289, %v3292
        %v3294 = vrot.slane %v3293, 4
        %v3296 = vshll.u32 %v3113, 16
        %v3298 = vrot.slane %v3296, 5
        %v3299 = vsel %vm280, %v3294, %v3298
        %v3300 = vshrl.u32 %v3113, 16
        %v3302 = vrot.slane %v3300, 4
        %v3303 = vor.u32 %v3302, %v3298
        %v3304 = vrot.slane %v3303, 4
        %v3306 = vshll.u32 %v3114, 16
        %v3308 = vrot.slane %v3306, 5
        %v3309 = vsel %vm280, %v3304, %v3308
        %v3311 = vshrl.u32 %v3115, 16
        %v3313 = vrot.slane %v3311, 4
        %v3314 = vshll.u32 %v3115, 16
        %v3316 = vrot.slane %v3314, 5
        %v3317 = vor.u32 %v3313, %v3316
        %v3318 = vrot.slane %v3317, 4
        %v3320 = vshll.u32 %v3116, 16
        %v3322 = vrot.slane %v3320, 5
        %v3323 = vsel %vm280, %v3318, %v3322
        %v3324 = vshrl.u32 %v3116, 16
        %v3326 = vrot.slane %v3324, 4
        %v3327 = vor.u32 %v3326, %v3322
        %v3328 = vrot.slane %v3327, 4
        %v3330 = vshll.u32 %v3117, 16
        %v3332 = vrot.slane %v3330, 5
        %v3333 = vsel %vm280, %v3328, %v3332
        %v3335 = vshrl.u32 %v3118, 16
        %v3337 = vrot.slane %v3335, 4
        %v3338 = vshll.u32 %v3118, 16
        %v3340 = vrot.slane %v3338, 5
        %v3341 = vor.u32 %v3337, %v3340
        %v3342 = vrot.slane %v3341, 4
        %v3344 = vshll.u32 %v3119, 16
        %v3346 = vrot.slane %v3344, 5
        %v3347 = vsel %vm280, %v3342, %v3346
        %v3348 = vshrl.u32 %v3119, 16
        %v3350 = vrot.slane %v3348, 4
        %v3351 = vor.u32 %v3350, %v3346
        %v3352 = vrot.slane %v3351, 4
        %v3354 = vshll.u32 %v3120, 16
        %v3356 = vrot.slane %v3354, 5
        %v3357 = vsel %vm280, %v3352, %v3356
        %v3359 = vshrl.u32 %v3121, 16
        %v3361 = vrot.slane %v3359, 4
        %v3362 = vshll.u32 %v3121, 16
        %v3364 = vrot.slane %v3362, 5
        %v3365 = vor.u32 %v3361, %v3364
        %v3366 = vrot.slane %v3365, 4
        %v3368 = vshll.u32 %v3122, 16
        %v3370 = vrot.slane %v3368, 5
        %v3371 = vsel %vm280, %v3366, %v3370
        %v3372 = vshrl.u32 %v3122, 16
        %v3374 = vrot.slane %v3372, 4
        %v3375 = vor.u32 %v3374, %v3370
        %v3376 = vrot.slane %v3375, 4
        %v3378 = vshll.u32 %v3123, 16
        %v3380 = vrot.slane %v3378, 5
        %v3381 = vsel %vm280, %v3376, %v3380
        %v3383 = vshrl.u32 %v3124, 16
        %v3385 = vrot.slane %v3383, 4
        %v3386 = vshll.u32 %v3124, 16
        %v3388 = vrot.slane %v3386, 5
        %v3389 = vor.u32 %v3385, %v3388
        %v3390 = vrot.slane %v3389, 4
        %v3392 = vshll.u32 %v3125, 16
        %v3394 = vrot.slane %v3392, 5
        %v3395 = vsel %vm280, %v3390, %v3394
        %v3396 = vshrl.u32 %v3125, 16
        %v3398 = vrot.slane %v3396, 4
        %v3399 = vor.u32 %v3398, %v3394
        %v3400 = vrot.slane %v3399, 4
        %v3402 = vshll.u32 %v3126, 16
        %v3404 = vrot.slane %v3402, 5
        %v3405 = vsel %vm280, %v3400, %v3404
        %v3407 = vshrl.u32 %v3127, 16
        %v3409 = vrot.slane %v3407, 4
        %v3410 = vshll.u32 %v3127, 16
        %v3412 = vrot.slane %v3410, 5
        %v3413 = vor.u32 %v3409, %v3412
        %v3414 = vrot.slane %v3413, 4
        %v3416 = vshll.u32 %v3128, 16
        %v3418 = vrot.slane %v3416, 5
        %v3419 = vsel %vm280, %v3414, %v3418
        %v3420 = vshrl.u32 %v3128, 16
        %v3422 = vrot.slane %v3420, 4
        %v3423 = vor.u32 %v3422, %v3418
        %v3424 = vrot.slane %v3423, 4
        %v3426 = vshll.u32 %v3129, 16
        %v3428 = vrot.slane %v3426, 5
        %v3429 = vsel %vm280, %v3424, %v3428
        %v3431 = vshrl.u32 %v3130, 16
        %v3433 = vrot.slane %v3431, 4
        %v3434 = vshll.u32 %v3130, 16
        %v3436 = vrot.slane %v3434, 5
        %v3437 = vor.u32 %v3433, %v3436
        %v3438 = vrot.slane %v3437, 4
        %v3440 = vshll.u32 %v3131, 16
        %v3442 = vrot.slane %v3440, 5
        %v3443 = vsel %vm280, %v3438, %v3442
        %v3444 = vshrl.u32 %v3131, 16
        %v3446 = vrot.slane %v3444, 4
        %v3447 = vor.u32 %v3446, %v3442
        %v3448 = vrot.slane %v3447, 4
        %v3450 = vshll.u32 %v3132, 16
        %v3452 = vrot.slane %v3450, 5
        %v3453 = vsel %vm280, %v3448, %v3452
        %v3455 = vshrl.u32 %v3133, 16
        %v3457 = vrot.slane %v3455, 4
        %v3458 = vshll.u32 %v3133, 16
        %v3460 = vrot.slane %v3458, 5
        %v3461 = vor.u32 %v3457, %v3460
        %v3462 = vrot.slane %v3461, 4
        %v3464 = vshll.u32 %v3134, 16
        %v3466 = vrot.slane %v3464, 5
        %v3467 = vsel %vm280, %v3462, %v3466
        %v3468 = vshrl.u32 %v3134, 16
        %v3470 = vrot.slane %v3468, 4
        %v3471 = vor.u32 %v3470, %v3466
        %v3472 = vrot.slane %v3471, 4
        %v3474 = vshll.u32 %v3135, 16
        %v3476 = vrot.slane %v3474, 5
        %v3477 = vsel %vm280, %v3472, %v3476
        %v3479 = vshrl.u32 %v3136, 16
        %v3481 = vrot.slane %v3479, 4
        %v3482 = vshll.u32 %v3136, 16
        %v3484 = vrot.slane %v3482, 5
        %v3485 = vor.u32 %v3481, %v3484
        %v3486 = vrot.slane %v3485, 4
        %v3488 = vshll.u32 %v3137, 16
        %v3490 = vrot.slane %v3488, 5
        %v3491 = vsel %vm280, %v3486, %v3490
        %v3492 = vshrl.u32 %v3137, 16
        %v3494 = vrot.slane %v3492, 4
        %v3495 = vor.u32 %v3494, %v3490
        %v3496 = vrot.slane %v3495, 4
        %v3498 = vshll.u32 %v3138, 16
        %v3500 = vrot.slane %v3498, 5
        %v3501 = vsel %vm280, %v3496, %v3500
        %v3503 = vshrl.u32 %v3139, 16
        %v3505 = vrot.slane %v3503, 4
        %v3506 = vshll.u32 %v3139, 16
        %v3508 = vrot.slane %v3506, 5
        %v3509 = vor.u32 %v3505, %v3508
        %v3510 = vrot.slane %v3509, 4
        %v3512 = vshll.u32 %v3140, 16
        %v3514 = vrot.slane %v3512, 5
        %v3515 = vsel %vm280, %v3510, %v3514
        %v3516 = vshrl.u32 %v3140, 16
        %v3518 = vrot.slane %v3516, 4
        %v3519 = vor.u32 %v3518, %v3514
        %v3520 = vrot.slane %v3519, 4
        %v3522 = vshll.u32 %v3141, 16
        %v3524 = vrot.slane %v3522, 5
        %v3525 = vsel %vm280, %v3520, %v3524
        %s3526 = scalar_lea.vmem %s219, 14
        %v3527 = vld [vmem:[%s3526] sm:$0x3]
        %v3528 = vunpack.c.l.b16 %v3155
        %v3529 = vunpack.c.l.b16 %v3165
        %v3530 = vunpack.c.l.b16 %v3179
        %v3531 = vunpack.c.l.b16 %v3189
        %v3532 = vunpack.c.l.b16 %v3203
        %v3533 = vunpack.c.l.b16 %v3213
        %v3534 = vunpack.c.l.b16 %v3227
        %v3535 = vunpack.c.l.b16 %v3237
        %v3536 = vunpack.c.l.b16 %v3251
        %v3537 = vunpack.c.l.b16 %v3261
        %v3538 = vunpack.c.l.b16 %v3275
        %v3539 = vunpack.c.l.b16 %v3285
        %v3540 = vunpack.c.l.b16 %v3299
        %v3541 = vunpack.c.l.b16 %v3309
        %v3542 = vunpack.c.l.b16 %v3323
        %v3543 = vunpack.c.l.b16 %v3333
        %v3544 = vunpack.c.l.b16 %v3347
        %v3545 = vunpack.c.l.b16 %v3357
        %v3546 = vunpack.c.l.b16 %v3371
        %v3547 = vunpack.c.l.b16 %v3381
        %v3548 = vunpack.c.l.b16 %v3395
        %v3549 = vunpack.c.l.b16 %v3405
        %v3550 = vunpack.c.l.b16 %v3419
        %v3551 = vunpack.c.l.b16 %v3429
        %v3552 = vunpack.c.l.b16 %v3443
        %v3553 = vunpack.c.l.b16 %v3453
        %v3554 = vunpack.c.l.b16 %v3467
        %v3555 = vunpack.c.l.b16 %v3477
        %v3556 = vunpack.c.l.b16 %v3491
        %v3557 = vunpack.c.l.b16 %v3501
        %v3558 = vunpack.c.l.b16 %v3515
        %v3559 = vunpack.c.l.b16 %v3525
        %v3560 = vpack.c.b16 %v3529, %v3528
        %v3561 = vpack.c.b16 %v3531, %v3530
        %v3562 = vpack.c.b16 %v3533, %v3532
        %v3563 = vpack.c.b16 %v3535, %v3534
        %v3564 = vpack.c.b16 %v3537, %v3536
        %v3565 = vpack.c.b16 %v3539, %v3538
        %v3566 = vpack.c.b16 %v3541, %v3540
        %v3567 = vpack.c.b16 %v3543, %v3542
        %v3568 = vpack.c.b16 %v3545, %v3544
        %v3569 = vpack.c.b16 %v3547, %v3546
        %v3570 = vpack.c.b16 %v3549, %v3548
        %v3571 = vpack.c.b16 %v3551, %v3550
        %v3572 = vpack.c.b16 %v3553, %v3552
        %v3573 = vpack.c.b16 %v3555, %v3554
        %v3574 = vpack.c.b16 %v3557, %v3556
        %v3575 = vpack.c.b16 %v3559, %v3558
        %v3577 = vsel %vm715, %v3560, 0
        %v3580 = vsel %vm715, %v3561, 0
        %v3583 = vsel %vm715, %v3562, 0
        %v3586 = vsel %vm715, %v3563, 0
        %v3589 = vsel %vm715, %v3564, 0
        %v3592 = vsel %vm715, %v3565, 0
        %v3595 = vsel %vm715, %v3566, 0
        %v3598 = vsel %vm715, %v3567, 0
        %v3601 = vsel %vm715, %v3568, 0
        %v3604 = vsel %vm715, %v3569, 0
        %v3607 = vsel %vm715, %v3570, 0
        %v3610 = vsel %vm715, %v3571, 0
        %v3613 = vsel %vm715, %v3572, 0
        %v3616 = vsel %vm715, %v3573, 0
        %v3619 = vsel %vm715, %v3574, 0
        %v3622 = vsel %vm715, %v3575, 0
        %v3625 = vsel %vm764, %v3527, 0
        %3627 = vmatpush.bf16.msra.mxu0 0
        %3628 = vmatpush.bf16.msra.mxu0 0
        %3629 = vmatpush.bf16.msra.mxu0 0
        %3630 = vmatpush.bf16.msra.mxu0 0
        %3631 = vmatpush.bf16.msra.mxu0 0
        %3632 = vmatpush.bf16.msra.mxu0 0
        %3633 = vmatpush.bf16.msra.mxu0 0
        %3634 = vmatpush.bf16.msra.mxu0 %v3625
        %3635 = vmatmul.bf16.gmra.mxu0 %v3577
        %v3636 = vpop.f32.mrf.mxu0
        %v3637 = vadd.f32 0.0, %v3636
        %v3638 = vpop.f32.mrf.mxu0
        %v3639 = vadd.f32 0.0, %v3638
        %3640 = vmatmul.bf16.gmra.mxu0 %v3580
        %v3641 = vpop.f32.mrf.mxu0
        %v3642 = vadd.f32 0.0, %v3641
        %v3643 = vpop.f32.mrf.mxu0
        %v3644 = vadd.f32 0.0, %v3643
        %3645 = vmatmul.bf16.gmra.mxu0 %v3583
        %v3646 = vpop.f32.mrf.mxu0
        %v3647 = vadd.f32 0.0, %v3646
        %v3648 = vpop.f32.mrf.mxu0
        %v3649 = vadd.f32 0.0, %v3648
        %3650 = vmatmul.bf16.gmra.mxu0 %v3586
        %v3651 = vpop.f32.mrf.mxu0
        %v3652 = vadd.f32 0.0, %v3651
        %v3653 = vpop.f32.mrf.mxu0
        %v3654 = vadd.f32 0.0, %v3653
        %3655 = vmatmul.bf16.gmra.mxu0 %v3589
        %v3656 = vpop.f32.mrf.mxu0
        %v3657 = vadd.f32 0.0, %v3656
        %v3658 = vpop.f32.mrf.mxu0
        %v3659 = vadd.f32 0.0, %v3658
        %3660 = vmatmul.bf16.gmra.mxu0 %v3592
        %v3661 = vpop.f32.mrf.mxu0
        %v3662 = vadd.f32 0.0, %v3661
        %v3663 = vpop.f32.mrf.mxu0
        %v3664 = vadd.f32 0.0, %v3663
        %3665 = vmatmul.bf16.gmra.mxu0 %v3595
        %v3666 = vpop.f32.mrf.mxu0
        %v3667 = vadd.f32 0.0, %v3666
        %v3668 = vpop.f32.mrf.mxu0
        %v3669 = vadd.f32 0.0, %v3668
        %3670 = vmatmul.bf16.gmra.mxu0 %v3598
        %v3671 = vpop.f32.mrf.mxu0
        %v3672 = vadd.f32 0.0, %v3671
        %v3673 = vpop.f32.mrf.mxu0
        %v3674 = vadd.f32 0.0, %v3673
        %3675 = vmatmul.bf16.gmra.mxu0 %v3601
        %v3676 = vpop.f32.mrf.mxu0
        %v3677 = vadd.f32 0.0, %v3676
        %v3678 = vpop.f32.mrf.mxu0
        %v3679 = vadd.f32 0.0, %v3678
        %3680 = vmatmul.bf16.gmra.mxu0 %v3604
        %v3681 = vpop.f32.mrf.mxu0
        %v3682 = vadd.f32 0.0, %v3681
        %v3683 = vpop.f32.mrf.mxu0
        %v3684 = vadd.f32 0.0, %v3683
        %3685 = vmatmul.bf16.gmra.mxu0 %v3607
        %v3686 = vpop.f32.mrf.mxu0
        %v3687 = vadd.f32 0.0, %v3686
        %v3688 = vpop.f32.mrf.mxu0
        %v3689 = vadd.f32 0.0, %v3688
        %3690 = vmatmul.bf16.gmra.mxu0 %v3610
        %v3691 = vpop.f32.mrf.mxu0
        %v3692 = vadd.f32 0.0, %v3691
        %v3693 = vpop.f32.mrf.mxu0
        %v3694 = vadd.f32 0.0, %v3693
        %3695 = vmatmul.bf16.gmra.mxu0 %v3613
        %v3696 = vpop.f32.mrf.mxu0
        %v3697 = vadd.f32 0.0, %v3696
        %v3698 = vpop.f32.mrf.mxu0
        %v3699 = vadd.f32 0.0, %v3698
        %3700 = vmatmul.bf16.gmra.mxu0 %v3616
        %v3701 = vpop.f32.mrf.mxu0
        %v3702 = vadd.f32 0.0, %v3701
        %v3703 = vpop.f32.mrf.mxu0
        %v3704 = vadd.f32 0.0, %v3703
        %3705 = vmatmul.bf16.gmra.mxu0 %v3619
        %v3706 = vpop.f32.mrf.mxu0
        %v3707 = vadd.f32 0.0, %v3706
        %v3708 = vpop.f32.mrf.mxu0
        %v3709 = vadd.f32 0.0, %v3708
        %3710 = vmatmul.bf16.gmra.mxu0 %v3622
        %v3711 = vpop.f32.mrf.mxu0
        %v3712 = vadd.f32 0.0, %v3711
        %v3713 = vpop.f32.mrf.mxu0
        %v3714 = vadd.f32 0.0, %v3713
        %3715 = vdwg.mxu0
        %v3716 = vadd.f32 %v3062, %v3637
        %v3717 = vadd.f32 %v3063, %v3639
        %v3718 = vadd.f32 %v3064, %v3642
        %v3719 = vadd.f32 %v3065, %v3644
        %v3720 = vadd.f32 %v3066, %v3647
        %v3721 = vadd.f32 %v3067, %v3649
        %v3722 = vadd.f32 %v3068, %v3652
        %v3723 = vadd.f32 %v3069, %v3654
        %v3724 = vadd.f32 %v3070, %v3657
        %v3725 = vadd.f32 %v3071, %v3659
        %v3726 = vadd.f32 %v3072, %v3662
        %v3727 = vadd.f32 %v3073, %v3664
        %v3728 = vadd.f32 %v3074, %v3667
        %v3729 = vadd.f32 %v3075, %v3669
        %v3730 = vadd.f32 %v3076, %v3672
        %v3731 = vadd.f32 %v3077, %v3674
        %v3732 = vadd.f32 %v3078, %v3677
        %v3733 = vadd.f32 %v3079, %v3679
        %v3734 = vadd.f32 %v3080, %v3682
        %v3735 = vadd.f32 %v3081, %v3684
        %v3736 = vadd.f32 %v3082, %v3687
        %v3737 = vadd.f32 %v3083, %v3689
        %v3738 = vadd.f32 %v3084, %v3692
        %v3739 = vadd.f32 %v3085, %v3694
        %v3740 = vadd.f32 %v3086, %v3697
        %v3741 = vadd.f32 %v3087, %v3699
        %v3742 = vadd.f32 %v3088, %v3702
        %v3743 = vadd.f32 %v3089, %v3704
        %v3744 = vadd.f32 %v3090, %v3707
        %v3745 = vadd.f32 %v3091, %v3709
        %v3746 = vadd.f32 %v3092, %v3712
        %v3747 = vadd.f32 %v3093, %v3714
        %v3748 = vld [vmem:[%s2807] sm:$0xe]
        %v3749 = vld [vmem:[%s2807 + $0xc] sm:$0xe]
        %v3750 = vld [vmem:[%s2807 + $0x18] sm:$0xe]
        %v3751 = vld [vmem:[%s2807 + $0x24] sm:$0xe]
        %v3752 = vld [vmem:[%s2807 + $0x30] sm:$0xe]
        %v3753 = vld [vmem:[%s2807 + $0x3c] sm:$0xe]
        %v3754 = vld [vmem:[%s2807 + $0x48] sm:$0xe]
        %v3755 = vld [vmem:[%s2807 + $0x54] sm:$0xe]
        %v3756 = vld [vmem:[%s2807 + $0x60] sm:$0xe]
        %v3757 = vld [vmem:[%s2807 + $0x6c] sm:$0xe]
        %v3758 = vld [vmem:[%s2807 + $0x78] sm:$0xe]
        %v3759 = vld [vmem:[%s2807 + $0x84] sm:$0xe]
        %v3760 = vld [vmem:[%s2807 + $0x90] sm:$0xe]
        %v3761 = vld [vmem:[%s2807 + $0x9c] sm:$0xe]
        %v3762 = vld [vmem:[%s2807 + $0xa8] sm:$0xe]
        %v3763 = vld [vmem:[%s2807 + $0xb4] sm:$0xe]
        %v3812 = vrot.slane %v3748, 5
        %v3813 = vrot.slane %v3812, 4
        %v3814 = vrot.slane %v3095, 5
        %v3815 = vsel %vm1127, %v3813, %v3814
        %v3816 = vrot.slane %v3814, 4
        %v3817 = vrot.slane %v3096, 5
        %v3818 = vsel %vm1127, %v3816, %v3817
        %v3819 = vrot.slane %v3749, 5
        %v3820 = vrot.slane %v3819, 4
        %v3821 = vrot.slane %v3098, 5
        %v3822 = vsel %vm1127, %v3820, %v3821
        %v3823 = vrot.slane %v3821, 4
        %v3824 = vrot.slane %v3099, 5
        %v3825 = vsel %vm1127, %v3823, %v3824
        %v3826 = vrot.slane %v3750, 5
        %v3827 = vrot.slane %v3826, 4
        %v3828 = vrot.slane %v3101, 5
        %v3829 = vsel %vm1127, %v3827, %v3828
        %v3830 = vrot.slane %v3828, 4
        %v3831 = vrot.slane %v3102, 5
        %v3832 = vsel %vm1127, %v3830, %v3831
        %v3833 = vrot.slane %v3751, 5
        %v3834 = vrot.slane %v3833, 4
        %v3835 = vrot.slane %v3104, 5
        %v3836 = vsel %vm1127, %v3834, %v3835
        %v3837 = vrot.slane %v3835, 4
        %v3838 = vrot.slane %v3105, 5
        %v3839 = vsel %vm1127, %v3837, %v3838
        %v3840 = vrot.slane %v3752, 5
        %v3841 = vrot.slane %v3840, 4
        %v3842 = vrot.slane %v3107, 5
        %v3843 = vsel %vm1127, %v3841, %v3842
        %v3844 = vrot.slane %v3842, 4
        %v3845 = vrot.slane %v3108, 5
        %v3846 = vsel %vm1127, %v3844, %v3845
        %v3847 = vrot.slane %v3753, 5
        %v3848 = vrot.slane %v3847, 4
        %v3849 = vrot.slane %v3110, 5
        %v3850 = vsel %vm1127, %v3848, %v3849
        %v3851 = vrot.slane %v3849, 4
        %v3852 = vrot.slane %v3111, 5
        %v3853 = vsel %vm1127, %v3851, %v3852
        %v3854 = vrot.slane %v3754, 5
        %v3855 = vrot.slane %v3854, 4
        %v3856 = vrot.slane %v3113, 5
        %v3857 = vsel %vm1127, %v3855, %v3856
        %v3858 = vrot.slane %v3856, 4
        %v3859 = vrot.slane %v3114, 5
        %v3860 = vsel %vm1127, %v3858, %v3859
        %v3861 = vrot.slane %v3755, 5
        %v3862 = vrot.slane %v3861, 4
        %v3863 = vrot.slane %v3116, 5
        %v3864 = vsel %vm1127, %v3862, %v3863
        %v3865 = vrot.slane %v3863, 4
        %v3866 = vrot.slane %v3117, 5
        %v3867 = vsel %vm1127, %v3865, %v3866
        %v3868 = vrot.slane %v3756, 5
        %v3869 = vrot.slane %v3868, 4
        %v3870 = vrot.slane %v3119, 5
        %v3871 = vsel %vm1127, %v3869, %v3870
        %v3872 = vrot.slane %v3870, 4
        %v3873 = vrot.slane %v3120, 5
        %v3874 = vsel %vm1127, %v3872, %v3873
        %v3875 = vrot.slane %v3757, 5
        %v3876 = vrot.slane %v3875, 4
        %v3877 = vrot.slane %v3122, 5
        %v3878 = vsel %vm1127, %v3876, %v3877
        %v3879 = vrot.slane %v3877, 4
        %v3880 = vrot.slane %v3123, 5
        %v3881 = vsel %vm1127, %v3879, %v3880
        %v3882 = vrot.slane %v3758, 5
        %v3883 = vrot.slane %v3882, 4
        %v3884 = vrot.slane %v3125, 5
        %v3885 = vsel %vm1127, %v3883, %v3884
        %v3886 = vrot.slane %v3884, 4
        %v3887 = vrot.slane %v3126, 5
        %v3888 = vsel %vm1127, %v3886, %v3887
        %v3889 = vrot.slane %v3759, 5
        %v3890 = vrot.slane %v3889, 4
        %v3891 = vrot.slane %v3128, 5
        %v3892 = vsel %vm1127, %v3890, %v3891
        %v3893 = vrot.slane %v3891, 4
        %v3894 = vrot.slane %v3129, 5
        %v3895 = vsel %vm1127, %v3893, %v3894
        %v3896 = vrot.slane %v3760, 5
        %v3897 = vrot.slane %v3896, 4
        %v3898 = vrot.slane %v3131, 5
        %v3899 = vsel %vm1127, %v3897, %v3898
        %v3900 = vrot.slane %v3898, 4
        %v3901 = vrot.slane %v3132, 5
        %v3902 = vsel %vm1127, %v3900, %v3901
        %v3903 = vrot.slane %v3761, 5
        %v3904 = vrot.slane %v3903, 4
        %v3905 = vrot.slane %v3134, 5
        %v3906 = vsel %vm1127, %v3904, %v3905
        %v3907 = vrot.slane %v3905, 4
        %v3908 = vrot.slane %v3135, 5
        %v3909 = vsel %vm1127, %v3907, %v3908
        %v3910 = vrot.slane %v3762, 5
        %v3911 = vrot.slane %v3910, 4
        %v3912 = vrot.slane %v3137, 5
        %v3913 = vsel %vm1127, %v3911, %v3912
        %v3914 = vrot.slane %v3912, 4
        %v3915 = vrot.slane %v3138, 5
        %v3916 = vsel %vm1127, %v3914, %v3915
        %v3917 = vrot.slane %v3763, 5
        %v3918 = vrot.slane %v3917, 4
        %v3919 = vrot.slane %v3140, 5
        %v3920 = vsel %vm1127, %v3918, %v3919
        %v3921 = vrot.slane %v3919, 4
        %v3922 = vrot.slane %v3141, 5
        %v3923 = vsel %vm1127, %v3921, %v3922
        %s3924 = scalar_lea.vmem %s219, 16
        %v3925 = vld [vmem:[%s3924] sm:$0x3]
        %v3926 = vunpack.c.l.b16 %v3815
        %v3927 = vunpack.c.l.b16 %v3818
        %v3928 = vunpack.c.l.b16 %v3822
        %v3929 = vunpack.c.l.b16 %v3825
        %v3930 = vunpack.c.l.b16 %v3829
        %v3931 = vunpack.c.l.b16 %v3832
        %v3932 = vunpack.c.l.b16 %v3836
        %v3933 = vunpack.c.l.b16 %v3839
        %v3934 = vunpack.c.l.b16 %v3843
        %v3935 = vunpack.c.l.b16 %v3846
        %v3936 = vunpack.c.l.b16 %v3850
        %v3937 = vunpack.c.l.b16 %v3853
        %v3938 = vunpack.c.l.b16 %v3857
        %v3939 = vunpack.c.l.b16 %v3860
        %v3940 = vunpack.c.l.b16 %v3864
        %v3941 = vunpack.c.l.b16 %v3867
        %v3942 = vunpack.c.l.b16 %v3871
        %v3943 = vunpack.c.l.b16 %v3874
        %v3944 = vunpack.c.l.b16 %v3878
        %v3945 = vunpack.c.l.b16 %v3881
        %v3946 = vunpack.c.l.b16 %v3885
        %v3947 = vunpack.c.l.b16 %v3888
        %v3948 = vunpack.c.l.b16 %v3892
        %v3949 = vunpack.c.l.b16 %v3895
        %v3950 = vunpack.c.l.b16 %v3899
        %v3951 = vunpack.c.l.b16 %v3902
        %v3952 = vunpack.c.l.b16 %v3906
        %v3953 = vunpack.c.l.b16 %v3909
        %v3954 = vunpack.c.l.b16 %v3913
        %v3955 = vunpack.c.l.b16 %v3916
        %v3956 = vunpack.c.l.b16 %v3920
        %v3957 = vunpack.c.l.b16 %v3923
        %v3958 = vpack.c.b16 %v3927, %v3926
        %v3959 = vpack.c.b16 %v3929, %v3928
        %v3960 = vpack.c.b16 %v3931, %v3930
        %v3961 = vpack.c.b16 %v3933, %v3932
        %v3962 = vpack.c.b16 %v3935, %v3934
        %v3963 = vpack.c.b16 %v3937, %v3936
        %v3964 = vpack.c.b16 %v3939, %v3938
        %v3965 = vpack.c.b16 %v3941, %v3940
        %v3966 = vpack.c.b16 %v3943, %v3942
        %v3967 = vpack.c.b16 %v3945, %v3944
        %v3968 = vpack.c.b16 %v3947, %v3946
        %v3969 = vpack.c.b16 %v3949, %v3948
        %v3970 = vpack.c.b16 %v3951, %v3950
        %v3971 = vpack.c.b16 %v3953, %v3952
        %v3972 = vpack.c.b16 %v3955, %v3954
        %v3973 = vpack.c.b16 %v3957, %v3956
        %v3975 = vsel %vm715, %v3958, 0
        %v3978 = vsel %vm715, %v3959, 0
        %v3981 = vsel %vm715, %v3960, 0
        %v3984 = vsel %vm715, %v3961, 0
        %v3987 = vsel %vm715, %v3962, 0
        %v3990 = vsel %vm715, %v3963, 0
        %v3993 = vsel %vm715, %v3964, 0
        %v3996 = vsel %vm715, %v3965, 0
        %v3999 = vsel %vm715, %v3966, 0
        %v4002 = vsel %vm715, %v3967, 0
        %v4005 = vsel %vm715, %v3968, 0
        %v4008 = vsel %vm715, %v3969, 0
        %v4011 = vsel %vm715, %v3970, 0
        %v4014 = vsel %vm715, %v3971, 0
        %v4017 = vsel %vm715, %v3972, 0
        %v4020 = vsel %vm715, %v3973, 0
        %v4023 = vsel %vm764, %v3925, 0
        %4025 = vmatpush.bf16.msra.mxu0 0
        %4026 = vmatpush.bf16.msra.mxu0 0
        %4027 = vmatpush.bf16.msra.mxu0 0
        %4028 = vmatpush.bf16.msra.mxu0 0
        %4029 = vmatpush.bf16.msra.mxu0 0
        %4030 = vmatpush.bf16.msra.mxu0 0
        %4031 = vmatpush.bf16.msra.mxu0 0
        %4032 = vmatpush.bf16.msra.mxu0 %v4023
        %4033 = vmatmul.bf16.gmra.mxu0 %v3975
        %v4034 = vpop.f32.mrf.mxu0
        %v4035 = vadd.f32 0.0, %v4034
        %v4036 = vpop.f32.mrf.mxu0
        %v4037 = vadd.f32 0.0, %v4036
        %4038 = vmatmul.bf16.gmra.mxu0 %v3978
        %v4039 = vpop.f32.mrf.mxu0
        %v4040 = vadd.f32 0.0, %v4039
        %v4041 = vpop.f32.mrf.mxu0
        %v4042 = vadd.f32 0.0, %v4041
        %4043 = vmatmul.bf16.gmra.mxu0 %v3981
        %v4044 = vpop.f32.mrf.mxu0
        %v4045 = vadd.f32 0.0, %v4044
        %v4046 = vpop.f32.mrf.mxu0
        %v4047 = vadd.f32 0.0, %v4046
        %4048 = vmatmul.bf16.gmra.mxu0 %v3984
        %v4049 = vpop.f32.mrf.mxu0
        %v4050 = vadd.f32 0.0, %v4049
        %v4051 = vpop.f32.mrf.mxu0
        %v4052 = vadd.f32 0.0, %v4051
        %4053 = vmatmul.bf16.gmra.mxu0 %v3987
        %v4054 = vpop.f32.mrf.mxu0
        %v4055 = vadd.f32 0.0, %v4054
        %v4056 = vpop.f32.mrf.mxu0
        %v4057 = vadd.f32 0.0, %v4056
        %4058 = vmatmul.bf16.gmra.mxu0 %v3990
        %v4059 = vpop.f32.mrf.mxu0
        %v4060 = vadd.f32 0.0, %v4059
        %v4061 = vpop.f32.mrf.mxu0
        %v4062 = vadd.f32 0.0, %v4061
        %4063 = vmatmul.bf16.gmra.mxu0 %v3993
        %v4064 = vpop.f32.mrf.mxu0
        %v4065 = vadd.f32 0.0, %v4064
        %v4066 = vpop.f32.mrf.mxu0
        %v4067 = vadd.f32 0.0, %v4066
        %4068 = vmatmul.bf16.gmra.mxu0 %v3996
        %v4069 = vpop.f32.mrf.mxu0
        %v4070 = vadd.f32 0.0, %v4069
        %v4071 = vpop.f32.mrf.mxu0
        %v4072 = vadd.f32 0.0, %v4071
        %4073 = vmatmul.bf16.gmra.mxu0 %v3999
        %v4074 = vpop.f32.mrf.mxu0
        %v4075 = vadd.f32 0.0, %v4074
        %v4076 = vpop.f32.mrf.mxu0
        %v4077 = vadd.f32 0.0, %v4076
        %4078 = vmatmul.bf16.gmra.mxu0 %v4002
        %v4079 = vpop.f32.mrf.mxu0
        %v4080 = vadd.f32 0.0, %v4079
        %v4081 = vpop.f32.mrf.mxu0
        %v4082 = vadd.f32 0.0, %v4081
        %4083 = vmatmul.bf16.gmra.mxu0 %v4005
        %v4084 = vpop.f32.mrf.mxu0
        %v4085 = vadd.f32 0.0, %v4084
        %v4086 = vpop.f32.mrf.mxu0
        %v4087 = vadd.f32 0.0, %v4086
        %4088 = vmatmul.bf16.gmra.mxu0 %v4008
        %v4089 = vpop.f32.mrf.mxu0
        %v4090 = vadd.f32 0.0, %v4089
        %v4091 = vpop.f32.mrf.mxu0
        %v4092 = vadd.f32 0.0, %v4091
        %4093 = vmatmul.bf16.gmra.mxu0 %v4011
        %v4094 = vpop.f32.mrf.mxu0
        %v4095 = vadd.f32 0.0, %v4094
        %v4096 = vpop.f32.mrf.mxu0
        %v4097 = vadd.f32 0.0, %v4096
        %4098 = vmatmul.bf16.gmra.mxu0 %v4014
        %v4099 = vpop.f32.mrf.mxu0
        %v4100 = vadd.f32 0.0, %v4099
        %v4101 = vpop.f32.mrf.mxu0
        %v4102 = vadd.f32 0.0, %v4101
        %4103 = vmatmul.bf16.gmra.mxu0 %v4017
        %v4104 = vpop.f32.mrf.mxu0
        %v4105 = vadd.f32 0.0, %v4104
        %v4106 = vpop.f32.mrf.mxu0
        %v4107 = vadd.f32 0.0, %v4106
        %4108 = vmatmul.bf16.gmra.mxu0 %v4020
        %v4109 = vpop.f32.mrf.mxu0
        %v4110 = vadd.f32 0.0, %v4109
        %v4111 = vpop.f32.mrf.mxu0
        %v4112 = vadd.f32 0.0, %v4111
        %4113 = vdwg.mxu0
        %v4114 = vadd.f32 %v3716, %v4035
        %v4115 = vadd.f32 %v3717, %v4037
        %v4116 = vadd.f32 %v3718, %v4040
        %v4117 = vadd.f32 %v3719, %v4042
        %v4118 = vadd.f32 %v3720, %v4045
        %v4119 = vadd.f32 %v3721, %v4047
        %v4120 = vadd.f32 %v3722, %v4050
        %v4121 = vadd.f32 %v3723, %v4052
        %v4122 = vadd.f32 %v3724, %v4055
        %v4123 = vadd.f32 %v3725, %v4057
        %v4124 = vadd.f32 %v3726, %v4060
        %v4125 = vadd.f32 %v3727, %v4062
        %v4126 = vadd.f32 %v3728, %v4065
        %v4127 = vadd.f32 %v3729, %v4067
        %v4128 = vadd.f32 %v3730, %v4070
        %v4129 = vadd.f32 %v3731, %v4072
        %v4130 = vadd.f32 %v3732, %v4075
        %v4131 = vadd.f32 %v3733, %v4077
        %v4132 = vadd.f32 %v3734, %v4080
        %v4133 = vadd.f32 %v3735, %v4082
        %v4134 = vadd.f32 %v3736, %v4085
        %v4135 = vadd.f32 %v3737, %v4087
        %v4136 = vadd.f32 %v3738, %v4090
        %v4137 = vadd.f32 %v3739, %v4092
        %v4138 = vadd.f32 %v3740, %v4095
        %v4139 = vadd.f32 %v3741, %v4097
        %v4140 = vadd.f32 %v3742, %v4100
        %v4141 = vadd.f32 %v3743, %v4102
        %v4142 = vadd.f32 %v3744, %v4105
        %v4143 = vadd.f32 %v3745, %v4107
        %v4144 = vadd.f32 %v3746, %v4110
        %v4145 = vadd.f32 %v3747, %v4112
        %v4146 = vld [vmem:[%s222] sm:$0x1]
        %v4148 = vperm.slane %v4146, 0
        %v4150 = vadd.f32 %v4114, %v4148
        %v4151 = vadd.f32 %v4115, %v4148
        %v4152 = vadd.f32 %v4116, %v4148
        %v4153 = vadd.f32 %v4117, %v4148
        %v4154 = vadd.f32 %v4118, %v4148
        %v4155 = vadd.f32 %v4119, %v4148
        %v4156 = vadd.f32 %v4120, %v4148
        %v4157 = vadd.f32 %v4121, %v4148
        %v4158 = vadd.f32 %v4122, %v4148
        %v4159 = vadd.f32 %v4123, %v4148
        %v4160 = vadd.f32 %v4124, %v4148
        %v4161 = vadd.f32 %v4125, %v4148
        %v4162 = vadd.f32 %v4126, %v4148
        %v4163 = vadd.f32 %v4127, %v4148
        %v4164 = vadd.f32 %v4128, %v4148
        %v4165 = vadd.f32 %v4129, %v4148
        %v4166 = vadd.f32 %v4130, %v4148
        %v4167 = vadd.f32 %v4131, %v4148
        %v4168 = vadd.f32 %v4132, %v4148
        %v4169 = vadd.f32 %v4133, %v4148
        %v4170 = vadd.f32 %v4134, %v4148
        %v4171 = vadd.f32 %v4135, %v4148
        %v4172 = vadd.f32 %v4136, %v4148
        %v4173 = vadd.f32 %v4137, %v4148
        %v4174 = vadd.f32 %v4138, %v4148
        %v4175 = vadd.f32 %v4139, %v4148
        %v4176 = vadd.f32 %v4140, %v4148
        %v4177 = vadd.f32 %v4141, %v4148
        %v4178 = vadd.f32 %v4142, %v4148
        %v4179 = vadd.f32 %v4143, %v4148
        %v4180 = vadd.f32 %v4144, %v4148
        %v4181 = vadd.f32 %v4145, %v4148
        %v4182 = vmax.f32 %v4150, 0.0
        %v4183 = vmax.f32 %v4151, 0.0
        %v4184 = vmax.f32 %v4152, 0.0
        %v4185 = vmax.f32 %v4153, 0.0
        %v4186 = vmax.f32 %v4154, 0.0
        %v4187 = vmax.f32 %v4155, 0.0
        %v4188 = vmax.f32 %v4156, 0.0
        %v4189 = vmax.f32 %v4157, 0.0
        %v4190 = vmax.f32 %v4158, 0.0
        %v4191 = vmax.f32 %v4159, 0.0
        %v4192 = vmax.f32 %v4160, 0.0
        %v4193 = vmax.f32 %v4161, 0.0
        %v4194 = vmax.f32 %v4162, 0.0
        %v4195 = vmax.f32 %v4163, 0.0
        %v4196 = vmax.f32 %v4164, 0.0
        %v4197 = vmax.f32 %v4165, 0.0
        %v4198 = vmax.f32 %v4166, 0.0
        %v4199 = vmax.f32 %v4167, 0.0
        %v4200 = vmax.f32 %v4168, 0.0
        %v4201 = vmax.f32 %v4169, 0.0
        %v4202 = vmax.f32 %v4170, 0.0
        %v4203 = vmax.f32 %v4171, 0.0
        %v4204 = vmax.f32 %v4172, 0.0
        %v4205 = vmax.f32 %v4173, 0.0
        %v4206 = vmax.f32 %v4174, 0.0
        %v4207 = vmax.f32 %v4175, 0.0
        %v4208 = vmax.f32 %v4176, 0.0
        %v4209 = vmax.f32 %v4177, 0.0
        %v4210 = vmax.f32 %v4178, 0.0
        %v4211 = vmax.f32 %v4179, 0.0
        %v4212 = vmax.f32 %v4180, 0.0
        %v4213 = vmax.f32 %v4181, 0.0
        %4214 = vst [vmem:[%s210] sm:$0xff] %v4182
        %4215 = vst [vmem:[%s210 + $0x8] sm:$0xff] %v4183
        %4216 = vst [vmem:[%s210 + $0x10] sm:$0xff] %v4184
        %4217 = vst [vmem:[%s210 + $0x18] sm:$0xff] %v4185
        %4218 = vst [vmem:[%s210 + $0x20] sm:$0xff] %v4186
        %4219 = vst [vmem:[%s210 + $0x28] sm:$0xff] %v4187
        %4220 = vst [vmem:[%s210 + $0x30] sm:$0xff] %v4188
        %4221 = vst [vmem:[%s210 + $0x38] sm:$0xff] %v4189
        %4222 = vst [vmem:[%s210 + $0x40] sm:$0xff] %v4190
        %4223 = vst [vmem:[%s210 + $0x48] sm:$0xff] %v4191
        %4224 = vst [vmem:[%s210 + $0x50] sm:$0xff] %v4192
        %4225 = vst [vmem:[%s210 + $0x58] sm:$0xff] %v4193
        %4226 = vst [vmem:[%s210 + $0x60] sm:$0xff] %v4194
        %4227 = vst [vmem:[%s210 + $0x68] sm:$0xff] %v4195
        %4228 = vst [vmem:[%s210 + $0x70] sm:$0xff] %v4196
        %4229 = vst [vmem:[%s210 + $0x78] sm:$0xff] %v4197
        %4230 = vst [vmem:[%s210 + $0x80] sm:$0xff] %v4198
        %4231 = vst [vmem:[%s210 + $0x88] sm:$0xff] %v4199
        %4232 = vst [vmem:[%s210 + $0x90] sm:$0xff] %v4200
        %4233 = vst [vmem:[%s210 + $0x98] sm:$0xff] %v4201
        %4234 = vst [vmem:[%s210 + $0xa0] sm:$0xff] %v4202
        %4235 = vst [vmem:[%s210 + $0xa8] sm:$0xff] %v4203
        %4236 = vst [vmem:[%s210 + $0xb0] sm:$0xff] %v4204
        %4237 = vst [vmem:[%s210 + $0xb8] sm:$0xff] %v4205
        %4238 = vst [vmem:[%s210 + $0xc0] sm:$0xff] %v4206
        %4239 = vst [vmem:[%s210 + $0xc8] sm:$0xff] %v4207
        %4240 = vst [vmem:[%s210 + $0xd0] sm:$0xff] %v4208
        %4241 = vst [vmem:[%s210 + $0xd8] sm:$0xff] %v4209
        %4242 = vst [vmem:[%s210 + $0xe0] sm:$0xff] %v4210
        %4243 = vst [vmem:[%s210 + $0xe8] sm:$0xff] %v4211
        %4244 = vst [vmem:[%s210 + $0xf0] sm:$0xff] %v4212
        %4245 = vst [vmem:[%s210 + $0xf8] sm:$0xff] %v4213
        %s4246 = sand.u32 %s126, 1
        %s4247 = scalar_lea.sflag [#allocation3], %s4246
        %s4248 = sand.u32 %s126, 1
        %s4249 = smul.addr %s4248, 256
        %s4250 = scalar_lea.vmem [#allocation2], %s4249
        // Predicated region
        $region33: #{tpu_custom_call.1} parent=31 // pred_check
          %p4251 = pneg %p136
        $region34: #{tpu_custom_call.1} parent=31 // pred_check_branch
          %4253 = sbr.rel (%p4251) target = $region36
        $region35: #{tpu_custom_call.1} parent=31 // pred_region
          %s4254 = smul.u32 16, %s24
          %4256 = vsyncadd %s4247, 0
          %s4257 = smul.addr %s4254, 2
          %s4258 = sadd.s32 %s23, %s4257
          %s4259 = smul.addr %s22, 32
          %s4260 = sadd.s32 %s4258, %s4259
          %s4261 = smul.addr %s4260, 8
          %s4262 = scalar_lea.hbm %s3, %s4261
          %s4263 = sshll.u32 %s4250, 4
          %s4264 = int_to_ptr.vmem [resolvable:$true] %s4263
          %s4265 = sshll.u32 %s4262, 4
          %s4266 = int_to_ptr.hbm [resolvable:$true] %s4265
          %4271 = dma.vmem_to_hbm [thread:$0]  %s4264, 4096, %s4266, %s4247, 128, 128, 8
        $region36: #{tpu_custom_call.1} parent=31 // pred_fallthru
          _
      $region32: #{tpu_custom_call.1} parent=5 // pred_fallthru
        _
      %p4272 = scmp.le.s32.totalorder 2, %s12
      // Predicated region
      $region37: #{tpu_custom_call.1} parent=5 // pred_check
        %p4273 = pneg %p4272
      $region38: #{tpu_custom_call.1} parent=5 // pred_check_branch
        %4275 = sbr.rel (%p4273) target = $region40
      $region39: #{tpu_custom_call.1} parent=5 // pred_region
        %s4276 = ssub.s32 %s12, 2
        // Predicated region
        $region41: #{tpu_custom_call.1} parent=39 // pred_check
          %p4277 = pneg %p142
        $region42: #{tpu_custom_call.1} parent=39 // pred_check_branch
          %4279 = sbr.rel (%p4277) target = $region44
        $region43: #{tpu_custom_call.1} parent=39 // pred_region
          %s4280 = sand.u32 %s127, 1
          %s4281 = scalar_lea.sflag [#allocation3], %s4280
          %s4282 = sand.u32 %s127, 1
          %s4283 = smul.addr %s4282, 256
          %s4284 = scalar_lea.vmem [#allocation2], %s4283
          %4286 = dma.done %s4281, 4096
        $region44: #{tpu_custom_call.1} parent=39 // pred_fallthru
          _
      $region40: #{tpu_custom_call.1} parent=5 // pred_fallthru
        _
    $region6: #{tpu_custom_call.1} parent=1 // loop_footer
      %s16 = sadd.s32 1, %s12
    $region7: #{tpu_custom_call.1} parent=1 // loop_footer_branch
      %11 = sbr.rel target = $region3
    $region8: #{tpu_custom_call.1} parent=1 // loop_exit
      _
    %4287 = vsyncpa [#allocation3], 1
    %s4288 = scalar_lea.sflag [#allocation3], 1
    %4289 = vsyncpa %s4288, 1

</llo_original>
